<compile_context>
chip_gen: v7x
topology: tpu7x:2x2x1
jax: 0.10.0
libtpu: 0.0.40
codegen_flags: <defaults>
</compile_context>

<pallas_src>
import functools
import math

import jax
import jax.numpy as jnp
from jax.experimental import pallas as pl
from jax.experimental.pallas import tpu as pltpu

_MAX_ROW_TILE = 256      # multiple of 128 (v5e MXU) and 256 (v6e/v7x MXU)
_MAX_DFF_TILE = 512      # d_ff reduction tile for the fused FFN kernel


@functools.lru_cache(maxsize=None)
def _vmem_limit_bytes():
    # generation-aware scoped-VMEM limit: ~41 MiB on v7x (64 MiB/TC),
    # ~83 MiB on v5e/v6e (128 MiB).  Guarded for non-TPU / interpret runs.
    try:
        cap = int(pltpu.get_tpu_info().vmem_capacity_bytes)
    except Exception:
        cap = 64 << 20
    return max(32 << 20, min(int(cap * 0.65), 100 << 20))


def _compiler_params(semantics):
    return pltpu.CompilerParams(dimension_semantics=tuple(semantics),
                                vmem_limit_bytes=_vmem_limit_bytes())


def _pick_row_tile(rows):
    """Largest multiple-of-8 divisor of `rows` (capped); prefer >=2 grid steps."""
    cap = min(_MAX_ROW_TILE, rows)
    best = None
    for t in range(8, cap + 1, 8):
        if rows % t == 0:
            best = t
    if best is None:
        return rows                        # not a multiple of 8: one full block
    if best == rows and rows >= 16 and (rows // 2) % 8 == 0:
        return rows // 2                   # >=2 steps for v7x's 2 TensorCores
    return best


def _pick_dff_tile(dff):
    if dff <= _MAX_DFF_TILE:
        return dff
    for t in (_MAX_DFF_TILE, 256, 128):
        if dff % t == 0:
            return t
    return dff


# ----------------------------- kernel bodies -------------------------------

def _layernorm_f32(x, a, b, eps):
    # torch semantics: unbiased std (Bessel), a*(x-mean)/(std+eps)+b ; exact f32
    d = x.shape[-1]
    mean = jnp.mean(x, axis=-1, keepdims=True)
    diff = x - mean
    var = jnp.sum(diff * diff, axis=-1, keepdims=True) * (1.0 / (d - 1))
    return a * (diff / (jnp.sqrt(var) + eps)) + b


def _layernorm_kernel(x_ref, a_ref, b_ref, o_ref, *, eps):
    y = _layernorm_f32(x_ref[...].astype(jnp.float32), a_ref[...], b_ref[...], eps)
    o_ref[...] = y.astype(o_ref.dtype)


def _ln_qkv_kernel(x_ref, a_ref, b_ref, w_ref, bias_ref, q_ref, k_ref, v_ref, *, eps):
    xn = _layernorm_f32(x_ref[...].astype(jnp.float32), a_ref[...], b_ref[...], eps)
    y = jnp.dot(xn.astype(w_ref.dtype), w_ref[...],
                preferred_element_type=jnp.float32) + bias_ref[...]
    d = q_ref.shape[-1]
    q_ref[...] = y[:, :d].astype(q_ref.dtype)
    k_ref[...] = y[:, d:2 * d].astype(k_ref.dtype)
    v_ref[...] = y[:, 2 * d:].astype(v_ref.dtype)


def _attention_out_kernel(q_ref, k_ref, v_ref, m_ref, wo_ref, bo_ref, r_ref,
                          o_ref, *, n_heads, scale):
    # q: (TQ, D); k, v: (S, D) heads packed along lanes; m: (1, S) additive mask.
    q = q_ref[...]
    k = k_ref[...]
    v = v_ref[...]
    m = m_ref[...].astype(jnp.float32)
    dk = q.shape[-1] // n_heads
    dn_qk = (((1,), (1,)), ((), ()))        # contract last dims: no K transpose
    dn_pv = (((1,), (0,)), ((), ()))
    outs = []
    for h in range(n_heads):                # static loop, heads stay in lanes
        lo = h * dk
        s = jax.lax.dot_general(q[:, lo:lo + dk], k[:, lo:lo + dk], dn_qk,
                                preferred_element_type=jnp.float32)
        s = s * scale + m
        s = s - jnp.max(s, axis=-1, keepdims=True)
        p = jnp.exp(s)
        p = p * pl.reciprocal(jnp.sum(p, axis=-1, keepdims=True), approx=True)
        outs.append(jax.lax.dot_general(p.astype(v.dtype), v[:, lo:lo + dk], dn_pv,
                                        preferred_element_type=jnp.float32))
    ctx = jnp.concatenate(outs, axis=-1)    # (TQ, D), lane-dense
    y = jnp.dot(ctx.astype(wo_ref.dtype), wo_ref[...],
                preferred_element_type=jnp.float32)
    o_ref[...] = (r_ref[...].astype(jnp.float32) + y + bo_ref[...]).astype(o_ref.dtype)


def _ln_ffn_kernel(x_ref, a_ref, b_ref, w1_ref, b1_ref, w2_ref, b2_ref,
                   o_ref, acc_ref, xn_ref, *, eps):
    # Fused  out = x + relu(LN(x) @ W1 + b1) @ W2 + b2, d_ff tiled on axis 1.
    kf = pl.program_id(1)

    @pl.when(kf == 0)
    def _():
        xn = _layernorm_f32(x_ref[...].astype(jnp.float32),
                            a_ref[...], b_ref[...], eps)
        xn_ref[...] = xn.astype(xn_ref.dtype)
        acc_ref[...] = x_ref[...].astype(jnp.float32) + b2_ref[...]   # residual + b2

    h = jnp.dot(xn_ref[...], w1_ref[...],
                preferred_element_type=jnp.float32) + b1_ref[...]
    h = jnp.maximum(h, 0.0)
    acc_ref[...] += jnp.dot(h.astype(w2_ref.dtype), w2_ref[...],
                            preferred_element_type=jnp.float32)

    @pl.when(kf == pl.num_programs(1) - 1)
    def _():
        o_ref[...] = acc_ref[...].astype(o_ref.dtype)


# ------------------------------- wrappers -----------------------------------

def pallas_layernorm(x2, a, b, eps=1e-6):
    rows, d = x2.shape
    tm = _pick_row_tile(rows)
    return pl.pallas_call(
        functools.partial(_layernorm_kernel, eps=eps),
        out_shape=jax.ShapeDtypeStruct((rows, d), x2.dtype),
        grid=(rows // tm,),
        in_specs=[pl.BlockSpec((tm, d), lambda i: (i, 0)),
                  pl.BlockSpec((1, d), lambda i: (0, 0)),
                  pl.BlockSpec((1, d), lambda i: (0, 0))],
        out_specs=pl.BlockSpec((tm, d), lambda i: (i, 0)),
        compiler_params=_compiler_params(("parallel",)),
    )(x2, a.reshape(1, d), b.reshape(1, d))


def pallas_ln_qkv(x2, a, b, wqkv, bqkv, eps=1e-6):
    rows, d = x2.shape
    d3 = wqkv.shape[1]
    tm = _pick_row_tile(rows)
    mm = wqkv.dtype                     # q/k/v stored in matmul dtype (bf16)
    return pl.pallas_call(
        functools.partial(_ln_qkv_kernel, eps=eps),
        out_shape=[jax.ShapeDtypeStruct((rows, d), mm)] * 3,
        grid=(rows // tm,),
        in_specs=[pl.BlockSpec((tm, d), lambda i: (i, 0)),
                  pl.BlockSpec((1, d), lambda i: (0, 0)),
                  pl.BlockSpec((1, d), lambda i: (0, 0)),
                  pl.BlockSpec((d, d3), lambda i: (0, 0)),
                  pl.BlockSpec((1, d3), lambda i: (0, 0))],
        out_specs=[pl.BlockSpec((tm, d), lambda i: (i, 0))] * 3,
        compiler_params=_compiler_params(("parallel",)),
    )(x2, a.reshape(1, d), b.reshape(1, d), wqkv, bqkv.reshape(1, d3))


def pallas_attention_out(q, k, v, mask_add, wo, bo, resid, n_heads):
    # q, k, v: (B, S, D) heads packed along lanes; mask_add: (B, 1, S) additive.
    # Fuses softmax(QK^T/sqrt(dk)+m) V, the output projection wo and the
    # residual add; output is the updated residual stream (f32).
    B, S, D = q.shape
    dk = D // n_heads
    scale = 1.0 / math.sqrt(dk)
    if S % 256 == 0:
        tq = 256
    elif S % 128 == 0:
        tq = 128
    else:
        tq = S     # TODO(synk): pad awkward sequence lengths
    qr_spec = pl.BlockSpec((None, tq, D), lambda b, i: (b, i, 0))
    kv_spec = pl.BlockSpec((None, S, D), lambda b, i: (b, 0, 0))
    m_spec = pl.BlockSpec((None, 1, S), lambda b, i: (b, 0, 0))
    return pl.pallas_call(
        functools.partial(_attention_out_kernel, n_heads=n_heads, scale=scale),
        out_shape=jax.ShapeDtypeStruct((B, S, D), resid.dtype),
        grid=(B, S // tq),
        in_specs=[qr_spec, kv_spec, kv_spec, m_spec,
                  pl.BlockSpec((D, D), lambda b, i: (0, 0)),      # wo resident
                  pl.BlockSpec((1, D), lambda b, i: (0, 0)),
                  qr_spec],
        out_specs=qr_spec,
        compiler_params=_compiler_params(("parallel", "parallel")),
    )(q, k, v, mask_add, wo, bo.reshape(1, D), resid)


def pallas_ln_ffn(x2, a, b, w1, b1, w2, b2, eps=1e-6):
    rows, d = x2.shape
    dff = w1.shape[1]
    tm = _pick_row_tile(rows)
    tkf = _pick_dff_tile(dff)
    mm = w1.dtype
    return pl.pallas_call(
        functools.partial(_ln_ffn_kernel, eps=eps),
        out_shape=jax.ShapeDtypeStruct((rows, d), x2.dtype),
        grid=(rows // tm, dff // tkf),
        in_specs=[pl.BlockSpec((tm, d), lambda i, kf: (i, 0)),
                  pl.BlockSpec((1, d), lambda i, kf: (0, 0)),
                  pl.BlockSpec((1, d), lambda i, kf: (0, 0)),
                  pl.BlockSpec((d, tkf), lambda i, kf: (0, kf)),
                  pl.BlockSpec((1, tkf), lambda i, kf: (0, kf)),
                  pl.BlockSpec((tkf, d), lambda i, kf: (kf, 0)),
                  pl.BlockSpec((1, d), lambda i, kf: (0, 0))],
        out_specs=pl.BlockSpec((tm, d), lambda i, kf: (i, 0)),
        scratch_shapes=[pltpu.VMEM((tm, d), jnp.float32),   # f32 accumulator
                        pltpu.VMEM((tm, d), mm)],            # LN(x) reused over kf
        compiler_params=_compiler_params(("parallel", "arbitrary")),
    )(x2, a.reshape(1, d), b.reshape(1, d), w1, b1.reshape(1, dff),
      w2, b2.reshape(1, d))


# ------------------------- Encoder forward ---------------------------------

def encoder_forward(params, x, mask, n_heads):
    B, S, D = x.shape
    rows = B * S
    # additive mask, hoisted out of all layers (masked key -> -1e9 added)
    mask_add = (mask.astype(jnp.float32) - 1.0) * 1e9
    x2 = x.reshape(rows, D)                       # f32 residual stream
    for lp in params["layers"]:
        # Sublayer 0: x + Wo @ SelfAttn(LN(x))    (fused into two kernels)
        q2, k2, v2 = pallas_ln_qkv(x2, lp["ln1_a"], lp["ln1_b"],
                                   lp["wqkv"], lp["bqkv"])
        x2 = pallas_attention_out(
            q2.reshape(B, S, D), k2.reshape(B, S, D), v2.reshape(B, S, D),
            mask_add, lp["wo"], lp["bo"], x2.reshape(B, S, D),
            n_heads).reshape(rows, D)
        # Sublayer 1: x + FFN(LN(x))              (single fused kernel)
        x2 = pallas_ln_ffn(x2, lp["ln2_a"], lp["ln2_b"],
                           lp["w1"], lp["b1"], lp["w2"], lp["b2"])
    # final Encoder.norm
    return pallas_layernorm(x2, params["norm_a"], params["norm_b"]).reshape(B, S, D)


# --------------------------- reference (pure JAX) ---------------------------

def ref_forward(params, x, mask, n_heads):
    def ln(t, a, b, eps=1e-6):
        mean = t.mean(-1, keepdims=True)
        var = jnp.sum((t - mean) ** 2, -1, keepdims=True) / (t.shape[-1] - 1)
        return a * (t - mean) / (jnp.sqrt(var) + eps) + b

    B, S, D = x.shape
    dk = D // n_heads
    for lp in params["layers"]:
        xn = ln(x, lp["ln1_a"], lp["ln1_b"])
        qkv = xn @ lp["wqkv"] + lp["bqkv"]
        q, k, v = qkv[..., :D], qkv[..., D:2 * D], qkv[..., 2 * D:]

        def heads(t):
            return t.reshape(B, S, n_heads, dk).transpose(0, 2, 1, 3)

        q, k, v = heads(q), heads(k), heads(v)
        scores = jnp.einsum("bhqd,bhkd->bhqk", q, k) / math.sqrt(dk)
        scores = jnp.where(mask[:, None, :, :] == 0.0, -1e9, scores)
        p = jax.nn.softmax(scores, axis=-1)
        attn = jnp.einsum("bhqk,bhkd->bhqd", p, v).transpose(0, 2, 1, 3).reshape(B, S, D)
        x = x + (attn @ lp["wo"] + lp["bo"])
        xn = ln(x, lp["ln2_a"], lp["ln2_b"])
        h = jnp.maximum(xn @ lp["w1"] + lp["b1"], 0.0)
        x = x + (h @ lp["w2"] + lp["b2"])
    return ln(x, params["norm_a"], params["norm_b"])


# ------------------------------ params --------------------------------------

def init_params(key, n_layers, d_model, d_ff):
    def linear_p(k, din, dout, scale=0.05):
        kw, kb = jax.random.split(k)
        return (jax.random.normal(kw, (din, dout), jnp.float32) * scale,
                jax.random.normal(kb, (dout,), jnp.float32) * 0.01)

    layers = []
    for lk in jax.random.split(key, n_layers):
        ks = jax.random.split(lk, 6)
        wq, bq = linear_p(ks[0], d_model, d_model)
        wk, bk = linear_p(ks[1], d_model, d_model)
        wv, bv = linear_p(ks[2], d_model, d_model)
        wo, bo = linear_p(ks[3], d_model, d_model)
        w1, b1 = linear_p(ks[4], d_model, d_ff)
        w2, b2 = linear_p(ks[5], d_ff, d_model)
        layers.append(dict(
            ln1_a=jnp.ones((d_model,), jnp.float32),
            ln1_b=jnp.zeros((d_model,), jnp.float32),
            ln2_a=jnp.ones((d_model,), jnp.float32),
            ln2_b=jnp.zeros((d_model,), jnp.float32),
            wqkv=jnp.concatenate([wq, wk, wv], axis=1),
            bqkv=jnp.concatenate([bq, bk, bv], axis=0),
            wo=wo, bo=bo, w1=w1, b1=b1, w2=w2, b2=b2))
    return dict(layers=layers,
                norm_a=jnp.ones((d_model,), jnp.float32),
                norm_b=jnp.zeros((d_model,), jnp.float32))


def cast_matmul_weights(params, dtype):
    """Store MXU weight matrices in `dtype` (bf16); LN params & biases stay f32."""
    def cast_layer(lp):
        lp = dict(lp)
        for key in ("wqkv", "wo", "w1", "w2"):
            lp[key] = lp[key].astype(dtype)
        return lp
    return dict(params, layers=[cast_layer(lp) for lp in params["layers"]])


if __name__ == "__main__":
    B, S, D, H, DFF, N = 2, 8, 32, 4, 64, 2
    key = jax.random.PRNGKey(0)
    kx, kp = jax.random.split(key)
    x = jax.random.normal(kx, (B, S, D), jnp.float32)
    lengths = jnp.array([S, S - 2])
    mask = (jnp.arange(S)[None, :] < lengths[:, None]).astype(jnp.float32).reshape(B, 1, S)
    params = init_params(kp, N, D, DFF)

    fwd = jax.jit(encoder_forward, static_argnums=3)
    ref = ref_forward(params, x, mask, H)

    # f32 matmul path: tight check of the forward-pass semantics.
    out_f32 = jax.block_until_ready(fwd(params, x, mask, H))
    assert out_f32.shape == (B, S, D)
    err_f32 = float(jnp.max(jnp.abs(out_f32 - ref)))
    assert err_f32 < 5e-3, f"f32 mismatch vs reference: {err_f32}"

    # bf16 matmul operands (MXU-native), f32 accumulation: looser check.
    out_bf16 = jax.block_until_ready(
        fwd(cast_matmul_weights(params, jnp.bfloat16), x, mask, H))
    err_bf16 = float(jnp.max(jnp.abs(out_bf16 - ref)))
    assert err_bf16 < 2e-2, f"bf16 mismatch vs reference: {err_bf16}"

    print("KERNEL_OK")
</pallas_src>

<mosaic_0001>
module attributes {stable_mosaic.version = 11 : i64} {
  func.func @_ln_qkv_kernel(%arg0: i32, %arg1: memref<8x32xf32, #tpu.memory_space<vmem>>, %arg2: memref<1x32xf32, #tpu.memory_space<vmem>>, %arg3: memref<1x32xf32, #tpu.memory_space<vmem>>, %arg4: memref<32x96xf32, #tpu.memory_space<vmem>>, %arg5: memref<1x96xf32, #tpu.memory_space<vmem>>, %arg6: memref<8x32xf32, #tpu.memory_space<vmem>>, %arg7: memref<8x32xf32, #tpu.memory_space<vmem>>, %arg8: memref<8x32xf32, #tpu.memory_space<vmem>>) attributes {dimension_semantics = [#tpu.dimension_semantics<parallel>], iteration_bounds = array<i64: 2>, scalar_prefetch = 0 : i64, scratch_operands = 0 : i64, tpu.core_type = #tpu.core_type<tc>, window_params = [{transform_indices = @transform_0, window_bounds = array<i64: 8, 32>}, {pipeline_mode = #tpu.pipeline_mode<synchronous>, transform_indices = @transform_1, window_bounds = array<i64: 1, 32>}, {pipeline_mode = #tpu.pipeline_mode<synchronous>, transform_indices = @transform_2, window_bounds = array<i64: 1, 32>}, {pipeline_mode = #tpu.pipeline_mode<synchronous>, transform_indices = @transform_3, window_bounds = array<i64: 32, 96>}, {pipeline_mode = #tpu.pipeline_mode<synchronous>, transform_indices = @transform_4, window_bounds = array<i64: 1, 96>}, {transform_indices = @transform_5, window_bounds = array<i64: 8, 32>}, {transform_indices = @transform_6, window_bounds = array<i64: 8, 32>}, {transform_indices = @transform_7, window_bounds = array<i64: 8, 32>}]} {
    %c0 = arith.constant 0 : index
    %c0_0 = arith.constant 0 : index
    %0 = vector.load %arg1[%c0, %c0_0] : memref<8x32xf32, #tpu.memory_space<vmem>>, vector<8x32xf32>
    %c0_1 = arith.constant 0 : index
    %c0_2 = arith.constant 0 : index
    %1 = vector.load %arg2[%c0_1, %c0_2] : memref<1x32xf32, #tpu.memory_space<vmem>>, vector<1x32xf32>
    %c0_3 = arith.constant 0 : index
    %c0_4 = arith.constant 0 : index
    %2 = vector.load %arg3[%c0_3, %c0_4] : memref<1x32xf32, #tpu.memory_space<vmem>>, vector<1x32xf32>
    %cst = arith.constant dense<0.000000e+00> : vector<8xf32>
    %3 = vector.multi_reduction <add>, %0, %cst [1] : vector<8x32xf32> to vector<8xf32>
    %4 = vector.shape_cast %3 : vector<8xf32> to vector<8x1xf32>
    %cst_5 = arith.constant 3.200000e+01 : f32
    %5 = vector.broadcast %cst_5 : f32 to vector<8x1xf32>
    %6 = arith.divf %4, %5 : vector<8x1xf32>
    %7 = vector.broadcast %6 : vector<8x1xf32> to vector<8x32xf32>
    %8 = arith.subf %0, %7 : vector<8x32xf32>
    %9 = arith.mulf %8, %8 : vector<8x32xf32>
    %cst_6 = arith.constant dense<0.000000e+00> : vector<8xf32>
    %10 = vector.multi_reduction <add>, %9, %cst_6 [1] : vector<8x32xf32> to vector<8xf32>
    %11 = vector.shape_cast %10 : vector<8xf32> to vector<8x1xf32>
    %cst_7 = arith.constant 0.0322580636 : f32
    %12 = vector.broadcast %cst_7 : f32 to vector<8x1xf32>
    %13 = arith.mulf %11, %12 : vector<8x1xf32>
    %14 = math.sqrt %13 : vector<8x1xf32>
    %cst_8 = arith.constant 9.99999997E-7 : f32
    %15 = vector.broadcast %cst_8 : f32 to vector<8x1xf32>
    %16 = arith.addf %14, %15 : vector<8x1xf32>
    %17 = vector.broadcast %16 : vector<8x1xf32> to vector<8x32xf32>
    %18 = arith.divf %8, %17 : vector<8x32xf32>
    %19 = vector.broadcast %1 : vector<1x32xf32> to vector<8x32xf32>
    %20 = arith.mulf %19, %18 : vector<8x32xf32>
    %21 = vector.broadcast %2 : vector<1x32xf32> to vector<8x32xf32>
    %22 = arith.addf %20, %21 : vector<8x32xf32>
    %c0_9 = arith.constant 0 : index
    %c0_10 = arith.constant 0 : index
    %23 = vector.load %arg4[%c0_9, %c0_10] : memref<32x96xf32, #tpu.memory_space<vmem>>, vector<32x96xf32>
    %cst_11 = arith.constant dense<0.000000e+00> : vector<8x96xf32>
    %24 = tpu.matmul %22, %23, %cst_11 {dimension_numbers = #tpu.dot_dimension_numbers<[1], [0], [0], [1], [0, 0, 1, 1], [], []>} : vector<8x32xf32>, vector<32x96xf32>, vector<8x96xf32> -> vector<8x96xf32>
    %c0_12 = arith.constant 0 : index
    %c0_13 = arith.constant 0 : index
    %25 = vector.load %arg5[%c0_12, %c0_13] : memref<1x96xf32, #tpu.memory_space<vmem>>, vector<1x96xf32>
    %26 = vector.broadcast %25 : vector<1x96xf32> to vector<8x96xf32>
    %27 = arith.addf %24, %26 : vector<8x96xf32>
    %28 = vector.extract_strided_slice %27 {offsets = [0, 0], sizes = [8, 32], strides = [1, 1]} : vector<8x96xf32> to vector<8x32xf32>
    %c0_14 = arith.constant 0 : index
    %c0_15 = arith.constant 0 : index
    %29 = vector.load %arg6[%c0_14, %c0_15] : memref<8x32xf32, #tpu.memory_space<vmem>>, vector<8x32xf32>
    tpu.vector_store %arg6[%c0_14, %c0_15], %28 {strides = array<i32>} : memref<8x32xf32, #tpu.memory_space<vmem>>, vector<8x32xf32>,
    %30 = vector.extract_strided_slice %27 {offsets = [0, 32], sizes = [8, 32], strides = [1, 1]} : vector<8x96xf32> to vector<8x32xf32>
    %c0_16 = arith.constant 0 : index
    %c0_17 = arith.constant 0 : index
    %31 = vector.load %arg7[%c0_16, %c0_17] : memref<8x32xf32, #tpu.memory_space<vmem>>, vector<8x32xf32>
    tpu.vector_store %arg7[%c0_16, %c0_17], %30 {strides = array<i32>} : memref<8x32xf32, #tpu.memory_space<vmem>>, vector<8x32xf32>,
    %32 = vector.extract_strided_slice %27 {offsets = [0, 64], sizes = [8, 32], strides = [1, 1]} : vector<8x96xf32> to vector<8x32xf32>
    %c0_18 = arith.constant 0 : index
    %c0_19 = arith.constant 0 : index
    %33 = vector.load %arg8[%c0_18, %c0_19] : memref<8x32xf32, #tpu.memory_space<vmem>>, vector<8x32xf32>
    tpu.vector_store %arg8[%c0_18, %c0_19], %32 {strides = array<i32>} : memref<8x32xf32, #tpu.memory_space<vmem>>, vector<8x32xf32>,
    return
  }
  func.func @transform_0(%arg0: i32) -> (i32, i32) {
    %c0_i32 = arith.constant 0 : i32
    %c0_i32_0 = arith.constant 0 : i32
    return %arg0, %c0_i32 : i32, i32
  }
  func.func @transform_1(%arg0: i32) -> (i32, i32) {
    %c0_i32 = arith.constant 0 : i32
    %c0_i32_0 = arith.constant 0 : i32
    %c0_i32_1 = arith.constant 0 : i32
    return %c0_i32, %c0_i32_0 : i32, i32
  }
  func.func @transform_2(%arg0: i32) -> (i32, i32) {
    %c0_i32 = arith.constant 0 : i32
    %c0_i32_0 = arith.constant 0 : i32
    %c0_i32_1 = arith.constant 0 : i32
    return %c0_i32, %c0_i32_0 : i32, i32
  }
  func.func @transform_3(%arg0: i32) -> (i32, i32) {
    %c0_i32 = arith.constant 0 : i32
    %c0_i32_0 = arith.constant 0 : i32
    %c0_i32_1 = arith.constant 0 : i32
    return %c0_i32, %c0_i32_0 : i32, i32
  }
  func.func @transform_4(%arg0: i32) -> (i32, i32) {
    %c0_i32 = arith.constant 0 : i32
    %c0_i32_0 = arith.constant 0 : i32
    %c0_i32_1 = arith.constant 0 : i32
    return %c0_i32, %c0_i32_0 : i32, i32
  }
  func.func @transform_5(%arg0: i32) -> (i32, i32) {
    %c0_i32 = arith.constant 0 : i32
    %c0_i32_0 = arith.constant 0 : i32
    return %arg0, %c0_i32 : i32, i32
  }
  func.func @transform_6(%arg0: i32) -> (i32, i32) {
    %c0_i32 = arith.constant 0 : i32
    %c0_i32_0 = arith.constant 0 : i32
    return %arg0, %c0_i32 : i32, i32
  }
  func.func @transform_7(%arg0: i32) -> (i32, i32) {
    %c0_i32 = arith.constant 0 : i32
    %c0_i32_0 = arith.constant 0 : i32
    return %arg0, %c0_i32 : i32, i32
  }
}

module attributes {stable_mosaic.version = 11 : i64} {
  func.func @_attention_out_kernel(%arg0: i32, %arg1: i32, %arg2: memref<1x8x32xf32, #tpu.memory_space<vmem>>, %arg3: memref<1x8x32xf32, #tpu.memory_space<vmem>>, %arg4: memref<1x8x32xf32, #tpu.memory_space<vmem>>, %arg5: memref<1x1x8xf32, #tpu.memory_space<vmem>>, %arg6: memref<32x32xf32, #tpu.memory_space<vmem>>, %arg7: memref<1x32xf32, #tpu.memory_space<vmem>>, %arg8: memref<1x8x32xf32, #tpu.memory_space<vmem>>, %arg9: memref<1x8x32xf32, #tpu.memory_space<vmem>>) attributes {dimension_semantics = [#tpu.dimension_semantics<parallel>, #tpu.dimension_semantics<parallel>], iteration_bounds = array<i64: 2, 1>, scalar_prefetch = 0 : i64, scratch_operands = 0 : i64, tpu.core_type = #tpu.core_type<tc>, window_params = [{transform_indices = @transform_0, window_bounds = array<i64: 1, 8, 32>}, {transform_indices = @transform_1, window_bounds = array<i64: 1, 8, 32>}, {transform_indices = @transform_2, window_bounds = array<i64: 1, 8, 32>}, {transform_indices = @transform_3, window_bounds = array<i64: 1, 1, 8>}, {pipeline_mode = #tpu.pipeline_mode<synchronous>, transform_indices = @transform_4, window_bounds = array<i64: 32, 32>}, {pipeline_mode = #tpu.pipeline_mode<synchronous>, transform_indices = @transform_5, window_bounds = array<i64: 1, 32>}, {transform_indices = @transform_6, window_bounds = array<i64: 1, 8, 32>}, {transform_indices = @transform_7, window_bounds = array<i64: 1, 8, 32>}]} {
    %c0 = arith.constant 0 : index
    %c0_0 = arith.constant 0 : index
    %c0_1 = arith.constant 0 : index
    %0 = vector.load %arg2[%c0, %c0_0, %c0_1] : memref<1x8x32xf32, #tpu.memory_space<vmem>>, vector<1x8x32xf32>
    %1 = vector.shape_cast %0 : vector<1x8x32xf32> to vector<8x32xf32>
    %c0_2 = arith.constant 0 : index
    %c0_3 = arith.constant 0 : index
    %c0_4 = arith.constant 0 : index
    %2 = vector.load %arg3[%c0_2, %c0_3, %c0_4] : memref<1x8x32xf32, #tpu.memory_space<vmem>>, vector<1x8x32xf32>
    %3 = vector.shape_cast %2 : vector<1x8x32xf32> to vector<8x32xf32>
    %c0_5 = arith.constant 0 : index
    %c0_6 = arith.constant 0 : index
    %c0_7 = arith.constant 0 : index
    %4 = vector.load %arg4[%c0_5, %c0_6, %c0_7] : memref<1x8x32xf32, #tpu.memory_space<vmem>>, vector<1x8x32xf32>
    %5 = vector.shape_cast %4 : vector<1x8x32xf32> to vector<8x32xf32>
    %c0_8 = arith.constant 0 : index
    %c0_9 = arith.constant 0 : index
    %c0_10 = arith.constant 0 : index
    %6 = vector.load %arg5[%c0_8, %c0_9, %c0_10] : memref<1x1x8xf32, #tpu.memory_space<vmem>>, vector<1x1x8xf32>
    %7 = vector.shape_cast %6 : vector<1x1x8xf32> to vector<1x8xf32>
    %8 = vector.extract_strided_slice %1 {offsets = [0, 0], sizes = [8, 8], strides = [1, 1]} : vector<8x32xf32> to vector<8x8xf32>
    %9 = vector.extract_strided_slice %3 {offsets = [0, 0], sizes = [8, 8], strides = [1, 1]} : vector<8x32xf32> to vector<8x8xf32>
    %cst = arith.constant dense<0.000000e+00> : vector<8x8xf32>
    %10 = tpu.matmul %8, %9, %cst {dimension_numbers = #tpu.dot_dimension_numbers<[1], [1], [0], [0], [0, 0, 1, 0], [], []>} : vector<8x8xf32>, vector<8x8xf32>, vector<8x8xf32> -> vector<8x8xf32>
    %cst_11 = arith.constant 0.353553385 : f32
    %11 = vector.broadcast %cst_11 : f32 to vector<8x8xf32>
    %12 = arith.mulf %10, %11 : vector<8x8xf32>
    %13 = vector.broadcast %7 : vector<1x8xf32> to vector<8x8xf32>
    %14 = arith.addf %12, %13 : vector<8x8xf32>
    %cst_12 = arith.constant dense<0xFF800000> : vector<8xf32>
    %15 = vector.multi_reduction <maximumf>, %14, %cst_12 [1] : vector<8x8xf32> to vector<8xf32>
    %16 = vector.shape_cast %15 : vector<8xf32> to vector<8x1xf32>
    %17 = vector.broadcast %16 : vector<8x1xf32> to vector<8x8xf32>
    %18 = arith.subf %14, %17 : vector<8x8xf32>
    %19 = math.exp %18 : vector<8x8xf32>
    %cst_13 = arith.constant dense<0.000000e+00> : vector<8xf32>
    %20 = vector.multi_reduction <add>, %19, %cst_13 [1] : vector<8x8xf32> to vector<8xf32>
    %21 = vector.shape_cast %20 : vector<8xf32> to vector<8x1xf32>
    %22 = tpu.reciprocal %21 {approx = true} : vector<8x1xf32> -> vector<8x1xf32>
    %23 = vector.broadcast %22 : vector<8x1xf32> to vector<8x8xf32>
    %24 = arith.mulf %19, %23 : vector<8x8xf32>
    %25 = vector.extract_strided_slice %5 {offsets = [0, 0], sizes = [8, 8], strides = [1, 1]} : vector<8x32xf32> to vector<8x8xf32>
    %cst_14 = arith.constant dense<0.000000e+00> : vector<8x8xf32>
    %26 = tpu.matmul %24, %25, %cst_14 {dimension_numbers = #tpu.dot_dimension_numbers<[1], [0], [0], [1], [0, 0, 1, 1], [], []>} : vector<8x8xf32>, vector<8x8xf32>, vector<8x8xf32> -> vector<8x8xf32>
    %27 = vector.extract_strided_slice %1 {offsets = [0, 8], sizes = [8, 8], strides = [1, 1]} : vector<8x32xf32> to vector<8x8xf32>
    %28 = vector.extract_strided_slice %3 {offsets = [0, 8], sizes = [8, 8], strides = [1, 1]} : vector<8x32xf32> to vector<8x8xf32>
    %cst_15 = arith.constant dense<0.000000e+00> : vector<8x8xf32>
    %29 = tpu.matmul %27, %28, %cst_15 {dimension_numbers = #tpu.dot_dimension_numbers<[1], [1], [0], [0], [0, 0, 1, 0], [], []>} : vector<8x8xf32>, vector<8x8xf32>, vector<8x8xf32> -> vector<8x8xf32>
    %cst_16 = arith.constant 0.353553385 : f32
    %30 = vector.broadcast %cst_16 : f32 to vector<8x8xf32>
    %31 = arith.mulf %29, %30 : vector<8x8xf32>
    %32 = vector.broadcast %7 : vector<1x8xf32> to vector<8x8xf32>
    %33 = arith.addf %31, %32 : vector<8x8xf32>
    %cst_17 = arith.constant dense<0xFF800000> : vector<8xf32>
    %34 = vector.multi_reduction <maximumf>, %33, %cst_17 [1] : vector<8x8xf32> to vector<8xf32>
    %35 = vector.shape_cast %34 : vector<8xf32> to vector<8x1xf32>
    %36 = vector.broadcast %35 : vector<8x1xf32> to vector<8x8xf32>
    %37 = arith.subf %33, %36 : vector<8x8xf32>
    %38 = math.exp %37 : vector<8x8xf32>
    %cst_18 = arith.constant dense<0.000000e+00> : vector<8xf32>
    %39 = vector.multi_reduction <add>, %38, %cst_18 [1] : vector<8x8xf32> to vector<8xf32>
    %40 = vector.shape_cast %39 : vector<8xf32> to vector<8x1xf32>
    %41 = tpu.reciprocal %40 {approx = true} : vector<8x1xf32> -> vector<8x1xf32>
    %42 = vector.broadcast %41 : vector<8x1xf32> to vector<8x8xf32>
    %43 = arith.mulf %38, %42 : vector<8x8xf32>
    %44 = vector.extract_strided_slice %5 {offsets = [0, 8], sizes = [8, 8], strides = [1, 1]} : vector<8x32xf32> to vector<8x8xf32>
    %cst_19 = arith.constant dense<0.000000e+00> : vector<8x8xf32>
    %45 = tpu.matmul %43, %44, %cst_19 {dimension_numbers = #tpu.dot_dimension_numbers<[1], [0], [0], [1], [0, 0, 1, 1], [], []>} : vector<8x8xf32>, vector<8x8xf32>, vector<8x8xf32> -> vector<8x8xf32>
    %46 = vector.extract_strided_slice %1 {offsets = [0, 16], sizes = [8, 8], strides = [1, 1]} : vector<8x32xf32> to vector<8x8xf32>
    %47 = vector.extract_strided_slice %3 {offsets = [0, 16], sizes = [8, 8], strides = [1, 1]} : vector<8x32xf32> to vector<8x8xf32>
    %cst_20 = arith.constant dense<0.000000e+00> : vector<8x8xf32>
    %48 = tpu.matmul %46, %47, %cst_20 {dimension_numbers = #tpu.dot_dimension_numbers<[1], [1], [0], [0], [0, 0, 1, 0], [], []>} : vector<8x8xf32>, vector<8x8xf32>, vector<8x8xf32> -> vector<8x8xf32>
    %cst_21 = arith.constant 0.353553385 : f32
    %49 = vector.broadcast %cst_21 : f32 to vector<8x8xf32>
    %50 = arith.mulf %48, %49 : vector<8x8xf32>
    %51 = vector.broadcast %7 : vector<1x8xf32> to vector<8x8xf32>
    %52 = arith.addf %50, %51 : vector<8x8xf32>
    %cst_22 = arith.constant dense<0xFF800000> : vector<8xf32>
    %53 = vector.multi_reduction <maximumf>, %52, %cst_22 [1] : vector<8x8xf32> to vector<8xf32>
    %54 = vector.shape_cast %53 : vector<8xf32> to vector<8x1xf32>
    %55 = vector.broadcast %54 : vector<8x1xf32> to vector<8x8xf32>
    %56 = arith.subf %52, %55 : vector<8x8xf32>
    %57 = math.exp %56 : vector<8x8xf32>
    %cst_23 = arith.constant dense<0.000000e+00> : vector<8xf32>
    %58 = vector.multi_reduction <add>, %57, %cst_23 [1] : vector<8x8xf32> to vector<8xf32>
    %59 = vector.shape_cast %58 : vector<8xf32> to vector<8x1xf32>
    %60 = tpu.reciprocal %59 {approx = true} : vector<8x1xf32> -> vector<8x1xf32>
    %61 = vector.broadcast %60 : vector<8x1xf32> to vector<8x8xf32>
    %62 = arith.mulf %57, %61 : vector<8x8xf32>
    %63 = vector.extract_strided_slice %5 {offsets = [0, 16], sizes = [8, 8], strides = [1, 1]} : vector<8x32xf32> to vector<8x8xf32>
    %cst_24 = arith.constant dense<0.000000e+00> : vector<8x8xf32>
    %64 = tpu.matmul %62, %63, %cst_24 {dimension_numbers = #tpu.dot_dimension_numbers<[1], [0], [0], [1], [0, 0, 1, 1], [], []>} : vector<8x8xf32>, vector<8x8xf32>, vector<8x8xf32> -> vector<8x8xf32>
    %65 = vector.extract_strided_slice %1 {offsets = [0, 24], sizes = [8, 8], strides = [1, 1]} : vector<8x32xf32> to vector<8x8xf32>
    %66 = vector.extract_strided_slice %3 {offsets = [0, 24], sizes = [8, 8], strides = [1, 1]} : vector<8x32xf32> to vector<8x8xf32>
    %cst_25 = arith.constant dense<0.000000e+00> : vector<8x8xf32>
    %67 = tpu.matmul %65, %66, %cst_25 {dimension_numbers = #tpu.dot_dimension_numbers<[1], [1], [0], [0], [0, 0, 1, 0], [], []>} : vector<8x8xf32>, vector<8x8xf32>, vector<8x8xf32> -> vector<8x8xf32>
    %cst_26 = arith.constant 0.353553385 : f32
    %68 = vector.broadcast %cst_26 : f32 to vector<8x8xf32>
    %69 = arith.mulf %67, %68 : vector<8x8xf32>
    %70 = vector.broadcast %7 : vector<1x8xf32> to vector<8x8xf32>
    %71 = arith.addf %69, %70 : vector<8x8xf32>
    %cst_27 = arith.constant dense<0xFF800000> : vector<8xf32>
    %72 = vector.multi_reduction <maximumf>, %71, %cst_27 [1] : vector<8x8xf32> to vector<8xf32>
    %73 = vector.shape_cast %72 : vector<8xf32> to vector<8x1xf32>
    %74 = vector.broadcast %73 : vector<8x1xf32> to vector<8x8xf32>
    %75 = arith.subf %71, %74 : vector<8x8xf32>
    %76 = math.exp %75 : vector<8x8xf32>
    %cst_28 = arith.constant dense<0.000000e+00> : vector<8xf32>
    %77 = vector.multi_reduction <add>, %76, %cst_28 [1] : vector<8x8xf32> to vector<8xf32>
    %78 = vector.shape_cast %77 : vector<8xf32> to vector<8x1xf32>
    %79 = tpu.reciprocal %78 {approx = true} : vector<8x1xf32> -> vector<8x1xf32>
    %80 = vector.broadcast %79 : vector<8x1xf32> to vector<8x8xf32>
    %81 = arith.mulf %76, %80 : vector<8x8xf32>
    %82 = vector.extract_strided_slice %5 {offsets = [0, 24], sizes = [8, 8], strides = [1, 1]} : vector<8x32xf32> to vector<8x8xf32>
    %cst_29 = arith.constant dense<0.000000e+00> : vector<8x8xf32>
    %83 = tpu.matmul %81, %82, %cst_29 {dimension_numbers = #tpu.dot_dimension_numbers<[1], [0], [0], [1], [0, 0, 1, 1], [], []>} : vector<8x8xf32>, vector<8x8xf32>, vector<8x8xf32> -> vector<8x8xf32>
    %84 = tpu.concatenate %26, %45, %64, %83 in 1 : vector<8x8xf32>, vector<8x8xf32>, vector<8x8xf32>, vector<8x8xf32> -> vector<8x32xf32>
    %c0_30 = arith.constant 0 : index
    %c0_31 = arith.constant 0 : index
    %85 = vector.load %arg6[%c0_30, %c0_31] : memref<32x32xf32, #tpu.memory_space<vmem>>, vector<32x32xf32>
    %cst_32 = arith.constant dense<0.000000e+00> : vector<8x32xf32>
    %86 = tpu.matmul %84, %85, %cst_32 {dimension_numbers = #tpu.dot_dimension_numbers<[1], [0], [0], [1], [0, 0, 1, 1], [], []>} : vector<8x32xf32>, vector<32x32xf32>, vector<8x32xf32> -> vector<8x32xf32>
    %c0_33 = arith.constant 0 : index
    %c0_34 = arith.constant 0 : index
    %c0_35 = arith.constant 0 : index
    %87 = vector.load %arg8[%c0_33, %c0_34, %c0_35] : memref<1x8x32xf32, #tpu.memory_space<vmem>>, vector<1x8x32xf32>
    %88 = vector.shape_cast %87 : vector<1x8x32xf32> to vector<8x32xf32>
    %89 = arith.addf %88, %86 : vector<8x32xf32>
    %c0_36 = arith.constant 0 : index
    %c0_37 = arith.constant 0 : index
    %90 = vector.load %arg7[%c0_36, %c0_37] : memref<1x32xf32, #tpu.memory_space<vmem>>, vector<1x32xf32>
    %91 = vector.broadcast %90 : vector<1x32xf32> to vector<8x32xf32>
    %92 = arith.addf %89, %91 : vector<8x32xf32>
    %c0_38 = arith.constant 0 : index
    %c0_39 = arith.constant 0 : index
    %c0_40 = arith.constant 0 : index
    %93 = vector.load %arg9[%c0_38, %c0_39, %c0_40] : memref<1x8x32xf32, #tpu.memory_space<vmem>>, vector<1x8x32xf32>
    %94 = vector.shape_cast %93 : vector<1x8x32xf32> to vector<8x32xf32>
    %95 = vector.shape_cast %92 : vector<8x32xf32> to vector<1x8x32xf32>
    tpu.vector_store %arg9[%c0_38, %c0_39, %c0_40], %95 {strides = array<i32>} : memref<1x8x32xf32, #tpu.memory_space<vmem>>, vector<1x8x32xf32>,
    return
  }
  func.func @transform_0(%arg0: i32, %arg1: i32) -> (i32, i32, i32) {
    %c0_i32 = arith.constant 0 : i32
    %c0_i32_0 = arith.constant 0 : i32
    return %arg0, %arg1, %c0_i32 : i32, i32, i32
  }
  func.func @transform_1(%arg0: i32, %arg1: i32) -> (i32, i32, i32) {
    %c0_i32 = arith.constant 0 : i32
    %c0_i32_0 = arith.constant 0 : i32
    %c0_i32_1 = arith.constant 0 : i32
    return %arg0, %c0_i32, %c0_i32_0 : i32, i32, i32
  }
  func.func @transform_2(%arg0: i32, %arg1: i32) -> (i32, i32, i32) {
    %c0_i32 = arith.constant 0 : i32
    %c0_i32_0 = arith.constant 0 : i32
    %c0_i32_1 = arith.constant 0 : i32
    return %arg0, %c0_i32, %c0_i32_0 : i32, i32, i32
  }
  func.func @transform_3(%arg0: i32, %arg1: i32) -> (i32, i32, i32) {
    %c0_i32 = arith.constant 0 : i32
    %c0_i32_0 = arith.constant 0 : i32
    %c0_i32_1 = arith.constant 0 : i32
    return %arg0, %c0_i32, %c0_i32_0 : i32, i32, i32
  }
  func.func @transform_4(%arg0: i32, %arg1: i32) -> (i32, i32) {
    %c0_i32 = arith.constant 0 : i32
    %c0_i32_0 = arith.constant 0 : i32
    %c0_i32_1 = arith.constant 0 : i32
    return %c0_i32, %c0_i32_0 : i32, i32
  }
  func.func @transform_5(%arg0: i32, %arg1: i32) -> (i32, i32) {
    %c0_i32 = arith.constant 0 : i32
    %c0_i32_0 = arith.constant 0 : i32
    %c0_i32_1 = arith.constant 0 : i32
    return %c0_i32, %c0_i32_0 : i32, i32
  }
  func.func @transform_6(%arg0: i32, %arg1: i32) -> (i32, i32, i32) {
    %c0_i32 = arith.constant 0 : i32
    %c0_i32_0 = arith.constant 0 : i32
    return %arg0, %arg1, %c0_i32 : i32, i32, i32
  }
  func.func @transform_7(%arg0: i32, %arg1: i32) -> (i32, i32, i32) {
    %c0_i32 = arith.constant 0 : i32
    %c0_i32_0 = arith.constant 0 : i32
    return %arg0, %arg1, %c0_i32 : i32, i32, i32
  }
}

module attributes {stable_mosaic.version = 11 : i64} {
  func.func @_ln_ffn_kernel(%arg0: i32, %arg1: i32, %arg2: memref<8x32xf32, #tpu.memory_space<vmem>>, %arg3: memref<1x32xf32, #tpu.memory_space<vmem>>, %arg4: memref<1x32xf32, #tpu.memory_space<vmem>>, %arg5: memref<32x64xf32, #tpu.memory_space<vmem>>, %arg6: memref<1x64xf32, #tpu.memory_space<vmem>>, %arg7: memref<64x32xf32, #tpu.memory_space<vmem>>, %arg8: memref<1x32xf32, #tpu.memory_space<vmem>>, %arg9: memref<8x32xf32, #tpu.memory_space<vmem>>, %arg10: memref<8x32xf32, #tpu.memory_space<vmem>>, %arg11: memref<8x32xf32, #tpu.memory_space<vmem>>) attributes {dimension_semantics = [#tpu.dimension_semantics<parallel>, #tpu.dimension_semantics<arbitrary>], iteration_bounds = array<i64: 2, 1>, scalar_prefetch = 0 : i64, scratch_operands = 2 : i64, tpu.core_type = #tpu.core_type<tc>, window_params = [{transform_indices = @transform_0, window_bounds = array<i64: 8, 32>}, {pipeline_mode = #tpu.pipeline_mode<synchronous>, transform_indices = @transform_1, window_bounds = array<i64: 1, 32>}, {pipeline_mode = #tpu.pipeline_mode<synchronous>, transform_indices = @transform_2, window_bounds = array<i64: 1, 32>}, {transform_indices = @transform_3, window_bounds = array<i64: 32, 64>}, {transform_indices = @transform_4, window_bounds = array<i64: 1, 64>}, {transform_indices = @transform_5, window_bounds = array<i64: 64, 32>}, {pipeline_mode = #tpu.pipeline_mode<synchronous>, transform_indices = @transform_6, window_bounds = array<i64: 1, 32>}, {transform_indices = @transform_7, window_bounds = array<i64: 8, 32>}]} {
    %c0_i32 = arith.constant 0 : i32
    %0 = arith.cmpi eq, %arg1, %c0_i32 : i32
    %1 = arith.extui %0 : i1 to i32
    %c0_i32_0 = arith.constant 0 : i32
    %2 = arith.cmpi ne, %1, %c0_i32_0 : i32
    scf.if %2 {
      %c0_16 = arith.constant 0 : index
      %c0_17 = arith.constant 0 : index
      %19 = vector.load %arg2[%c0_16, %c0_17] : memref<8x32xf32, #tpu.memory_space<vmem>>, vector<8x32xf32>
      %c0_18 = arith.constant 0 : index
      %c0_19 = arith.constant 0 : index
      %20 = vector.load %arg3[%c0_18, %c0_19] : memref<1x32xf32, #tpu.memory_space<vmem>>, vector<1x32xf32>
      %c0_20 = arith.constant 0 : index
      %c0_21 = arith.constant 0 : index
      %21 = vector.load %arg4[%c0_20, %c0_21] : memref<1x32xf32, #tpu.memory_space<vmem>>, vector<1x32xf32>
      %cst_22 = arith.constant dense<0.000000e+00> : vector<8xf32>
      %22 = vector.multi_reduction <add>, %19, %cst_22 [1] : vector<8x32xf32> to vector<8xf32>
      %23 = vector.shape_cast %22 : vector<8xf32> to vector<8x1xf32>
      %cst_23 = arith.constant 3.200000e+01 : f32
      %24 = vector.broadcast %cst_23 : f32 to vector<8x1xf32>
      %25 = arith.divf %23, %24 : vector<8x1xf32>
      %26 = vector.broadcast %25 : vector<8x1xf32> to vector<8x32xf32>
      %27 = arith.subf %19, %26 : vector<8x32xf32>
      %28 = arith.mulf %27, %27 : vector<8x32xf32>
      %cst_24 = arith.constant dense<0.000000e+00> : vector<8xf32>
      %29 = vector.multi_reduction <add>, %28, %cst_24 [1] : vector<8x32xf32> to vector<8xf32>
      %30 = vector.shape_cast %29 : vector<8xf32> to vector<8x1xf32>
      %cst_25 = arith.constant 0.0322580636 : f32
      %31 = vector.broadcast %cst_25 : f32 to vector<8x1xf32>
      %32 = arith.mulf %30, %31 : vector<8x1xf32>
      %33 = math.sqrt %32 : vector<8x1xf32>
      %cst_26 = arith.constant 9.99999997E-7 : f32
      %34 = vector.broadcast %cst_26 : f32 to vector<8x1xf32>
      %35 = arith.addf %33, %34 : vector<8x1xf32>
      %36 = vector.broadcast %35 : vector<8x1xf32> to vector<8x32xf32>
      %37 = arith.divf %27, %36 : vector<8x32xf32>
      %38 = vector.broadcast %20 : vector<1x32xf32> to vector<8x32xf32>
      %39 = arith.mulf %38, %37 : vector<8x32xf32>
      %40 = vector.broadcast %21 : vector<1x32xf32> to vector<8x32xf32>
      %41 = arith.addf %39, %40 : vector<8x32xf32>
      %c0_27 = arith.constant 0 : index
      %c0_28 = arith.constant 0 : index
      %42 = vector.load %arg11[%c0_27, %c0_28] : memref<8x32xf32, #tpu.memory_space<vmem>>, vector<8x32xf32>
      tpu.vector_store %arg11[%c0_27, %c0_28], %41 {strides = array<i32>} : memref<8x32xf32, #tpu.memory_space<vmem>>, vector<8x32xf32>,
      %c0_29 = arith.constant 0 : index
      %c0_30 = arith.constant 0 : index
      %43 = vector.load %arg2[%c0_29, %c0_30] : memref<8x32xf32, #tpu.memory_space<vmem>>, vector<8x32xf32>
      %c0_31 = arith.constant 0 : index
      %c0_32 = arith.constant 0 : index
      %44 = vector.load %arg8[%c0_31, %c0_32] : memref<1x32xf32, #tpu.memory_space<vmem>>, vector<1x32xf32>
      %45 = vector.broadcast %44 : vector<1x32xf32> to vector<8x32xf32>
      %46 = arith.addf %43, %45 : vector<8x32xf32>
      %c0_33 = arith.constant 0 : index
      %c0_34 = arith.constant 0 : index
      %47 = vector.load %arg10[%c0_33, %c0_34] : memref<8x32xf32, #tpu.memory_space<vmem>>, vector<8x32xf32>
      tpu.vector_store %arg10[%c0_33, %c0_34], %46 {strides = array<i32>} : memref<8x32xf32, #tpu.memory_space<vmem>>, vector<8x32xf32>,
    } else {
    }
    %c0 = arith.constant 0 : index
    %c0_1 = arith.constant 0 : index
    %3 = vector.load %arg11[%c0, %c0_1] : memref<8x32xf32, #tpu.memory_space<vmem>>, vector<8x32xf32>
    %c0_2 = arith.constant 0 : index
    %c0_3 = arith.constant 0 : index
    %4 = vector.load %arg5[%c0_2, %c0_3] : memref<32x64xf32, #tpu.memory_space<vmem>>, vector<32x64xf32>
    %cst = arith.constant dense<0.000000e+00> : vector<8x64xf32>
    %5 = tpu.matmul %3, %4, %cst {dimension_numbers = #tpu.dot_dimension_numbers<[1], [0], [0], [1], [0, 0, 1, 1], [], []>} : vector<8x32xf32>, vector<32x64xf32>, vector<8x64xf32> -> vector<8x64xf32>
    %c0_4 = arith.constant 0 : index
    %c0_5 = arith.constant 0 : index
    %6 = vector.load %arg6[%c0_4, %c0_5] : memref<1x64xf32, #tpu.memory_space<vmem>>, vector<1x64xf32>
    %7 = vector.broadcast %6 : vector<1x64xf32> to vector<8x64xf32>
    %8 = arith.addf %5, %7 : vector<8x64xf32>
    %cst_6 = arith.constant 0.000000e+00 : f32
    %9 = vector.broadcast %cst_6 : f32 to vector<8x64xf32>
    %10 = arith.maximumf %8, %9 : vector<8x64xf32>
    %c0_7 = arith.constant 0 : index
    %c0_8 = arith.constant 0 : index
    %11 = vector.load %arg10[%c0_7, %c0_8] : memref<8x32xf32, #tpu.memory_space<vmem>>, vector<8x32xf32>
    %c0_9 = arith.constant 0 : index
    %c0_10 = arith.constant 0 : index
    %12 = vector.load %arg7[%c0_9, %c0_10] : memref<64x32xf32, #tpu.memory_space<vmem>>, vector<64x32xf32>
    %cst_11 = arith.constant dense<0.000000e+00> : vector<8x32xf32>
    %13 = tpu.matmul %10, %12, %cst_11 {dimension_numbers = #tpu.dot_dimension_numbers<[1], [0], [0], [1], [0, 0, 1, 1], [], []>} : vector<8x64xf32>, vector<64x32xf32>, vector<8x32xf32> -> vector<8x32xf32>
    %14 = arith.addf %11, %13 : vector<8x32xf32>
    %c0_12 = arith.constant 0 : index
    %c0_13 = arith.constant 0 : index
    %15 = vector.load %arg10[%c0_12, %c0_13] : memref<8x32xf32, #tpu.memory_space<vmem>>, vector<8x32xf32>
    tpu.vector_store %arg10[%c0_12, %c0_13], %14 {strides = array<i32>} : memref<8x32xf32, #tpu.memory_space<vmem>>, vector<8x32xf32>,
    %c0_i32_14 = arith.constant 0 : i32
    %16 = arith.cmpi eq, %arg1, %c0_i32_14 : i32
    %17 = arith.extui %16 : i1 to i32
    %c0_i32_15 = arith.constant 0 : i32
    %18 = arith.cmpi ne, %17, %c0_i32_15 : i32
    scf.if %18 {
      %c0_16 = arith.constant 0 : index
      %c0_17 = arith.constant 0 : index
      %19 = vector.load %arg10[%c0_16, %c0_17] : memref<8x32xf32, #tpu.memory_space<vmem>>, vector<8x32xf32>
      %c0_18 = arith.constant 0 : index
      %c0_19 = arith.constant 0 : index
      %20 = vector.load %arg9[%c0_18, %c0_19] : memref<8x32xf32, #tpu.memory_space<vmem>>, vector<8x32xf32>
      tpu.vector_store %arg9[%c0_18, %c0_19], %19 {strides = array<i32>} : memref<8x32xf32, #tpu.memory_space<vmem>>, vector<8x32xf32>,
    } else {
    }
    return
  }
  func.func @transform_0(%arg0: i32, %arg1: i32) -> (i32, i32) {
    %c0_i32 = arith.constant 0 : i32
    %c0_i32_0 = arith.constant 0 : i32
    return %arg0, %c0_i32 : i32, i32
  }
  func.func @transform_1(%arg0: i32, %arg1: i32) -> (i32, i32) {
    %c0_i32 = arith.constant 0 : i32
    %c0_i32_0 = arith.constant 0 : i32
    %c0_i32_1 = arith.constant 0 : i32
    return %c0_i32, %c0_i32_0 : i32, i32
  }
  func.func @transform_2(%arg0: i32, %arg1: i32) -> (i32, i32) {
    %c0_i32 = arith.constant 0 : i32
    %c0_i32_0 = arith.constant 0 : i32
    %c0_i32_1 = arith.constant 0 : i32
    return %c0_i32, %c0_i32_0 : i32, i32
  }
  func.func @transform_3(%arg0: i32, %arg1: i32) -> (i32, i32) {
    %c0_i32 = arith.constant 0 : i32
    %c0_i32_0 = arith.constant 0 : i32
    return %c0_i32, %arg1 : i32, i32
  }
  func.func @transform_4(%arg0: i32, %arg1: i32) -> (i32, i32) {
    %c0_i32 = arith.constant 0 : i32
    %c0_i32_0 = arith.constant 0 : i32
    return %c0_i32, %arg1 : i32, i32
  }
  func.func @transform_5(%arg0: i32, %arg1: i32) -> (i32, i32) {
    %c0_i32 = arith.constant 0 : i32
    %c0_i32_0 = arith.constant 0 : i32
    return %arg1, %c0_i32 : i32, i32
  }
  func.func @transform_6(%arg0: i32, %arg1: i32) -> (i32, i32) {
    %c0_i32 = arith.constant 0 : i32
    %c0_i32_0 = arith.constant 0 : i32
    %c0_i32_1 = arith.constant 0 : i32
    return %c0_i32, %c0_i32_0 : i32, i32
  }
  func.func @transform_7(%arg0: i32, %arg1: i32) -> (i32, i32) {
    %c0_i32 = arith.constant 0 : i32
    %c0_i32_0 = arith.constant 0 : i32
    return %arg0, %c0_i32 : i32, i32
  }
}

module attributes {stable_mosaic.version = 11 : i64} {
  func.func @_layernorm_kernel(%arg0: i32, %arg1: memref<8x32xf32, #tpu.memory_space<vmem>>, %arg2: memref<1x32xf32, #tpu.memory_space<vmem>>, %arg3: memref<1x32xf32, #tpu.memory_space<vmem>>, %arg4: memref<8x32xf32, #tpu.memory_space<vmem>>) attributes {dimension_semantics = [#tpu.dimension_semantics<parallel>], iteration_bounds = array<i64: 2>, scalar_prefetch = 0 : i64, scratch_operands = 0 : i64, tpu.core_type = #tpu.core_type<tc>, window_params = [{transform_indices = @transform_0, window_bounds = array<i64: 8, 32>}, {pipeline_mode = #tpu.pipeline_mode<synchronous>, transform_indices = @transform_1, window_bounds = array<i64: 1, 32>}, {pipeline_mode = #tpu.pipeline_mode<synchronous>, transform_indices = @transform_2, window_bounds = array<i64: 1, 32>}, {transform_indices = @transform_3, window_bounds = array<i64: 8, 32>}]} {
    %c0 = arith.constant 0 : index
    %c0_0 = arith.constant 0 : index
    %0 = vector.load %arg1[%c0, %c0_0] : memref<8x32xf32, #tpu.memory_space<vmem>>, vector<8x32xf32>
    %c0_1 = arith.constant 0 : index
    %c0_2 = arith.constant 0 : index
    %1 = vector.load %arg2[%c0_1, %c0_2] : memref<1x32xf32, #tpu.memory_space<vmem>>, vector<1x32xf32>
    %c0_3 = arith.constant 0 : index
    %c0_4 = arith.constant 0 : index
    %2 = vector.load %arg3[%c0_3, %c0_4] : memref<1x32xf32, #tpu.memory_space<vmem>>, vector<1x32xf32>
    %cst = arith.constant dense<0.000000e+00> : vector<8xf32>
    %3 = vector.multi_reduction <add>, %0, %cst [1] : vector<8x32xf32> to vector<8xf32>
    %4 = vector.shape_cast %3 : vector<8xf32> to vector<8x1xf32>
    %cst_5 = arith.constant 3.200000e+01 : f32
    %5 = vector.broadcast %cst_5 : f32 to vector<8x1xf32>
    %6 = arith.divf %4, %5 : vector<8x1xf32>
    %7 = vector.broadcast %6 : vector<8x1xf32> to vector<8x32xf32>
    %8 = arith.subf %0, %7 : vector<8x32xf32>
    %9 = arith.mulf %8, %8 : vector<8x32xf32>
    %cst_6 = arith.constant dense<0.000000e+00> : vector<8xf32>
    %10 = vector.multi_reduction <add>, %9, %cst_6 [1] : vector<8x32xf32> to vector<8xf32>
    %11 = vector.shape_cast %10 : vector<8xf32> to vector<8x1xf32>
    %cst_7 = arith.constant 0.0322580636 : f32
    %12 = vector.broadcast %cst_7 : f32 to vector<8x1xf32>
    %13 = arith.mulf %11, %12 : vector<8x1xf32>
    %14 = math.sqrt %13 : vector<8x1xf32>
    %cst_8 = arith.constant 9.99999997E-7 : f32
    %15 = vector.broadcast %cst_8 : f32 to vector<8x1xf32>
    %16 = arith.addf %14, %15 : vector<8x1xf32>
    %17 = vector.broadcast %16 : vector<8x1xf32> to vector<8x32xf32>
    %18 = arith.divf %8, %17 : vector<8x32xf32>
    %19 = vector.broadcast %1 : vector<1x32xf32> to vector<8x32xf32>
    %20 = arith.mulf %19, %18 : vector<8x32xf32>
    %21 = vector.broadcast %2 : vector<1x32xf32> to vector<8x32xf32>
    %22 = arith.addf %20, %21 : vector<8x32xf32>
    %c0_9 = arith.constant 0 : index
    %c0_10 = arith.constant 0 : index
    %23 = vector.load %arg4[%c0_9, %c0_10] : memref<8x32xf32, #tpu.memory_space<vmem>>, vector<8x32xf32>
    tpu.vector_store %arg4[%c0_9, %c0_10], %22 {strides = array<i32>} : memref<8x32xf32, #tpu.memory_space<vmem>>, vector<8x32xf32>,
    return
  }
  func.func @transform_0(%arg0: i32) -> (i32, i32) {
    %c0_i32 = arith.constant 0 : i32
    %c0_i32_0 = arith.constant 0 : i32
    return %arg0, %c0_i32 : i32, i32
  }
  func.func @transform_1(%arg0: i32) -> (i32, i32) {
    %c0_i32 = arith.constant 0 : i32
    %c0_i32_0 = arith.constant 0 : i32
    %c0_i32_1 = arith.constant 0 : i32
    return %c0_i32, %c0_i32_0 : i32, i32
  }
  func.func @transform_2(%arg0: i32) -> (i32, i32) {
    %c0_i32 = arith.constant 0 : i32
    %c0_i32_0 = arith.constant 0 : i32
    %c0_i32_1 = arith.constant 0 : i32
    return %c0_i32, %c0_i32_0 : i32, i32
  }
  func.func @transform_3(%arg0: i32) -> (i32, i32) {
    %c0_i32 = arith.constant 0 : i32
    %c0_i32_0 = arith.constant 0 : i32
    return %arg0, %c0_i32 : i32, i32
  }
}

</mosaic_0001>

<llo_original>
// kernel: encoder_forward.7
$region0: #{encoder_forward.7}
  #allocation0 [shape = 'u32[]', space=smem, size = 0x4, offset = 0x4, fixed_abs, tag = 'smem constant byte address 0x4 - core index']
  #allocation1 [shape = 'u32[144,128]{1,0:T(1,128)}', space=vmem, size = 0x12000, scoped, tag = 'internal scratch']
  %s0 = inlined_call_operand.vmem [shape: f32[16,32], index: 0, kind: input, shape index: {}]
  %s1 = inlined_call_operand.vmem [shape: f32[1,32], index: 1, kind: input, shape index: {}]
  %s2 = inlined_call_operand.vmem [shape: f32[1,32], index: 2, kind: input, shape index: {}]
  %s3 = inlined_call_operand.vmem [shape: f32[32,96], index: 3, kind: input, shape index: {}]
  %s4 = inlined_call_operand.vmem [shape: f32[1,96], index: 4, kind: input, shape index: {}]
  %s5 = inlined_call_operand.vmem [shape: f32[16,32], index: 5, kind: output, shape index: {0}]
  %s6 = inlined_call_operand.vmem [shape: f32[16,32], index: 6, kind: output, shape index: {1}]
  %s7 = inlined_call_operand.vmem [shape: f32[16,32], index: 7, kind: output, shape index: {2}]
  %8 = xla_tuple %s5, %s6, %s7
  %s9 = sld [smem:[#allocation0]]
  $region69: #{encoder_forward.7} parent=0
    _
  %s11 = ssub.s32 1, %s9
  %s12 = scalar_select 0, %s11, %s9
  loop: start=0, step=1, limit=4
  $region2: #{encoder_forward.7} parent=0 // loop_pre_header
    _
  $region3: #{encoder_forward.7} parent=0 // loop_header
    %s14 = sphi 0, %s18
    %p15 = scmp.ge.s32.totalorder %s14, 4
    %s24 = sphi 0, %s26
    %s27 = sphi 0, %s24
    %s28 = sphi 0, %s27
    %s44 = sphi 0, %s28
    %s48 = sphi 0, %s48
    %s50 = sphi 0, %s48
    %s51 = sphi 0, %s50
    %s65 = sphi 0, %s51
    %s69 = sphi 0, %s69
    %s71 = sphi 0, %s69
    %s72 = sphi 0, %s71
    %s86 = sphi 0, %s72
    %s90 = sphi 0, %s90
    %s92 = sphi 0, %s90
    %s93 = sphi 0, %s92
    %s107 = sphi 0, %s93
    %s111 = sphi 0, %s111
    %s113 = sphi 0, %s111
    %s114 = sphi 0, %s113
    %s128 = sphi 0, %s114
    %s134 = sphi 0, %s136
    %s137 = sphi 0, %s134
    %s138 = sphi 0, %s137
    %s154 = sphi 0, %s138
    %s160 = sphi 0, %s162
    %s163 = sphi 0, %s160
    %s164 = sphi 0, %s163
    %s180 = sphi 0, %s164
    %s186 = sphi 0, %s188
    %s189 = sphi 0, %s186
    %s190 = sphi 0, %s189
    %s206 = sphi 0, %s190
  $region4: #{encoder_forward.7} parent=0 // loop_header_branch
    %17 = sbr.rel (%p15) target = $region8
  $region5: #{encoder_forward.7} parent=0 // loop_body
    %s19 = ssub.s32 %s14, 1
    %s20 = ssub.s32 %s14, 2
    %s21 = sadd.s32 %s14, 1
    %s22 = ssub.s32 %s14, %s21
    %p23 = scmp.eq.s32.totalorder %s22, 0
    %s25 = sadd.s32 %s24, 1
    %s26 = scalar_select %p23, %s24, %s25
    %p29 = pneg %p23
    %p30 = scmp.eq.s32.totalorder %s14, 1
    %p31 = por %p29, %p30
    %p32 = scmp.ne.s32.totalorder %s24, %s27
    %p33 = scmp.eq.s32.totalorder %s14, 0
    %p34 = por %p32, %p33
    %p35 = scmp.ne.s32.totalorder %s24, %s27
    %p36 = scmp.eq.s32.totalorder %s19, 1
    %p37 = por %p35, %p36
    %p38 = scmp.ne.s32.totalorder %s27, %s28
    %p39 = scmp.eq.s32.totalorder %s19, 0
    %p40 = por %p38, %p39
    %p41 = scmp.ne.s32.totalorder %s27, %s28
    %p42 = scmp.eq.s32.totalorder %s20, 1
    %p43 = por %p41, %p42
    %p45 = scmp.ne.s32.totalorder %s28, %s44
    %p46 = scmp.eq.s32.totalorder %s20, 0
    %p47 = por %p45, %p46
    %s49 = sadd.s32 %s48, 1
    %p52 = scmp.eq.s32.totalorder %s14, 1
    %p53 = scmp.ne.s32.totalorder %s48, %s50
    %p54 = scmp.eq.s32.totalorder %s14, 0
    %p55 = por %p53, %p54
    %p56 = scmp.ne.s32.totalorder %s48, %s50
    %p57 = scmp.eq.s32.totalorder %s19, 1
    %p58 = por %p56, %p57
    %p59 = scmp.ne.s32.totalorder %s50, %s51
    %p60 = scmp.eq.s32.totalorder %s19, 0
    %p61 = por %p59, %p60
    %p62 = scmp.ne.s32.totalorder %s50, %s51
    %p63 = scmp.eq.s32.totalorder %s20, 1
    %p64 = por %p62, %p63
    %p66 = scmp.ne.s32.totalorder %s51, %s65
    %p67 = scmp.eq.s32.totalorder %s20, 0
    %p68 = por %p66, %p67
    %s70 = sadd.s32 %s69, 1
    %p73 = scmp.eq.s32.totalorder %s14, 1
    %p74 = scmp.ne.s32.totalorder %s69, %s71
    %p75 = scmp.eq.s32.totalorder %s14, 0
    %p76 = por %p74, %p75
    %p77 = scmp.ne.s32.totalorder %s69, %s71
    %p78 = scmp.eq.s32.totalorder %s19, 1
    %p79 = por %p77, %p78
    %p80 = scmp.ne.s32.totalorder %s71, %s72
    %p81 = scmp.eq.s32.totalorder %s19, 0
    %p82 = por %p80, %p81
    %p83 = scmp.ne.s32.totalorder %s71, %s72
    %p84 = scmp.eq.s32.totalorder %s20, 1
    %p85 = por %p83, %p84
    %p87 = scmp.ne.s32.totalorder %s72, %s86
    %p88 = scmp.eq.s32.totalorder %s20, 0
    %p89 = por %p87, %p88
    %s91 = sadd.s32 %s90, 1
    %p94 = scmp.eq.s32.totalorder %s14, 1
    %p95 = scmp.ne.s32.totalorder %s90, %s92
    %p96 = scmp.eq.s32.totalorder %s14, 0
    %p97 = por %p95, %p96
    %p98 = scmp.ne.s32.totalorder %s90, %s92
    %p99 = scmp.eq.s32.totalorder %s19, 1
    %p100 = por %p98, %p99
    %p101 = scmp.ne.s32.totalorder %s92, %s93
    %p102 = scmp.eq.s32.totalorder %s19, 0
    %p103 = por %p101, %p102
    %p104 = scmp.ne.s32.totalorder %s92, %s93
    %p105 = scmp.eq.s32.totalorder %s20, 1
    %p106 = por %p104, %p105
    %p108 = scmp.ne.s32.totalorder %s93, %s107
    %p109 = scmp.eq.s32.totalorder %s20, 0
    %p110 = por %p108, %p109
    %s112 = sadd.s32 %s111, 1
    %p115 = scmp.eq.s32.totalorder %s14, 1
    %p116 = scmp.ne.s32.totalorder %s111, %s113
    %p117 = scmp.eq.s32.totalorder %s14, 0
    %p118 = por %p116, %p117
    %p119 = scmp.ne.s32.totalorder %s111, %s113
    %p120 = scmp.eq.s32.totalorder %s19, 1
    %p121 = por %p119, %p120
    %p122 = scmp.ne.s32.totalorder %s113, %s114
    %p123 = scmp.eq.s32.totalorder %s19, 0
    %p124 = por %p122, %p123
    %p125 = scmp.ne.s32.totalorder %s113, %s114
    %p126 = scmp.eq.s32.totalorder %s20, 1
    %p127 = por %p125, %p126
    %p129 = scmp.ne.s32.totalorder %s114, %s128
    %p130 = scmp.eq.s32.totalorder %s20, 0
    %p131 = por %p129, %p130
    %s132 = ssub.s32 %s14, %s21
    %p133 = scmp.eq.s32.totalorder %s132, 0
    %s135 = sadd.s32 %s134, 1
    %s136 = scalar_select %p133, %s134, %s135
    %p139 = pneg %p133
    %p140 = scmp.eq.s32.totalorder %s14, 1
    %p141 = por %p139, %p140
    %p142 = scmp.ne.s32.totalorder %s134, %s137
    %p143 = scmp.eq.s32.totalorder %s14, 0
    %p144 = por %p142, %p143
    %p145 = scmp.ne.s32.totalorder %s134, %s137
    %p146 = scmp.eq.s32.totalorder %s19, 1
    %p147 = por %p145, %p146
    %p148 = scmp.ne.s32.totalorder %s137, %s138
    %p149 = scmp.eq.s32.totalorder %s19, 0
    %p150 = por %p148, %p149
    %p151 = scmp.ne.s32.totalorder %s137, %s138
    %p152 = scmp.eq.s32.totalorder %s20, 1
    %p153 = por %p151, %p152
    %p155 = scmp.ne.s32.totalorder %s138, %s154
    %p156 = scmp.eq.s32.totalorder %s20, 0
    %p157 = por %p155, %p156
    %s158 = ssub.s32 %s14, %s21
    %p159 = scmp.eq.s32.totalorder %s158, 0
    %s161 = sadd.s32 %s160, 1
    %s162 = scalar_select %p159, %s160, %s161
    %p165 = pneg %p159
    %p166 = scmp.eq.s32.totalorder %s14, 1
    %p167 = por %p165, %p166
    %p168 = scmp.ne.s32.totalorder %s160, %s163
    %p169 = scmp.eq.s32.totalorder %s14, 0
    %p170 = por %p168, %p169
    %p171 = scmp.ne.s32.totalorder %s160, %s163
    %p172 = scmp.eq.s32.totalorder %s19, 1
    %p173 = por %p171, %p172
    %p174 = scmp.ne.s32.totalorder %s163, %s164
    %p175 = scmp.eq.s32.totalorder %s19, 0
    %p176 = por %p174, %p175
    %p177 = scmp.ne.s32.totalorder %s163, %s164
    %p178 = scmp.eq.s32.totalorder %s20, 1
    %p179 = por %p177, %p178
    %p181 = scmp.ne.s32.totalorder %s164, %s180
    %p182 = scmp.eq.s32.totalorder %s20, 0
    %p183 = por %p181, %p182
    %s184 = ssub.s32 %s14, %s21
    %p185 = scmp.eq.s32.totalorder %s184, 0
    %s187 = sadd.s32 %s186, 1
    %s188 = scalar_select %p185, %s186, %s187
    %p191 = pneg %p185
    %p192 = scmp.eq.s32.totalorder %s14, 1
    %p193 = por %p191, %p192
    %p194 = scmp.ne.s32.totalorder %s186, %s189
    %p195 = scmp.eq.s32.totalorder %s14, 0
    %p196 = por %p194, %p195
    %p197 = scmp.ne.s32.totalorder %s186, %s189
    %p198 = scmp.eq.s32.totalorder %s19, 1
    %p199 = por %p197, %p198
    %p200 = scmp.ne.s32.totalorder %s189, %s190
    %p201 = scmp.eq.s32.totalorder %s19, 0
    %p202 = por %p200, %p201
    %p203 = scmp.ne.s32.totalorder %s189, %s190
    %p204 = scmp.eq.s32.totalorder %s20, 1
    %p205 = por %p203, %p204
    %p207 = scmp.ne.s32.totalorder %s190, %s206
    %p208 = scmp.eq.s32.totalorder %s20, 0
    %p209 = por %p207, %p208
    %p210 = scmp.le.s32.totalorder 1, %s14
    %p211 = scmp.lt.s32.totalorder %s14, 3
    %p212 = pnand %p210, %p211
    %p213 = pneg %p212
    // Predicated region
    $region9: #{encoder_forward.7} parent=5 // pred_check
      _
    $region10: #{encoder_forward.7} parent=5 // pred_check_branch
      %215 = sbr.rel (%p212) target = $region12
    $region11: #{encoder_forward.7} parent=5 // pred_region
      %s216 = ssub.s32 %s14, 1
      // Predicated region
      $region13: #{encoder_forward.7} parent=11 // pred_check
        %p217 = pneg %p61
      $region14: #{encoder_forward.7} parent=11 // pred_check_branch
        %219 = sbr.rel (%p217) target = $region16
      $region15: #{encoder_forward.7} parent=11 // pred_region
        _
      $region16: #{encoder_forward.7} parent=11 // pred_fallthru
        _
      // Predicated region
      $region17: #{encoder_forward.7} parent=11 // pred_check
        %p220 = pneg %p82
      $region18: #{encoder_forward.7} parent=11 // pred_check_branch
        %222 = sbr.rel (%p220) target = $region20
      $region19: #{encoder_forward.7} parent=11 // pred_region
        _
      $region20: #{encoder_forward.7} parent=11 // pred_fallthru
        _
      // Predicated region
      $region21: #{encoder_forward.7} parent=11 // pred_check
        %p223 = pneg %p103
      $region22: #{encoder_forward.7} parent=11 // pred_check_branch
        %225 = sbr.rel (%p223) target = $region24
      $region23: #{encoder_forward.7} parent=11 // pred_region
        _
      $region24: #{encoder_forward.7} parent=11 // pred_fallthru
        _
      // Predicated region
      $region25: #{encoder_forward.7} parent=11 // pred_check
        %p226 = pneg %p124
      $region26: #{encoder_forward.7} parent=11 // pred_check_branch
        %228 = sbr.rel (%p226) target = $region28
      $region27: #{encoder_forward.7} parent=11 // pred_region
        _
      $region28: #{encoder_forward.7} parent=11 // pred_fallthru
        _
    $region12: #{encoder_forward.7} parent=5 // pred_fallthru
      _
    %p229 = scmp.lt.s32.totalorder %s14, 2
    // Predicated region
    $region29: #{encoder_forward.7} parent=5 // pred_check
      %p230 = pneg %p229
    $region30: #{encoder_forward.7} parent=5 // pred_check_branch
      %232 = sbr.rel (%p230) target = $region32
    $region31: #{encoder_forward.7} parent=5 // pred_region
      // Predicated region
      $region33: #{encoder_forward.7} parent=31 // pred_check
        %p233 = pneg %p34
      $region34: #{encoder_forward.7} parent=31 // pred_check_branch
        %235 = sbr.rel (%p233) target = $region36
      $region35: #{encoder_forward.7} parent=31 // pred_region
        %p236 = scmp.lt.s32.totalorder %s14, 1
        %s237 = scalar_select %p236, %s14, 1
        %s238 = smul.addr %s237, 8
        %s239 = scalar_lea.vmem %s0, %s238
      $region36: #{encoder_forward.7} parent=31 // pred_fallthru
        _
    $region32: #{encoder_forward.7} parent=5 // pred_fallthru
      _
    %p240 = scmp.le.s32.totalorder 1, %s14
    %p241 = scmp.lt.s32.totalorder %s14, 3
    %p242 = pnand %p240, %p241
    %p243 = pneg %p242
    // Predicated region
    $region37: #{encoder_forward.7} parent=5 // pred_check
      _
    $region38: #{encoder_forward.7} parent=5 // pred_check_branch
      %245 = sbr.rel (%p242) target = $region40
    $region39: #{encoder_forward.7} parent=5 // pred_region
      %s246 = ssub.s32 %s14, 1
      %p247 = scmp.lt.s32.totalorder %s19, 1
      %s248 = scalar_select %p247, %s19, 1
      %s249 = smul.addr %s248, 8
      %s250 = scalar_lea.vmem %s0, %s249
      %p251 = pneg %p40
      %p252 = pneg %p37
      %p253 = pneg %p61
      %p254 = pneg %p58
      %p255 = pneg %p82
      %p256 = pneg %p79
      %p257 = pneg %p103
      %p258 = pneg %p100
      %p259 = pneg %p124
      %p260 = pneg %p121
      %p261 = pneg %p150
      %p262 = pneg %p147
      %p263 = scmp.lt.s32.totalorder %s19, 1
      %s264 = scalar_select %p263, %s19, 1
      %s265 = smul.addr %s264, 8
      %s266 = scalar_lea.vmem %s5, %s265
      %p267 = pneg %p176
      %p268 = pneg %p173
      %p269 = scmp.lt.s32.totalorder %s19, 1
      %s270 = scalar_select %p269, %s19, 1
      %s271 = smul.addr %s270, 8
      %s272 = scalar_lea.vmem %s6, %s271
      %p273 = pneg %p202
      %p274 = pneg %p199
      %p275 = scmp.lt.s32.totalorder %s19, 1
      %s276 = scalar_select %p275, %s19, 1
      %s277 = smul.addr %s276, 8
      %s278 = scalar_lea.vmem %s7, %s277
      %p279 = scmp.lt.s32.totalorder %s19, 1
      %s280 = scalar_select %p279, %s19, 1
      %s281 = smul.addr %s280, 8
      %s282 = scalar_lea.vmem %s0, %s281
      %p283 = scmp.lt.s32.totalorder %s19, 1
      %s284 = scalar_select %p283, %s19, 1
      %s285 = smul.addr %s284, 8
      %s286 = scalar_lea.vmem %s5, %s285
      %p287 = scmp.lt.s32.totalorder %s19, 1
      %s288 = scalar_select %p287, %s19, 1
      %s289 = smul.addr %s288, 8
      %s290 = scalar_lea.vmem %s6, %s289
      %p291 = scmp.lt.s32.totalorder %s19, 1
      %s292 = scalar_select %p291, %s19, 1
      %s293 = smul.addr %s292, 8
      %s294 = scalar_lea.vmem %s7, %s293
      %v295 = vld [vmem:[%s282] sm:$0xff]
      %v296 = vld [vmem:[%s1] sm:$0x1]
      %v297 = vld [vmem:[%s2] sm:$0x1]
      %vm298 = vcmask 261120
      %v299 = vsel %vm298, %v295, 0.0
      %300 = vadd.xlane.f32.xlu0 %v299
      %v301 = vpop.xlane.xlu0 %300
      %v302 = vrcp.pop 32.0
      %v303 = vmul.f32 %v301, %v302
      %v304 = vsub.f32 %v295, %v303
      %v305 = vmul.f32 %v304, %v304
      %v306 = vsel %vm298, %v305, 0.0
      %307 = vadd.xlane.f32.xlu0 %v306
      %v308 = vpop.xlane.xlu0 %307
      %v309 = vmul.f32 %v308, 0.032258064
      %v310 = vrsqrt.pop %v309
      %v311 = vmul.f32 %v309, %v310
      %vm312 = vcmp.eq.f32.partialorder %v309, inf
      %v313 = vsel %vm312, %v309, %v311
      %vm314 = vcmp.eq.f32.partialorder %v309, 0.0
      %v315 = vand.u32 %v309, 2147483648
      %v316 = vsel %vm314, %v315, %v313
      %v317 = vadd.f32 %v316, 1e-06
      %v318 = vrcp.pop %v317
      %v319 = vmul.f32 %v304, %v318
      %v321 = vlaneseq
      %v322 = vshrl.u32 %v321, 7
      %v323 = vsub.s32 0, %v322
      %v324 = vrot.slane %v296, %v323
      %v326 = vmul.f32 %v324, %v319
      %v328 = vlaneseq
      %v329 = vshrl.u32 %v328, 7
      %v330 = vsub.s32 0, %v329
      %v331 = vrot.slane %v297, %v330
      %v333 = vadd.f32 %v326, %v331
      %v334 = vld [vmem:[%s3] sm:$0xff]
      %v335 = vld [vmem:[%s3 + $0x8] sm:$0xff]
      %v336 = vld [vmem:[%s3 + $0x10] sm:$0xff]
      %v337 = vld [vmem:[%s3 + $0x18] sm:$0xff]
      %v338 = vld [vmem:[%s4] sm:$0x1]
      %v340 = vlaneseq
      %v341 = vshrl.u32 %v340, 7
      %v342 = vsub.s32 0, %v341
      %v343 = vrot.slane %v338, %v342
      %v346 = vsel %vm298, %v333, 0
      %348 = vmatprep.subr.mxu0 0.0
      %349 = vmatpush1.msra.mxu0 %v334
      %350 = vmatprep.subr.mxu0 0.0
      %351 = vmatpush1.msra.mxu0 %v335
      %352 = vmatprep.subr.mxu0 0.0
      %353 = vmatpush1.msra.mxu0 %v336
      %354 = vmatprep.subr.mxu0 0.0
      %355 = vmatpush1.msra.mxu0 %v337
      %356 = vmatprep.subr.mxu0 0.0
      %357 = vmatpush1.msra.mxu0 0.0
      %358 = vmatprep.subr.mxu0 0.0
      %359 = vmatpush1.msra.mxu0 0.0
      %360 = vmatprep.subr.mxu0 0.0
      %361 = vmatpush1.msra.mxu0 0.0
      %362 = vmatprep.subr.mxu0 0.0
      %363 = vmatpush1.msra.mxu0 0.0
      %364 = vmatprep.subr.mxu0 0.0
      %365 = vmatpush1.msra.mxu0 0.0
      %366 = vmatprep.subr.mxu0 0.0
      %367 = vmatpush1.msra.mxu0 0.0
      %368 = vmatprep.subr.mxu0 0.0
      %369 = vmatpush1.msra.mxu0 0.0
      %370 = vmatprep.subr.mxu0 0.0
      %371 = vmatpush1.msra.mxu0 0.0
      %372 = vmatprep.subr.mxu0 0.0
      %373 = vmatpush1.msra.mxu0 0.0
      %374 = vmatprep.subr.mxu0 0.0
      %375 = vmatpush1.msra.mxu0 0.0
      %376 = vmatprep.subr.mxu0 0.0
      %377 = vmatpush1.msra.mxu0 0.0
      %378 = vmatprep.subr.mxu0 0.0
      %379 = vmatpush1.msra.mxu0 0.0
      %380 = vmatprep.subr.mxu0 0.0
      %381 = vmatpush1.msra.mxu0 0.0
      %382 = vmatprep.subr.mxu0 0.0
      %383 = vmatpush1.msra.mxu0 0.0
      %384 = vmatprep.subr.mxu0 0.0
      %385 = vmatpush1.msra.mxu0 0.0
      %386 = vmatprep.subr.mxu0 0.0
      %387 = vmatpush1.msra.mxu0 0.0
      %388 = vmatprep.subr.mxu0 0.0
      %389 = vmatpush1.msra.mxu0 0.0
      %390 = vmatprep.subr.mxu0 0.0
      %391 = vmatpush1.msra.mxu0 0.0
      %392 = vmatprep.subr.mxu0 0.0
      %393 = vmatpush1.msra.mxu0 0.0
      %394 = vmatprep.subr.mxu0 0.0
      %395 = vmatpush1.msra.mxu0 0.0
      %396 = vmatprep.subr.mxu0 0.0
      %397 = vmatpush1.msra.mxu0 0.0
      %398 = vmatprep.subr.mxu0 0.0
      %399 = vmatpush1.msra.mxu0 0.0
      %400 = vmatprep.subr.mxu0 0.0
      %401 = vmatpush1.msra.mxu0 0.0
      %402 = vmatprep.subr.mxu0 0.0
      %403 = vmatpush1.msra.mxu0 0.0
      %404 = vmatprep.subr.mxu0 0.0
      %405 = vmatpush1.msra.mxu0 0.0
      %406 = vmatprep.subr.mxu0 0.0
      %407 = vmatpush1.msra.mxu0 0.0
      %408 = vmatprep.subr.mxu0 0.0
      %409 = vmatpush1.msra.mxu0 0.0
      %410 = vmatprep.subr.mxu0 0.0
      %411 = vmatpush1.msra.mxu0 0.0
      %412 = vmatprep.mubr.f32.mxu0 0.0
      %413 = vmatmul.mubr.f32.gmra.mrb[0].mxu0 %v346
      %v414 = vpop.f32.mrb[0].mxu0
      %v415 = vadd.f32 %v343, %v414
      %v416 = vpop.f32.mrb[0].mxu0
      %417 = vdwg.mxu0
      %418 = vst.msk [vmem:[%s286] sm:$0xff] %vm298, %v415
      %420 = vrot.lane.b32.xlu0 %v415, 96
      %v421 = vpop.permute.xlu0 %420
      %423 = vst.msk [vmem:[%s290] sm:$0xff] %vm298, %v421
      %424 = vrot.lane.b32.xlu0 %v415, 64
      %v425 = vpop.permute.xlu0 %424
      %427 = vst.msk [vmem:[%s294] sm:$0xff] %vm298, %v425
      %p428 = scmp.lt.s32.totalorder %s19, 1
      %s429 = scalar_select %p428, %s19, 1
      %s430 = smul.addr %s429, 8
      %s431 = scalar_lea.vmem %s5, %s430
      %p432 = scmp.lt.s32.totalorder %s19, 1
      %s433 = scalar_select %p432, %s19, 1
      %s434 = smul.addr %s433, 8
      %s435 = scalar_lea.vmem %s6, %s434
      %p436 = scmp.lt.s32.totalorder %s19, 1
      %s437 = scalar_select %p436, %s19, 1
      %s438 = smul.addr %s437, 8
      %s439 = scalar_lea.vmem %s7, %s438
      // Predicated region
      $region41: #{encoder_forward.7} parent=39 // pred_check
        %p440 = pneg %p147
      $region42: #{encoder_forward.7} parent=39 // pred_check_branch
        %442 = sbr.rel (%p440) target = $region44
      $region43: #{encoder_forward.7} parent=39 // pred_region
        _
      $region44: #{encoder_forward.7} parent=39 // pred_fallthru
        _
      // Predicated region
      $region45: #{encoder_forward.7} parent=39 // pred_check
        %p443 = pneg %p173
      $region46: #{encoder_forward.7} parent=39 // pred_check_branch
        %445 = sbr.rel (%p443) target = $region48
      $region47: #{encoder_forward.7} parent=39 // pred_region
        _
      $region48: #{encoder_forward.7} parent=39 // pred_fallthru
        _
      // Predicated region
      $region49: #{encoder_forward.7} parent=39 // pred_check
        %p446 = pneg %p199
      $region50: #{encoder_forward.7} parent=39 // pred_check_branch
        %448 = sbr.rel (%p446) target = $region52
      $region51: #{encoder_forward.7} parent=39 // pred_region
        _
      $region52: #{encoder_forward.7} parent=39 // pred_fallthru
        _
    $region40: #{encoder_forward.7} parent=5 // pred_fallthru
      _
    %p449 = scmp.le.s32.totalorder 2, %s14
    // Predicated region
    $region53: #{encoder_forward.7} parent=5 // pred_check
      %p450 = pneg %p449
    $region54: #{encoder_forward.7} parent=5 // pred_check_branch
      %452 = sbr.rel (%p450) target = $region56
    $region55: #{encoder_forward.7} parent=5 // pred_region
      %s453 = ssub.s32 %s14, 2
      // Predicated region
      $region57: #{encoder_forward.7} parent=55 // pred_check
        %p454 = pneg %p153
      $region58: #{encoder_forward.7} parent=55 // pred_check_branch
        %456 = sbr.rel (%p454) target = $region60
      $region59: #{encoder_forward.7} parent=55 // pred_region
        %p457 = scmp.lt.s32.totalorder %s20, 1
        %s458 = scalar_select %p457, %s20, 1
        %s459 = smul.addr %s458, 8
        %s460 = scalar_lea.vmem %s5, %s459
      $region60: #{encoder_forward.7} parent=55 // pred_fallthru
        _
      // Predicated region
      $region61: #{encoder_forward.7} parent=55 // pred_check
        %p461 = pneg %p179
      $region62: #{encoder_forward.7} parent=55 // pred_check_branch
        %463 = sbr.rel (%p461) target = $region64
      $region63: #{encoder_forward.7} parent=55 // pred_region
        %p464 = scmp.lt.s32.totalorder %s20, 1
        %s465 = scalar_select %p464, %s20, 1
        %s466 = smul.addr %s465, 8
        %s467 = scalar_lea.vmem %s6, %s466
      $region64: #{encoder_forward.7} parent=55 // pred_fallthru
        _
      // Predicated region
      $region65: #{encoder_forward.7} parent=55 // pred_check
        %p468 = pneg %p205
      $region66: #{encoder_forward.7} parent=55 // pred_check_branch
        %470 = sbr.rel (%p468) target = $region68
      $region67: #{encoder_forward.7} parent=55 // pred_region
        %p471 = scmp.lt.s32.totalorder %s20, 1
        %s472 = scalar_select %p471, %s20, 1
        %s473 = smul.addr %s472, 8
        %s474 = scalar_lea.vmem %s7, %s473
      $region68: #{encoder_forward.7} parent=55 // pred_fallthru
        _
    $region56: #{encoder_forward.7} parent=5 // pred_fallthru
      _
  $region6: #{encoder_forward.7} parent=0 // loop_footer
    %s18 = sadd.s32 1, %s14
  $region7: #{encoder_forward.7} parent=0 // loop_footer_branch
    %13 = sbr.rel target = $region3
  $region8: #{encoder_forward.7} parent=0 // loop_exit
    _

// kernel: encoder_forward.8
$region0: #{encoder_forward.8}
  #allocation0 [shape = 'u32[]', space=smem, size = 0x4, offset = 0x4, fixed_abs, tag = 'smem constant byte address 0x4 - core index']
  #allocation1 [shape = 'u32[144,128]{1,0:T(1,128)}', space=vmem, size = 0x12000, scoped, tag = 'internal scratch']
  %s0 = inlined_call_operand.vmem [shape: f32[2,8,32], index: 0, kind: input, shape index: {}]
  %s1 = inlined_call_operand.vmem [shape: f32[2,8,32], index: 1, kind: input, shape index: {}]
  %s2 = inlined_call_operand.vmem [shape: f32[2,8,32], index: 2, kind: input, shape index: {}]
  %s3 = inlined_call_operand.vmem [shape: f32[2,1,8], index: 3, kind: input, shape index: {}]
  %s4 = inlined_call_operand.vmem [shape: f32[32,32], index: 4, kind: input, shape index: {}]
  %s5 = inlined_call_operand.vmem [shape: f32[1,32], index: 5, kind: input, shape index: {}]
  %s6 = inlined_call_operand.vmem [shape: f32[2,8,32], index: 6, kind: input, shape index: {}]
  %s7 = inlined_call_operand.vmem [shape: f32[2,8,32], index: 7, kind: output, shape index: {}]
  %s8 = sld [smem:[#allocation0]]
  $region61: #{encoder_forward.8} parent=0
    _
  %s10 = ssub.s32 1, %s8
  %s11 = scalar_select 0, %s10, %s8
  loop: start=0, step=1, limit=4
  $region2: #{encoder_forward.8} parent=0 // loop_pre_header
    _
  $region3: #{encoder_forward.8} parent=0 // loop_header
    %s13 = sphi 0, %s17
    %p14 = scmp.ge.s32.totalorder %s13, 4
    %s20 = sphi 0, %s32
    %s21 = sphi 0, %s28
    %s22 = sphi 0, %s20
    %s23 = sphi 0, %s21
    %s24 = sphi 0, %s22
    %s25 = sphi 0, %s23
    %s37 = sphi 0, %s39
    %s40 = sphi 0, %s37
    %s41 = sphi 0, %s40
    %s57 = sphi 0, %s41
    %s63 = sphi 0, %s65
    %s66 = sphi 0, %s63
    %s67 = sphi 0, %s66
    %s83 = sphi 0, %s67
    %s89 = sphi 0, %s91
    %s92 = sphi 0, %s89
    %s93 = sphi 0, %s92
    %s109 = sphi 0, %s93
    %s115 = sphi 0, %s117
    %s118 = sphi 0, %s115
    %s119 = sphi 0, %s118
    %s135 = sphi 0, %s119
    %s139 = sphi 0, %s139
    %s141 = sphi 0, %s139
    %s142 = sphi 0, %s141
    %s156 = sphi 0, %s142
    %s160 = sphi 0, %s160
    %s162 = sphi 0, %s160
    %s163 = sphi 0, %s162
    %s177 = sphi 0, %s163
    %s185 = sphi 0, %s187
    %s188 = sphi 0, %s185
    %s189 = sphi 0, %s188
    %s205 = sphi 0, %s189
    %s213 = sphi 0, %s215
    %s216 = sphi 0, %s213
    %s217 = sphi 0, %s216
    %s233 = sphi 0, %s217
  $region4: #{encoder_forward.8} parent=0 // loop_header_branch
    %16 = sbr.rel (%p14) target = $region8
  $region5: #{encoder_forward.8} parent=0 // loop_body
    %s18 = ssub.s32 %s13, 1
    %s19 = ssub.s32 %s13, 2
    %s26 = sadd.s32 1, %s21
    %p27 = scmp.ge.s32.totalorder %s26, 1
    %s28 = scalar_select %p27, 0, %s26
    %s29 = sadd.s32 1, %s20
    %s30 = scalar_select %p27, %s29, %s20
    %p31 = scmp.ge.s32.totalorder %s30, 2
    %s32 = scalar_select %p31, 0, %s30
    %s33 = ssub.s32 %s20, %s32
    %s34 = ssub.s32 %s21, %s28
    %s35 = sor.u32 %s33, %s34
    %p36 = scmp.eq.s32.totalorder %s35, 0
    %s38 = sadd.s32 %s37, 1
    %s39 = scalar_select %p36, %s37, %s38
    %p42 = pneg %p36
    %p43 = scmp.eq.s32.totalorder %s13, 1
    %p44 = por %p42, %p43
    %p45 = scmp.ne.s32.totalorder %s37, %s40
    %p46 = scmp.eq.s32.totalorder %s13, 0
    %p47 = por %p45, %p46
    %p48 = scmp.ne.s32.totalorder %s37, %s40
    %p49 = scmp.eq.s32.totalorder %s18, 1
    %p50 = por %p48, %p49
    %p51 = scmp.ne.s32.totalorder %s40, %s41
    %p52 = scmp.eq.s32.totalorder %s18, 0
    %p53 = por %p51, %p52
    %p54 = scmp.ne.s32.totalorder %s40, %s41
    %p55 = scmp.eq.s32.totalorder %s19, 1
    %p56 = por %p54, %p55
    %p58 = scmp.ne.s32.totalorder %s41, %s57
    %p59 = scmp.eq.s32.totalorder %s19, 0
    %p60 = por %p58, %p59
    %s61 = ssub.s32 %s20, %s32
    %p62 = scmp.eq.s32.totalorder %s61, 0
    %s64 = sadd.s32 %s63, 1
    %s65 = scalar_select %p62, %s63, %s64
    %p68 = pneg %p62
    %p69 = scmp.eq.s32.totalorder %s13, 1
    %p70 = por %p68, %p69
    %p71 = scmp.ne.s32.totalorder %s63, %s66
    %p72 = scmp.eq.s32.totalorder %s13, 0
    %p73 = por %p71, %p72
    %p74 = scmp.ne.s32.totalorder %s63, %s66
    %p75 = scmp.eq.s32.totalorder %s18, 1
    %p76 = por %p74, %p75
    %p77 = scmp.ne.s32.totalorder %s66, %s67
    %p78 = scmp.eq.s32.totalorder %s18, 0
    %p79 = por %p77, %p78
    %p80 = scmp.ne.s32.totalorder %s66, %s67
    %p81 = scmp.eq.s32.totalorder %s19, 1
    %p82 = por %p80, %p81
    %p84 = scmp.ne.s32.totalorder %s67, %s83
    %p85 = scmp.eq.s32.totalorder %s19, 0
    %p86 = por %p84, %p85
    %s87 = ssub.s32 %s20, %s32
    %p88 = scmp.eq.s32.totalorder %s87, 0
    %s90 = sadd.s32 %s89, 1
    %s91 = scalar_select %p88, %s89, %s90
    %p94 = pneg %p88
    %p95 = scmp.eq.s32.totalorder %s13, 1
    %p96 = por %p94, %p95
    %p97 = scmp.ne.s32.totalorder %s89, %s92
    %p98 = scmp.eq.s32.totalorder %s13, 0
    %p99 = por %p97, %p98
    %p100 = scmp.ne.s32.totalorder %s89, %s92
    %p101 = scmp.eq.s32.totalorder %s18, 1
    %p102 = por %p100, %p101
    %p103 = scmp.ne.s32.totalorder %s92, %s93
    %p104 = scmp.eq.s32.totalorder %s18, 0
    %p105 = por %p103, %p104
    %p106 = scmp.ne.s32.totalorder %s92, %s93
    %p107 = scmp.eq.s32.totalorder %s19, 1
    %p108 = por %p106, %p107
    %p110 = scmp.ne.s32.totalorder %s93, %s109
    %p111 = scmp.eq.s32.totalorder %s19, 0
    %p112 = por %p110, %p111
    %s113 = ssub.s32 %s20, %s32
    %p114 = scmp.eq.s32.totalorder %s113, 0
    %s116 = sadd.s32 %s115, 1
    %s117 = scalar_select %p114, %s115, %s116
    %p120 = pneg %p114
    %p121 = scmp.eq.s32.totalorder %s13, 1
    %p122 = por %p120, %p121
    %p123 = scmp.ne.s32.totalorder %s115, %s118
    %p124 = scmp.eq.s32.totalorder %s13, 0
    %p125 = por %p123, %p124
    %p126 = scmp.ne.s32.totalorder %s115, %s118
    %p127 = scmp.eq.s32.totalorder %s18, 1
    %p128 = por %p126, %p127
    %p129 = scmp.ne.s32.totalorder %s118, %s119
    %p130 = scmp.eq.s32.totalorder %s18, 0
    %p131 = por %p129, %p130
    %p132 = scmp.ne.s32.totalorder %s118, %s119
    %p133 = scmp.eq.s32.totalorder %s19, 1
    %p134 = por %p132, %p133
    %p136 = scmp.ne.s32.totalorder %s119, %s135
    %p137 = scmp.eq.s32.totalorder %s19, 0
    %p138 = por %p136, %p137
    %s140 = sadd.s32 %s139, 1
    %p143 = scmp.eq.s32.totalorder %s13, 1
    %p144 = scmp.ne.s32.totalorder %s139, %s141
    %p145 = scmp.eq.s32.totalorder %s13, 0
    %p146 = por %p144, %p145
    %p147 = scmp.ne.s32.totalorder %s139, %s141
    %p148 = scmp.eq.s32.totalorder %s18, 1
    %p149 = por %p147, %p148
    %p150 = scmp.ne.s32.totalorder %s141, %s142
    %p151 = scmp.eq.s32.totalorder %s18, 0
    %p152 = por %p150, %p151
    %p153 = scmp.ne.s32.totalorder %s141, %s142
    %p154 = scmp.eq.s32.totalorder %s19, 1
    %p155 = por %p153, %p154
    %p157 = scmp.ne.s32.totalorder %s142, %s156
    %p158 = scmp.eq.s32.totalorder %s19, 0
    %p159 = por %p157, %p158
    %s161 = sadd.s32 %s160, 1
    %p164 = scmp.eq.s32.totalorder %s13, 1
    %p165 = scmp.ne.s32.totalorder %s160, %s162
    %p166 = scmp.eq.s32.totalorder %s13, 0
    %p167 = por %p165, %p166
    %p168 = scmp.ne.s32.totalorder %s160, %s162
    %p169 = scmp.eq.s32.totalorder %s18, 1
    %p170 = por %p168, %p169
    %p171 = scmp.ne.s32.totalorder %s162, %s163
    %p172 = scmp.eq.s32.totalorder %s18, 0
    %p173 = por %p171, %p172
    %p174 = scmp.ne.s32.totalorder %s162, %s163
    %p175 = scmp.eq.s32.totalorder %s19, 1
    %p176 = por %p174, %p175
    %p178 = scmp.ne.s32.totalorder %s163, %s177
    %p179 = scmp.eq.s32.totalorder %s19, 0
    %p180 = por %p178, %p179
    %s181 = ssub.s32 %s20, %s32
    %s182 = ssub.s32 %s21, %s28
    %s183 = sor.u32 %s181, %s182
    %p184 = scmp.eq.s32.totalorder %s183, 0
    %s186 = sadd.s32 %s185, 1
    %s187 = scalar_select %p184, %s185, %s186
    %p190 = pneg %p184
    %p191 = scmp.eq.s32.totalorder %s13, 1
    %p192 = por %p190, %p191
    %p193 = scmp.ne.s32.totalorder %s185, %s188
    %p194 = scmp.eq.s32.totalorder %s13, 0
    %p195 = por %p193, %p194
    %p196 = scmp.ne.s32.totalorder %s185, %s188
    %p197 = scmp.eq.s32.totalorder %s18, 1
    %p198 = por %p196, %p197
    %p199 = scmp.ne.s32.totalorder %s188, %s189
    %p200 = scmp.eq.s32.totalorder %s18, 0
    %p201 = por %p199, %p200
    %p202 = scmp.ne.s32.totalorder %s188, %s189
    %p203 = scmp.eq.s32.totalorder %s19, 1
    %p204 = por %p202, %p203
    %p206 = scmp.ne.s32.totalorder %s189, %s205
    %p207 = scmp.eq.s32.totalorder %s19, 0
    %p208 = por %p206, %p207
    %s209 = ssub.s32 %s20, %s32
    %s210 = ssub.s32 %s21, %s28
    %s211 = sor.u32 %s209, %s210
    %p212 = scmp.eq.s32.totalorder %s211, 0
    %s214 = sadd.s32 %s213, 1
    %s215 = scalar_select %p212, %s213, %s214
    %p218 = pneg %p212
    %p219 = scmp.eq.s32.totalorder %s13, 1
    %p220 = por %p218, %p219
    %p221 = scmp.ne.s32.totalorder %s213, %s216
    %p222 = scmp.eq.s32.totalorder %s13, 0
    %p223 = por %p221, %p222
    %p224 = scmp.ne.s32.totalorder %s213, %s216
    %p225 = scmp.eq.s32.totalorder %s18, 1
    %p226 = por %p224, %p225
    %p227 = scmp.ne.s32.totalorder %s216, %s217
    %p228 = scmp.eq.s32.totalorder %s18, 0
    %p229 = por %p227, %p228
    %p230 = scmp.ne.s32.totalorder %s216, %s217
    %p231 = scmp.eq.s32.totalorder %s19, 1
    %p232 = por %p230, %p231
    %p234 = scmp.ne.s32.totalorder %s217, %s233
    %p235 = scmp.eq.s32.totalorder %s19, 0
    %p236 = por %p234, %p235
    %p237 = scmp.le.s32.totalorder 1, %s13
    %p238 = scmp.lt.s32.totalorder %s13, 3
    %p239 = pnand %p237, %p238
    %p240 = pneg %p239
    // Predicated region
    $region9: #{encoder_forward.8} parent=5 // pred_check
      _
    $region10: #{encoder_forward.8} parent=5 // pred_check_branch
      %242 = sbr.rel (%p239) target = $region12
    $region11: #{encoder_forward.8} parent=5 // pred_region
      %s243 = ssub.s32 %s13, 1
      // Predicated region
      $region13: #{encoder_forward.8} parent=11 // pred_check
        %p244 = pneg %p152
      $region14: #{encoder_forward.8} parent=11 // pred_check_branch
        %246 = sbr.rel (%p244) target = $region16
      $region15: #{encoder_forward.8} parent=11 // pred_region
        _
      $region16: #{encoder_forward.8} parent=11 // pred_fallthru
        _
      // Predicated region
      $region17: #{encoder_forward.8} parent=11 // pred_check
        %p247 = pneg %p173
      $region18: #{encoder_forward.8} parent=11 // pred_check_branch
        %249 = sbr.rel (%p247) target = $region20
      $region19: #{encoder_forward.8} parent=11 // pred_region
        _
      $region20: #{encoder_forward.8} parent=11 // pred_fallthru
        _
    $region12: #{encoder_forward.8} parent=5 // pred_fallthru
      _
    %p250 = scmp.lt.s32.totalorder %s13, 2
    // Predicated region
    $region21: #{encoder_forward.8} parent=5 // pred_check
      %p251 = pneg %p250
    $region22: #{encoder_forward.8} parent=5 // pred_check_branch
      %253 = sbr.rel (%p251) target = $region24
    $region23: #{encoder_forward.8} parent=5 // pred_region
      // Predicated region
      $region25: #{encoder_forward.8} parent=23 // pred_check
        %p254 = pneg %p47
      $region26: #{encoder_forward.8} parent=23 // pred_check_branch
        %256 = sbr.rel (%p254) target = $region28
      $region27: #{encoder_forward.8} parent=23 // pred_region
        %p257 = scmp.lt.s32.totalorder %s20, 1
        %s258 = scalar_select %p257, %s20, 1
        %p259 = scmp.lt.s32.totalorder %s21, 0
        %s260 = scalar_select %p259, %s21, 0
        %s261 = sadd.s32 %s260, %s258
        %s262 = smul.addr %s261, 8
        %s263 = scalar_lea.vmem %s0, %s262
      $region28: #{encoder_forward.8} parent=23 // pred_fallthru
        _
      // Predicated region
      $region29: #{encoder_forward.8} parent=23 // pred_check
        %p264 = pneg %p73
      $region30: #{encoder_forward.8} parent=23 // pred_check_branch
        %266 = sbr.rel (%p264) target = $region32
      $region31: #{encoder_forward.8} parent=23 // pred_region
        %p267 = scmp.lt.s32.totalorder %s20, 1
        %s268 = scalar_select %p267, %s20, 1
        %s269 = smul.addr %s268, 8
        %s270 = scalar_lea.vmem %s1, %s269
      $region32: #{encoder_forward.8} parent=23 // pred_fallthru
        _
      // Predicated region
      $region33: #{encoder_forward.8} parent=23 // pred_check
        %p271 = pneg %p99
      $region34: #{encoder_forward.8} parent=23 // pred_check_branch
        %273 = sbr.rel (%p271) target = $region36
      $region35: #{encoder_forward.8} parent=23 // pred_region
        %p274 = scmp.lt.s32.totalorder %s20, 1
        %s275 = scalar_select %p274, %s20, 1
        %s276 = smul.addr %s275, 8
        %s277 = scalar_lea.vmem %s2, %s276
      $region36: #{encoder_forward.8} parent=23 // pred_fallthru
        _
      // Predicated region
      $region37: #{encoder_forward.8} parent=23 // pred_check
        %p278 = pneg %p125
      $region38: #{encoder_forward.8} parent=23 // pred_check_branch
        %280 = sbr.rel (%p278) target = $region40
      $region39: #{encoder_forward.8} parent=23 // pred_region
        %p281 = scmp.lt.s32.totalorder %s20, 1
        %s282 = scalar_select %p281, %s20, 1
        %s283 = scalar_lea.vmem %s3, %s282
      $region40: #{encoder_forward.8} parent=23 // pred_fallthru
        _
      // Predicated region
      $region41: #{encoder_forward.8} parent=23 // pred_check
        %p284 = pneg %p195
      $region42: #{encoder_forward.8} parent=23 // pred_check_branch
        %286 = sbr.rel (%p284) target = $region44
      $region43: #{encoder_forward.8} parent=23 // pred_region
        %p287 = scmp.lt.s32.totalorder %s20, 1
        %s288 = scalar_select %p287, %s20, 1
        %p289 = scmp.lt.s32.totalorder %s21, 0
        %s290 = scalar_select %p289, %s21, 0
        %s291 = sadd.s32 %s290, %s288
        %s292 = smul.addr %s291, 8
        %s293 = scalar_lea.vmem %s6, %s292
      $region44: #{encoder_forward.8} parent=23 // pred_fallthru
        _
    $region24: #{encoder_forward.8} parent=5 // pred_fallthru
      _
    %p294 = scmp.le.s32.totalorder 1, %s13
    %p295 = scmp.lt.s32.totalorder %s13, 3
    %p296 = pnand %p294, %p295
    %p297 = pneg %p296
    // Predicated region
    $region45: #{encoder_forward.8} parent=5 // pred_check
      _
    $region46: #{encoder_forward.8} parent=5 // pred_check_branch
      %299 = sbr.rel (%p296) target = $region48
    $region47: #{encoder_forward.8} parent=5 // pred_region
      %s300 = ssub.s32 %s13, 1
      %p301 = scmp.lt.s32.totalorder %s22, 1
      %s302 = scalar_select %p301, %s22, 1
      %p303 = scmp.lt.s32.totalorder %s23, 0
      %s304 = scalar_select %p303, %s23, 0
      %s305 = sadd.s32 %s304, %s302
      %s306 = smul.addr %s305, 8
      %s307 = scalar_lea.vmem %s0, %s306
      %p308 = pneg %p53
      %p309 = pneg %p50
      %p310 = scmp.lt.s32.totalorder %s22, 1
      %s311 = scalar_select %p310, %s22, 1
      %s312 = smul.addr %s311, 8
      %s313 = scalar_lea.vmem %s1, %s312
      %p314 = pneg %p79
      %p315 = pneg %p76
      %p316 = scmp.lt.s32.totalorder %s22, 1
      %s317 = scalar_select %p316, %s22, 1
      %s318 = smul.addr %s317, 8
      %s319 = scalar_lea.vmem %s2, %s318
      %p320 = pneg %p105
      %p321 = pneg %p102
      %p322 = scmp.lt.s32.totalorder %s22, 1
      %s323 = scalar_select %p322, %s22, 1
      %s324 = scalar_lea.vmem %s3, %s323
      %p325 = pneg %p131
      %p326 = pneg %p128
      %p327 = pneg %p152
      %p328 = pneg %p149
      %p329 = pneg %p173
      %p330 = pneg %p170
      %p331 = scmp.lt.s32.totalorder %s22, 1
      %s332 = scalar_select %p331, %s22, 1
      %p333 = scmp.lt.s32.totalorder %s23, 0
      %s334 = scalar_select %p333, %s23, 0
      %s335 = sadd.s32 %s334, %s332
      %s336 = smul.addr %s335, 8
      %s337 = scalar_lea.vmem %s6, %s336
      %p338 = pneg %p201
      %p339 = pneg %p198
      %p340 = pneg %p229
      %p341 = pneg %p226
      %p342 = scmp.lt.s32.totalorder %s22, 1
      %s343 = scalar_select %p342, %s22, 1
      %p344 = scmp.lt.s32.totalorder %s23, 0
      %s345 = scalar_select %p344, %s23, 0
      %s346 = sadd.s32 %s345, %s343
      %s347 = smul.addr %s346, 8
      %s348 = scalar_lea.vmem %s7, %s347
      %p349 = scmp.lt.s32.totalorder %s22, 1
      %s350 = scalar_select %p349, %s22, 1
      %p351 = scmp.lt.s32.totalorder %s23, 0
      %s352 = scalar_select %p351, %s23, 0
      %s353 = sadd.s32 %s352, %s350
      %s354 = smul.addr %s353, 8
      %s355 = scalar_lea.vmem %s0, %s354
      %p356 = scmp.lt.s32.totalorder %s22, 1
      %s357 = scalar_select %p356, %s22, 1
      %s358 = smul.addr %s357, 8
      %s359 = scalar_lea.vmem %s1, %s358
      %p360 = scmp.lt.s32.totalorder %s22, 1
      %s361 = scalar_select %p360, %s22, 1
      %s362 = smul.addr %s361, 8
      %s363 = scalar_lea.vmem %s2, %s362
      %p364 = scmp.lt.s32.totalorder %s22, 1
      %s365 = scalar_select %p364, %s22, 1
      %s366 = scalar_lea.vmem %s3, %s365
      %p367 = scmp.lt.s32.totalorder %s22, 1
      %s368 = scalar_select %p367, %s22, 1
      %p369 = scmp.lt.s32.totalorder %s23, 0
      %s370 = scalar_select %p369, %s23, 0
      %s371 = sadd.s32 %s370, %s368
      %s372 = smul.addr %s371, 8
      %s373 = scalar_lea.vmem %s6, %s372
      %p374 = scmp.lt.s32.totalorder %s22, 1
      %s375 = scalar_select %p374, %s22, 1
      %p376 = scmp.lt.s32.totalorder %s23, 0
      %s377 = scalar_select %p376, %s23, 0
      %s378 = sadd.s32 %s377, %s375
      %s379 = smul.addr %s378, 8
      %s380 = scalar_lea.vmem %s7, %s379
      %v381 = vld [vmem:[%s355] sm:$0xff]
      %v382 = vld [vmem:[%s359] sm:$0xff]
      %v383 = vld [vmem:[%s363] sm:$0xff]
      %v384 = vld [vmem:[%s366] sm:$0x1]
      %vm385 = vcmask 64512
      %v387 = vsel %vm385, %v381, 0
      %v390 = vsel %vm385, %v382, 0
      %392 = vmatprep.subr.mxu0 0.0
      %393 = vmatpush1.xpose.msra.mxu0 %v390
      %394 = vmatprep.subr.mxu0 0.0
      %395 = vmatpush1.xpose.msra.mxu0 0.0
      %396 = vmatprep.subr.mxu0 0.0
      %397 = vmatpush1.xpose.msra.mxu0 0.0
      %398 = vmatprep.subr.mxu0 0.0
      %399 = vmatpush1.xpose.msra.mxu0 0.0
      %400 = vmatprep.subr.mxu0 0.0
      %401 = vmatpush1.xpose.msra.mxu0 0.0
      %402 = vmatprep.subr.mxu0 0.0
      %403 = vmatpush1.xpose.msra.mxu0 0.0
      %404 = vmatprep.subr.mxu0 0.0
      %405 = vmatpush1.xpose.msra.mxu0 0.0
      %406 = vmatprep.subr.mxu0 0.0
      %407 = vmatpush1.xpose.msra.mxu0 0.0
      %408 = vmatprep.subr.mxu0 0.0
      %409 = vmatpush1.xpose.msra.mxu0 0.0
      %410 = vmatprep.subr.mxu0 0.0
      %411 = vmatpush1.xpose.msra.mxu0 0.0
      %412 = vmatprep.subr.mxu0 0.0
      %413 = vmatpush1.xpose.msra.mxu0 0.0
      %414 = vmatprep.subr.mxu0 0.0
      %415 = vmatpush1.xpose.msra.mxu0 0.0
      %416 = vmatprep.subr.mxu0 0.0
      %417 = vmatpush1.xpose.msra.mxu0 0.0
      %418 = vmatprep.subr.mxu0 0.0
      %419 = vmatpush1.xpose.msra.mxu0 0.0
      %420 = vmatprep.subr.mxu0 0.0
      %421 = vmatpush1.xpose.msra.mxu0 0.0
      %422 = vmatprep.subr.mxu0 0.0
      %423 = vmatpush1.xpose.msra.mxu0 0.0
      %424 = vmatprep.subr.mxu0 0.0
      %425 = vmatpush1.xpose.msra.mxu0 0.0
      %426 = vmatprep.subr.mxu0 0.0
      %427 = vmatpush1.xpose.msra.mxu0 0.0
      %428 = vmatprep.subr.mxu0 0.0
      %429 = vmatpush1.xpose.msra.mxu0 0.0
      %430 = vmatprep.subr.mxu0 0.0
      %431 = vmatpush1.xpose.msra.mxu0 0.0
      %432 = vmatprep.subr.mxu0 0.0
      %433 = vmatpush1.xpose.msra.mxu0 0.0
      %434 = vmatprep.subr.mxu0 0.0
      %435 = vmatpush1.xpose.msra.mxu0 0.0
      %436 = vmatprep.subr.mxu0 0.0
      %437 = vmatpush1.xpose.msra.mxu0 0.0
      %438 = vmatprep.subr.mxu0 0.0
      %439 = vmatpush1.xpose.msra.mxu0 0.0
      %440 = vmatprep.subr.mxu0 0.0
      %441 = vmatpush1.xpose.msra.mxu0 0.0
      %442 = vmatprep.subr.mxu0 0.0
      %443 = vmatpush1.xpose.msra.mxu0 0.0
      %444 = vmatprep.subr.mxu0 0.0
      %445 = vmatpush1.xpose.msra.mxu0 0.0
      %446 = vmatprep.subr.mxu0 0.0
      %447 = vmatpush1.xpose.msra.mxu0 0.0
      %448 = vmatprep.subr.mxu0 0.0
      %449 = vmatpush1.xpose.msra.mxu0 0.0
      %450 = vmatprep.subr.mxu0 0.0
      %451 = vmatpush1.xpose.msra.mxu0 0.0
      %452 = vmatprep.subr.mxu0 0.0
      %453 = vmatpush1.xpose.msra.mxu0 0.0
      %454 = vmatprep.subr.mxu0 0.0
      %455 = vmatpush1.xpose.msra.mxu0 0.0
      %456 = vmatprep.mubr.f32.mxu0 0.0
      %457 = vmatmul.mubr.f32.gmra.mrb[0].mxu0 %v387
      %v458 = vpop.f32.mrb[0].mxu0
      %v459 = vadd.f32 0.0, %v458
      %v460 = vpop.f32.mrb[0].mxu0
      %461 = vdwg.mxu0
      %v462 = vmul.f32 %v459, 0.35355338
      %v464 = vlaneseq
      %v465 = vshrl.u32 %v464, 7
      %v466 = vsub.s32 0, %v465
      %v467 = vrot.slane %v384, %v466
      %v469 = vadd.f32 %v462, %v467
      %v470 = vsel %vm385, %v469, -inf
      %471 = vmax.xlane.f32.xlu0 %v470
      %v472 = vpop.xlane.xlu0 %471
      %v473 = vsub.f32 %v469, %v472
      %v474 = vmul.f32 %v473, 1.442695
      %v475 = vpow.pop %v474
      %v476 = vsel %vm385, %v475, 0.0
      %477 = vadd.xlane.f32.xlu0 %v476
      %v478 = vpop.xlane.xlu0 %477
      %v479 = vrcp.pop %v478
      %v480 = vmul.f32 %v475, %v479
      %v482 = vsel %vm385, %v480, 0
      %484 = vmatprep.subr.mxu0 0.0
      %485 = vmatpush1.msra.mxu0 %v383
      %486 = vmatprep.subr.mxu0 0.0
      %487 = vmatpush1.msra.mxu0 0.0
      %488 = vmatprep.subr.mxu0 0.0
      %489 = vmatpush1.msra.mxu0 0.0
      %490 = vmatprep.subr.mxu0 0.0
      %491 = vmatpush1.msra.mxu0 0.0
      %492 = vmatprep.subr.mxu0 0.0
      %493 = vmatpush1.msra.mxu0 0.0
      %494 = vmatprep.subr.mxu0 0.0
      %495 = vmatpush1.msra.mxu0 0.0
      %496 = vmatprep.subr.mxu0 0.0
      %497 = vmatpush1.msra.mxu0 0.0
      %498 = vmatprep.subr.mxu0 0.0
      %499 = vmatpush1.msra.mxu0 0.0
      %500 = vmatprep.subr.mxu0 0.0
      %501 = vmatpush1.msra.mxu0 0.0
      %502 = vmatprep.subr.mxu0 0.0
      %503 = vmatpush1.msra.mxu0 0.0
      %504 = vmatprep.subr.mxu0 0.0
      %505 = vmatpush1.msra.mxu0 0.0
      %506 = vmatprep.subr.mxu0 0.0
      %507 = vmatpush1.msra.mxu0 0.0
      %508 = vmatprep.subr.mxu0 0.0
      %509 = vmatpush1.msra.mxu0 0.0
      %510 = vmatprep.subr.mxu0 0.0
      %511 = vmatpush1.msra.mxu0 0.0
      %512 = vmatprep.subr.mxu0 0.0
      %513 = vmatpush1.msra.mxu0 0.0
      %514 = vmatprep.subr.mxu0 0.0
      %515 = vmatpush1.msra.mxu0 0.0
      %516 = vmatprep.subr.mxu0 0.0
      %517 = vmatpush1.msra.mxu0 0.0
      %518 = vmatprep.subr.mxu0 0.0
      %519 = vmatpush1.msra.mxu0 0.0
      %520 = vmatprep.subr.mxu0 0.0
      %521 = vmatpush1.msra.mxu0 0.0
      %522 = vmatprep.subr.mxu0 0.0
      %523 = vmatpush1.msra.mxu0 0.0
      %524 = vmatprep.subr.mxu0 0.0
      %525 = vmatpush1.msra.mxu0 0.0
      %526 = vmatprep.subr.mxu0 0.0
      %527 = vmatpush1.msra.mxu0 0.0
      %528 = vmatprep.subr.mxu0 0.0
      %529 = vmatpush1.msra.mxu0 0.0
      %530 = vmatprep.subr.mxu0 0.0
      %531 = vmatpush1.msra.mxu0 0.0
      %532 = vmatprep.subr.mxu0 0.0
      %533 = vmatpush1.msra.mxu0 0.0
      %534 = vmatprep.subr.mxu0 0.0
      %535 = vmatpush1.msra.mxu0 0.0
      %536 = vmatprep.subr.mxu0 0.0
      %537 = vmatpush1.msra.mxu0 0.0
      %538 = vmatprep.subr.mxu0 0.0
      %539 = vmatpush1.msra.mxu0 0.0
      %540 = vmatprep.subr.mxu0 0.0
      %541 = vmatpush1.msra.mxu0 0.0
      %542 = vmatprep.subr.mxu0 0.0
      %543 = vmatpush1.msra.mxu0 0.0
      %544 = vmatprep.subr.mxu0 0.0
      %545 = vmatpush1.msra.mxu0 0.0
      %546 = vmatprep.subr.mxu0 0.0
      %547 = vmatpush1.msra.mxu0 0.0
      %548 = vmatprep.mubr.f32.mxu0 0.0
      %549 = vmatmul.mubr.f32.gmra.mrb[0].mxu0 %v482
      %v550 = vpop.f32.mrb[0].mxu0
      %v551 = vadd.f32 0.0, %v550
      %v552 = vpop.f32.mrb[0].mxu0
      %553 = vdwg.mxu0
      %554 = vrot.lane.b32.xlu0 %v381, 120
      %v555 = vpop.permute.xlu0 %554
      %556 = vrot.lane.b32.xlu0 %v382, 120
      %v557 = vpop.permute.xlu0 %556
      %v558 = vsel %vm385, %v555, 0
      %v560 = vsel %vm385, %v557, 0
      %562 = vmatprep.subr.mxu0 0.0
      %563 = vmatpush1.xpose.msra.mxu0 %v560
      %564 = vmatprep.subr.mxu0 0.0
      %565 = vmatpush1.xpose.msra.mxu0 0.0
      %566 = vmatprep.subr.mxu0 0.0
      %567 = vmatpush1.xpose.msra.mxu0 0.0
      %568 = vmatprep.subr.mxu0 0.0
      %569 = vmatpush1.xpose.msra.mxu0 0.0
      %570 = vmatprep.subr.mxu0 0.0
      %571 = vmatpush1.xpose.msra.mxu0 0.0
      %572 = vmatprep.subr.mxu0 0.0
      %573 = vmatpush1.xpose.msra.mxu0 0.0
      %574 = vmatprep.subr.mxu0 0.0
      %575 = vmatpush1.xpose.msra.mxu0 0.0
      %576 = vmatprep.subr.mxu0 0.0
      %577 = vmatpush1.xpose.msra.mxu0 0.0
      %578 = vmatprep.subr.mxu0 0.0
      %579 = vmatpush1.xpose.msra.mxu0 0.0
      %580 = vmatprep.subr.mxu0 0.0
      %581 = vmatpush1.xpose.msra.mxu0 0.0
      %582 = vmatprep.subr.mxu0 0.0
      %583 = vmatpush1.xpose.msra.mxu0 0.0
      %584 = vmatprep.subr.mxu0 0.0
      %585 = vmatpush1.xpose.msra.mxu0 0.0
      %586 = vmatprep.subr.mxu0 0.0
      %587 = vmatpush1.xpose.msra.mxu0 0.0
      %588 = vmatprep.subr.mxu0 0.0
      %589 = vmatpush1.xpose.msra.mxu0 0.0
      %590 = vmatprep.subr.mxu0 0.0
      %591 = vmatpush1.xpose.msra.mxu0 0.0
      %592 = vmatprep.subr.mxu0 0.0
      %593 = vmatpush1.xpose.msra.mxu0 0.0
      %594 = vmatprep.subr.mxu0 0.0
      %595 = vmatpush1.xpose.msra.mxu0 0.0
      %596 = vmatprep.subr.mxu0 0.0
      %597 = vmatpush1.xpose.msra.mxu0 0.0
      %598 = vmatprep.subr.mxu0 0.0
      %599 = vmatpush1.xpose.msra.mxu0 0.0
      %600 = vmatprep.subr.mxu0 0.0
      %601 = vmatpush1.xpose.msra.mxu0 0.0
      %602 = vmatprep.subr.mxu0 0.0
      %603 = vmatpush1.xpose.msra.mxu0 0.0
      %604 = vmatprep.subr.mxu0 0.0
      %605 = vmatpush1.xpose.msra.mxu0 0.0
      %606 = vmatprep.subr.mxu0 0.0
      %607 = vmatpush1.xpose.msra.mxu0 0.0
      %608 = vmatprep.subr.mxu0 0.0
      %609 = vmatpush1.xpose.msra.mxu0 0.0
      %610 = vmatprep.subr.mxu0 0.0
      %611 = vmatpush1.xpose.msra.mxu0 0.0
      %612 = vmatprep.subr.mxu0 0.0
      %613 = vmatpush1.xpose.msra.mxu0 0.0
      %614 = vmatprep.subr.mxu0 0.0
      %615 = vmatpush1.xpose.msra.mxu0 0.0
      %616 = vmatprep.subr.mxu0 0.0
      %617 = vmatpush1.xpose.msra.mxu0 0.0
      %618 = vmatprep.subr.mxu0 0.0
      %619 = vmatpush1.xpose.msra.mxu0 0.0
      %620 = vmatprep.subr.mxu0 0.0
      %621 = vmatpush1.xpose.msra.mxu0 0.0
      %622 = vmatprep.subr.mxu0 0.0
      %623 = vmatpush1.xpose.msra.mxu0 0.0
      %624 = vmatprep.subr.mxu0 0.0
      %625 = vmatpush1.xpose.msra.mxu0 0.0
      %626 = vmatprep.mubr.f32.mxu0 0.0
      %627 = vmatmul.mubr.f32.gmra.mrb[0].mxu0 %v558
      %v628 = vpop.f32.mrb[0].mxu0
      %v629 = vadd.f32 0.0, %v628
      %v630 = vpop.f32.mrb[0].mxu0
      %631 = vdwg.mxu0
      %v632 = vmul.f32 %v629, 0.35355338
      %v633 = vadd.f32 %v632, %v467
      %v634 = vsel %vm385, %v633, -inf
      %635 = vmax.xlane.f32.xlu0 %v634
      %v636 = vpop.xlane.xlu0 %635
      %v637 = vsub.f32 %v633, %v636
      %v638 = vmul.f32 %v637, 1.442695
      %v639 = vpow.pop %v638
      %v640 = vsel %vm385, %v639, 0.0
      %641 = vadd.xlane.f32.xlu0 %v640
      %v642 = vpop.xlane.xlu0 %641
      %v643 = vrcp.pop %v642
      %v644 = vmul.f32 %v639, %v643
      %646 = vrot.lane.b32.xlu0 %v383, 120
      %v647 = vpop.permute.xlu0 %646
      %v650 = vsel %vm385, %v644, 0
      %652 = vmatprep.subr.mxu0 0.0
      %653 = vmatpush1.msra.mxu0 %v647
      %654 = vmatprep.subr.mxu0 0.0
      %655 = vmatpush1.msra.mxu0 0.0
      %656 = vmatprep.subr.mxu0 0.0
      %657 = vmatpush1.msra.mxu0 0.0
      %658 = vmatprep.subr.mxu0 0.0
      %659 = vmatpush1.msra.mxu0 0.0
      %660 = vmatprep.subr.mxu0 0.0
      %661 = vmatpush1.msra.mxu0 0.0
      %662 = vmatprep.subr.mxu0 0.0
      %663 = vmatpush1.msra.mxu0 0.0
      %664 = vmatprep.subr.mxu0 0.0
      %665 = vmatpush1.msra.mxu0 0.0
      %666 = vmatprep.subr.mxu0 0.0
      %667 = vmatpush1.msra.mxu0 0.0
      %668 = vmatprep.subr.mxu0 0.0
      %669 = vmatpush1.msra.mxu0 0.0
      %670 = vmatprep.subr.mxu0 0.0
      %671 = vmatpush1.msra.mxu0 0.0
      %672 = vmatprep.subr.mxu0 0.0
      %673 = vmatpush1.msra.mxu0 0.0
      %674 = vmatprep.subr.mxu0 0.0
      %675 = vmatpush1.msra.mxu0 0.0
      %676 = vmatprep.subr.mxu0 0.0
      %677 = vmatpush1.msra.mxu0 0.0
      %678 = vmatprep.subr.mxu0 0.0
      %679 = vmatpush1.msra.mxu0 0.0
      %680 = vmatprep.subr.mxu0 0.0
      %681 = vmatpush1.msra.mxu0 0.0
      %682 = vmatprep.subr.mxu0 0.0
      %683 = vmatpush1.msra.mxu0 0.0
      %684 = vmatprep.subr.mxu0 0.0
      %685 = vmatpush1.msra.mxu0 0.0
      %686 = vmatprep.subr.mxu0 0.0
      %687 = vmatpush1.msra.mxu0 0.0
      %688 = vmatprep.subr.mxu0 0.0
      %689 = vmatpush1.msra.mxu0 0.0
      %690 = vmatprep.subr.mxu0 0.0
      %691 = vmatpush1.msra.mxu0 0.0
      %692 = vmatprep.subr.mxu0 0.0
      %693 = vmatpush1.msra.mxu0 0.0
      %694 = vmatprep.subr.mxu0 0.0
      %695 = vmatpush1.msra.mxu0 0.0
      %696 = vmatprep.subr.mxu0 0.0
      %697 = vmatpush1.msra.mxu0 0.0
      %698 = vmatprep.subr.mxu0 0.0
      %699 = vmatpush1.msra.mxu0 0.0
      %700 = vmatprep.subr.mxu0 0.0
      %701 = vmatpush1.msra.mxu0 0.0
      %702 = vmatprep.subr.mxu0 0.0
      %703 = vmatpush1.msra.mxu0 0.0
      %704 = vmatprep.subr.mxu0 0.0
      %705 = vmatpush1.msra.mxu0 0.0
      %706 = vmatprep.subr.mxu0 0.0
      %707 = vmatpush1.msra.mxu0 0.0
      %708 = vmatprep.subr.mxu0 0.0
      %709 = vmatpush1.msra.mxu0 0.0
      %710 = vmatprep.subr.mxu0 0.0
      %711 = vmatpush1.msra.mxu0 0.0
      %712 = vmatprep.subr.mxu0 0.0
      %713 = vmatpush1.msra.mxu0 0.0
      %714 = vmatprep.subr.mxu0 0.0
      %715 = vmatpush1.msra.mxu0 0.0
      %716 = vmatprep.mubr.f32.mxu0 0.0
      %717 = vmatmul.mubr.f32.gmra.mrb[0].mxu0 %v650
      %v718 = vpop.f32.mrb[0].mxu0
      %v719 = vadd.f32 0.0, %v718
      %v720 = vpop.f32.mrb[0].mxu0
      %721 = vdwg.mxu0
      %722 = vrot.lane.b32.xlu0 %v381, 112
      %v723 = vpop.permute.xlu0 %722
      %724 = vrot.lane.b32.xlu0 %v382, 112
      %v725 = vpop.permute.xlu0 %724
      %v726 = vsel %vm385, %v723, 0
      %v728 = vsel %vm385, %v725, 0
      %730 = vmatprep.subr.mxu0 0.0
      %731 = vmatpush1.xpose.msra.mxu0 %v728
      %732 = vmatprep.subr.mxu0 0.0
      %733 = vmatpush1.xpose.msra.mxu0 0.0
      %734 = vmatprep.subr.mxu0 0.0
      %735 = vmatpush1.xpose.msra.mxu0 0.0
      %736 = vmatprep.subr.mxu0 0.0
      %737 = vmatpush1.xpose.msra.mxu0 0.0
      %738 = vmatprep.subr.mxu0 0.0
      %739 = vmatpush1.xpose.msra.mxu0 0.0
      %740 = vmatprep.subr.mxu0 0.0
      %741 = vmatpush1.xpose.msra.mxu0 0.0
      %742 = vmatprep.subr.mxu0 0.0
      %743 = vmatpush1.xpose.msra.mxu0 0.0
      %744 = vmatprep.subr.mxu0 0.0
      %745 = vmatpush1.xpose.msra.mxu0 0.0
      %746 = vmatprep.subr.mxu0 0.0
      %747 = vmatpush1.xpose.msra.mxu0 0.0
      %748 = vmatprep.subr.mxu0 0.0
      %749 = vmatpush1.xpose.msra.mxu0 0.0
      %750 = vmatprep.subr.mxu0 0.0
      %751 = vmatpush1.xpose.msra.mxu0 0.0
      %752 = vmatprep.subr.mxu0 0.0
      %753 = vmatpush1.xpose.msra.mxu0 0.0
      %754 = vmatprep.subr.mxu0 0.0
      %755 = vmatpush1.xpose.msra.mxu0 0.0
      %756 = vmatprep.subr.mxu0 0.0
      %757 = vmatpush1.xpose.msra.mxu0 0.0
      %758 = vmatprep.subr.mxu0 0.0
      %759 = vmatpush1.xpose.msra.mxu0 0.0
      %760 = vmatprep.subr.mxu0 0.0
      %761 = vmatpush1.xpose.msra.mxu0 0.0
      %762 = vmatprep.subr.mxu0 0.0
      %763 = vmatpush1.xpose.msra.mxu0 0.0
      %764 = vmatprep.subr.mxu0 0.0
      %765 = vmatpush1.xpose.msra.mxu0 0.0
      %766 = vmatprep.subr.mxu0 0.0
      %767 = vmatpush1.xpose.msra.mxu0 0.0
      %768 = vmatprep.subr.mxu0 0.0
      %769 = vmatpush1.xpose.msra.mxu0 0.0
      %770 = vmatprep.subr.mxu0 0.0
      %771 = vmatpush1.xpose.msra.mxu0 0.0
      %772 = vmatprep.subr.mxu0 0.0
      %773 = vmatpush1.xpose.msra.mxu0 0.0
      %774 = vmatprep.subr.mxu0 0.0
      %775 = vmatpush1.xpose.msra.mxu0 0.0
      %776 = vmatprep.subr.mxu0 0.0
      %777 = vmatpush1.xpose.msra.mxu0 0.0
      %778 = vmatprep.subr.mxu0 0.0
      %779 = vmatpush1.xpose.msra.mxu0 0.0
      %780 = vmatprep.subr.mxu0 0.0
      %781 = vmatpush1.xpose.msra.mxu0 0.0
      %782 = vmatprep.subr.mxu0 0.0
      %783 = vmatpush1.xpose.msra.mxu0 0.0
      %784 = vmatprep.subr.mxu0 0.0
      %785 = vmatpush1.xpose.msra.mxu0 0.0
      %786 = vmatprep.subr.mxu0 0.0
      %787 = vmatpush1.xpose.msra.mxu0 0.0
      %788 = vmatprep.subr.mxu0 0.0
      %789 = vmatpush1.xpose.msra.mxu0 0.0
      %790 = vmatprep.subr.mxu0 0.0
      %791 = vmatpush1.xpose.msra.mxu0 0.0
      %792 = vmatprep.subr.mxu0 0.0
      %793 = vmatpush1.xpose.msra.mxu0 0.0
      %794 = vmatprep.mubr.f32.mxu0 0.0
      %795 = vmatmul.mubr.f32.gmra.mrb[0].mxu0 %v726
      %v796 = vpop.f32.mrb[0].mxu0
      %v797 = vadd.f32 0.0, %v796
      %v798 = vpop.f32.mrb[0].mxu0
      %799 = vdwg.mxu0
      %v800 = vmul.f32 %v797, 0.35355338
      %v801 = vadd.f32 %v800, %v467
      %v802 = vsel %vm385, %v801, -inf
      %803 = vmax.xlane.f32.xlu0 %v802
      %v804 = vpop.xlane.xlu0 %803
      %v805 = vsub.f32 %v801, %v804
      %v806 = vmul.f32 %v805, 1.442695
      %v807 = vpow.pop %v806
      %v808 = vsel %vm385, %v807, 0.0
      %809 = vadd.xlane.f32.xlu0 %v808
      %v810 = vpop.xlane.xlu0 %809
      %v811 = vrcp.pop %v810
      %v812 = vmul.f32 %v807, %v811
      %813 = vrot.lane.b32.xlu0 %v383, 112
      %v814 = vpop.permute.xlu0 %813
      %v817 = vsel %vm385, %v812, 0
      %819 = vmatprep.subr.mxu0 0.0
      %820 = vmatpush1.msra.mxu0 %v814
      %821 = vmatprep.subr.mxu0 0.0
      %822 = vmatpush1.msra.mxu0 0.0
      %823 = vmatprep.subr.mxu0 0.0
      %824 = vmatpush1.msra.mxu0 0.0
      %825 = vmatprep.subr.mxu0 0.0
      %826 = vmatpush1.msra.mxu0 0.0
      %827 = vmatprep.subr.mxu0 0.0
      %828 = vmatpush1.msra.mxu0 0.0
      %829 = vmatprep.subr.mxu0 0.0
      %830 = vmatpush1.msra.mxu0 0.0
      %831 = vmatprep.subr.mxu0 0.0
      %832 = vmatpush1.msra.mxu0 0.0
      %833 = vmatprep.subr.mxu0 0.0
      %834 = vmatpush1.msra.mxu0 0.0
      %835 = vmatprep.subr.mxu0 0.0
      %836 = vmatpush1.msra.mxu0 0.0
      %837 = vmatprep.subr.mxu0 0.0
      %838 = vmatpush1.msra.mxu0 0.0
      %839 = vmatprep.subr.mxu0 0.0
      %840 = vmatpush1.msra.mxu0 0.0
      %841 = vmatprep.subr.mxu0 0.0
      %842 = vmatpush1.msra.mxu0 0.0
      %843 = vmatprep.subr.mxu0 0.0
      %844 = vmatpush1.msra.mxu0 0.0
      %845 = vmatprep.subr.mxu0 0.0
      %846 = vmatpush1.msra.mxu0 0.0
      %847 = vmatprep.subr.mxu0 0.0
      %848 = vmatpush1.msra.mxu0 0.0
      %849 = vmatprep.subr.mxu0 0.0
      %850 = vmatpush1.msra.mxu0 0.0
      %851 = vmatprep.subr.mxu0 0.0
      %852 = vmatpush1.msra.mxu0 0.0
      %853 = vmatprep.subr.mxu0 0.0
      %854 = vmatpush1.msra.mxu0 0.0
      %855 = vmatprep.subr.mxu0 0.0
      %856 = vmatpush1.msra.mxu0 0.0
      %857 = vmatprep.subr.mxu0 0.0
      %858 = vmatpush1.msra.mxu0 0.0
      %859 = vmatprep.subr.mxu0 0.0
      %860 = vmatpush1.msra.mxu0 0.0
      %861 = vmatprep.subr.mxu0 0.0
      %862 = vmatpush1.msra.mxu0 0.0
      %863 = vmatprep.subr.mxu0 0.0
      %864 = vmatpush1.msra.mxu0 0.0
      %865 = vmatprep.subr.mxu0 0.0
      %866 = vmatpush1.msra.mxu0 0.0
      %867 = vmatprep.subr.mxu0 0.0
      %868 = vmatpush1.msra.mxu0 0.0
      %869 = vmatprep.subr.mxu0 0.0
      %870 = vmatpush1.msra.mxu0 0.0
      %871 = vmatprep.subr.mxu0 0.0
      %872 = vmatpush1.msra.mxu0 0.0
      %873 = vmatprep.subr.mxu0 0.0
      %874 = vmatpush1.msra.mxu0 0.0
      %875 = vmatprep.subr.mxu0 0.0
      %876 = vmatpush1.msra.mxu0 0.0
      %877 = vmatprep.subr.mxu0 0.0
      %878 = vmatpush1.msra.mxu0 0.0
      %879 = vmatprep.subr.mxu0 0.0
      %880 = vmatpush1.msra.mxu0 0.0
      %881 = vmatprep.subr.mxu0 0.0
      %882 = vmatpush1.msra.mxu0 0.0
      %883 = vmatprep.mubr.f32.mxu0 0.0
      %884 = vmatmul.mubr.f32.gmra.mrb[0].mxu0 %v817
      %v885 = vpop.f32.mrb[0].mxu0
      %v886 = vadd.f32 0.0, %v885
      %v887 = vpop.f32.mrb[0].mxu0
      %888 = vdwg.mxu0
      %889 = vrot.lane.b32.xlu0 %v381, 104
      %v890 = vpop.permute.xlu0 %889
      %891 = vrot.lane.b32.xlu0 %v382, 104
      %v892 = vpop.permute.xlu0 %891
      %v893 = vsel %vm385, %v890, 0
      %v895 = vsel %vm385, %v892, 0
      %897 = vmatprep.subr.mxu0 0.0
      %898 = vmatpush1.xpose.msra.mxu0 %v895
      %899 = vmatprep.subr.mxu0 0.0
      %900 = vmatpush1.xpose.msra.mxu0 0.0
      %901 = vmatprep.subr.mxu0 0.0
      %902 = vmatpush1.xpose.msra.mxu0 0.0
      %903 = vmatprep.subr.mxu0 0.0
      %904 = vmatpush1.xpose.msra.mxu0 0.0
      %905 = vmatprep.subr.mxu0 0.0
      %906 = vmatpush1.xpose.msra.mxu0 0.0
      %907 = vmatprep.subr.mxu0 0.0
      %908 = vmatpush1.xpose.msra.mxu0 0.0
      %909 = vmatprep.subr.mxu0 0.0
      %910 = vmatpush1.xpose.msra.mxu0 0.0
      %911 = vmatprep.subr.mxu0 0.0
      %912 = vmatpush1.xpose.msra.mxu0 0.0
      %913 = vmatprep.subr.mxu0 0.0
      %914 = vmatpush1.xpose.msra.mxu0 0.0
      %915 = vmatprep.subr.mxu0 0.0
      %916 = vmatpush1.xpose.msra.mxu0 0.0
      %917 = vmatprep.subr.mxu0 0.0
      %918 = vmatpush1.xpose.msra.mxu0 0.0
      %919 = vmatprep.subr.mxu0 0.0
      %920 = vmatpush1.xpose.msra.mxu0 0.0
      %921 = vmatprep.subr.mxu0 0.0
      %922 = vmatpush1.xpose.msra.mxu0 0.0
      %923 = vmatprep.subr.mxu0 0.0
      %924 = vmatpush1.xpose.msra.mxu0 0.0
      %925 = vmatprep.subr.mxu0 0.0
      %926 = vmatpush1.xpose.msra.mxu0 0.0
      %927 = vmatprep.subr.mxu0 0.0
      %928 = vmatpush1.xpose.msra.mxu0 0.0
      %929 = vmatprep.subr.mxu0 0.0
      %930 = vmatpush1.xpose.msra.mxu0 0.0
      %931 = vmatprep.subr.mxu0 0.0
      %932 = vmatpush1.xpose.msra.mxu0 0.0
      %933 = vmatprep.subr.mxu0 0.0
      %934 = vmatpush1.xpose.msra.mxu0 0.0
      %935 = vmatprep.subr.mxu0 0.0
      %936 = vmatpush1.xpose.msra.mxu0 0.0
      %937 = vmatprep.subr.mxu0 0.0
      %938 = vmatpush1.xpose.msra.mxu0 0.0
      %939 = vmatprep.subr.mxu0 0.0
      %940 = vmatpush1.xpose.msra.mxu0 0.0
      %941 = vmatprep.subr.mxu0 0.0
      %942 = vmatpush1.xpose.msra.mxu0 0.0
      %943 = vmatprep.subr.mxu0 0.0
      %944 = vmatpush1.xpose.msra.mxu0 0.0
      %945 = vmatprep.subr.mxu0 0.0
      %946 = vmatpush1.xpose.msra.mxu0 0.0
      %947 = vmatprep.subr.mxu0 0.0
      %948 = vmatpush1.xpose.msra.mxu0 0.0
      %949 = vmatprep.subr.mxu0 0.0
      %950 = vmatpush1.xpose.msra.mxu0 0.0
      %951 = vmatprep.subr.mxu0 0.0
      %952 = vmatpush1.xpose.msra.mxu0 0.0
      %953 = vmatprep.subr.mxu0 0.0
      %954 = vmatpush1.xpose.msra.mxu0 0.0
      %955 = vmatprep.subr.mxu0 0.0
      %956 = vmatpush1.xpose.msra.mxu0 0.0
      %957 = vmatprep.subr.mxu0 0.0
      %958 = vmatpush1.xpose.msra.mxu0 0.0
      %959 = vmatprep.subr.mxu0 0.0
      %960 = vmatpush1.xpose.msra.mxu0 0.0
      %961 = vmatprep.mubr.f32.mxu0 0.0
      %962 = vmatmul.mubr.f32.gmra.mrb[0].mxu0 %v893
      %v963 = vpop.f32.mrb[0].mxu0
      %v964 = vadd.f32 0.0, %v963
      %v965 = vpop.f32.mrb[0].mxu0
      %966 = vdwg.mxu0
      %v967 = vmul.f32 %v964, 0.35355338
      %v968 = vadd.f32 %v967, %v467
      %v969 = vsel %vm385, %v968, -inf
      %970 = vmax.xlane.f32.xlu0 %v969
      %v971 = vpop.xlane.xlu0 %970
      %v972 = vsub.f32 %v968, %v971
      %v973 = vmul.f32 %v972, 1.442695
      %v974 = vpow.pop %v973
      %v975 = vsel %vm385, %v974, 0.0
      %976 = vadd.xlane.f32.xlu0 %v975
      %v977 = vpop.xlane.xlu0 %976
      %v978 = vrcp.pop %v977
      %v979 = vmul.f32 %v974, %v978
      %980 = vrot.lane.b32.xlu0 %v383, 104
      %v981 = vpop.permute.xlu0 %980
      %v984 = vsel %vm385, %v979, 0
      %986 = vmatprep.subr.mxu0 0.0
      %987 = vmatpush1.msra.mxu0 %v981
      %988 = vmatprep.subr.mxu0 0.0
      %989 = vmatpush1.msra.mxu0 0.0
      %990 = vmatprep.subr.mxu0 0.0
      %991 = vmatpush1.msra.mxu0 0.0
      %992 = vmatprep.subr.mxu0 0.0
      %993 = vmatpush1.msra.mxu0 0.0
      %994 = vmatprep.subr.mxu0 0.0
      %995 = vmatpush1.msra.mxu0 0.0
      %996 = vmatprep.subr.mxu0 0.0
      %997 = vmatpush1.msra.mxu0 0.0
      %998 = vmatprep.subr.mxu0 0.0
      %999 = vmatpush1.msra.mxu0 0.0
      %1000 = vmatprep.subr.mxu0 0.0
      %1001 = vmatpush1.msra.mxu0 0.0
      %1002 = vmatprep.subr.mxu0 0.0
      %1003 = vmatpush1.msra.mxu0 0.0
      %1004 = vmatprep.subr.mxu0 0.0
      %1005 = vmatpush1.msra.mxu0 0.0
      %1006 = vmatprep.subr.mxu0 0.0
      %1007 = vmatpush1.msra.mxu0 0.0
      %1008 = vmatprep.subr.mxu0 0.0
      %1009 = vmatpush1.msra.mxu0 0.0
      %1010 = vmatprep.subr.mxu0 0.0
      %1011 = vmatpush1.msra.mxu0 0.0
      %1012 = vmatprep.subr.mxu0 0.0
      %1013 = vmatpush1.msra.mxu0 0.0
      %1014 = vmatprep.subr.mxu0 0.0
      %1015 = vmatpush1.msra.mxu0 0.0
      %1016 = vmatprep.subr.mxu0 0.0
      %1017 = vmatpush1.msra.mxu0 0.0
      %1018 = vmatprep.subr.mxu0 0.0
      %1019 = vmatpush1.msra.mxu0 0.0
      %1020 = vmatprep.subr.mxu0 0.0
      %1021 = vmatpush1.msra.mxu0 0.0
      %1022 = vmatprep.subr.mxu0 0.0
      %1023 = vmatpush1.msra.mxu0 0.0
      %1024 = vmatprep.subr.mxu0 0.0
      %1025 = vmatpush1.msra.mxu0 0.0
      %1026 = vmatprep.subr.mxu0 0.0
      %1027 = vmatpush1.msra.mxu0 0.0
      %1028 = vmatprep.subr.mxu0 0.0
      %1029 = vmatpush1.msra.mxu0 0.0
      %1030 = vmatprep.subr.mxu0 0.0
      %1031 = vmatpush1.msra.mxu0 0.0
      %1032 = vmatprep.subr.mxu0 0.0
      %1033 = vmatpush1.msra.mxu0 0.0
      %1034 = vmatprep.subr.mxu0 0.0
      %1035 = vmatpush1.msra.mxu0 0.0
      %1036 = vmatprep.subr.mxu0 0.0
      %1037 = vmatpush1.msra.mxu0 0.0
      %1038 = vmatprep.subr.mxu0 0.0
      %1039 = vmatpush1.msra.mxu0 0.0
      %1040 = vmatprep.subr.mxu0 0.0
      %1041 = vmatpush1.msra.mxu0 0.0
      %1042 = vmatprep.subr.mxu0 0.0
      %1043 = vmatpush1.msra.mxu0 0.0
      %1044 = vmatprep.subr.mxu0 0.0
      %1045 = vmatpush1.msra.mxu0 0.0
      %1046 = vmatprep.subr.mxu0 0.0
      %1047 = vmatpush1.msra.mxu0 0.0
      %1048 = vmatprep.subr.mxu0 0.0
      %1049 = vmatpush1.msra.mxu0 0.0
      %1050 = vmatprep.mubr.f32.mxu0 0.0
      %1051 = vmatmul.mubr.f32.gmra.mrb[0].mxu0 %v984
      %v1052 = vpop.f32.mrb[0].mxu0
      %v1053 = vadd.f32 0.0, %v1052
      %v1054 = vpop.f32.mrb[0].mxu0
      %1055 = vdwg.mxu0
      %1057 = vrot.lane.b32.xlu0 %v719, 8
      %v1058 = vpop.permute.xlu0 %1057
      %1061 = vrot.lane.b32.xlu0 %v886, 16
      %v1062 = vpop.permute.xlu0 %1061
      %1065 = vrot.lane.b32.xlu0 %v1053, 24
      %v1066 = vpop.permute.xlu0 %1065
      %v1068 = vsel %vm385, %v551, %v1058
      %vm1069 = vcmask 130048
      %v1070 = vsel %vm1069, %v1068, %v1062
      %vm1071 = vcmask 195584
      %v1072 = vsel %vm1071, %v1070, %v1066
      %v1073 = vld [vmem:[%s4] sm:$0xff]
      %v1074 = vld [vmem:[%s4 + $0x8] sm:$0xff]
      %v1075 = vld [vmem:[%s4 + $0x10] sm:$0xff]
      %v1076 = vld [vmem:[%s4 + $0x18] sm:$0xff]
      %vm1077 = vcmask 261120
      %v1079 = vsel %vm1077, %v1072, 0
      %1081 = vmatprep.subr.mxu0 0.0
      %1082 = vmatpush1.msra.mxu0 %v1073
      %1083 = vmatprep.subr.mxu0 0.0
      %1084 = vmatpush1.msra.mxu0 %v1074
      %1085 = vmatprep.subr.mxu0 0.0
      %1086 = vmatpush1.msra.mxu0 %v1075
      %1087 = vmatprep.subr.mxu0 0.0
      %1088 = vmatpush1.msra.mxu0 %v1076
      %1089 = vmatprep.subr.mxu0 0.0
      %1090 = vmatpush1.msra.mxu0 0.0
      %1091 = vmatprep.subr.mxu0 0.0
      %1092 = vmatpush1.msra.mxu0 0.0
      %1093 = vmatprep.subr.mxu0 0.0
      %1094 = vmatpush1.msra.mxu0 0.0
      %1095 = vmatprep.subr.mxu0 0.0
      %1096 = vmatpush1.msra.mxu0 0.0
      %1097 = vmatprep.subr.mxu0 0.0
      %1098 = vmatpush1.msra.mxu0 0.0
      %1099 = vmatprep.subr.mxu0 0.0
      %1100 = vmatpush1.msra.mxu0 0.0
      %1101 = vmatprep.subr.mxu0 0.0
      %1102 = vmatpush1.msra.mxu0 0.0
      %1103 = vmatprep.subr.mxu0 0.0
      %1104 = vmatpush1.msra.mxu0 0.0
      %1105 = vmatprep.subr.mxu0 0.0
      %1106 = vmatpush1.msra.mxu0 0.0
      %1107 = vmatprep.subr.mxu0 0.0
      %1108 = vmatpush1.msra.mxu0 0.0
      %1109 = vmatprep.subr.mxu0 0.0
      %1110 = vmatpush1.msra.mxu0 0.0
      %1111 = vmatprep.subr.mxu0 0.0
      %1112 = vmatpush1.msra.mxu0 0.0
      %1113 = vmatprep.subr.mxu0 0.0
      %1114 = vmatpush1.msra.mxu0 0.0
      %1115 = vmatprep.subr.mxu0 0.0
      %1116 = vmatpush1.msra.mxu0 0.0
      %1117 = vmatprep.subr.mxu0 0.0
      %1118 = vmatpush1.msra.mxu0 0.0
      %1119 = vmatprep.subr.mxu0 0.0
      %1120 = vmatpush1.msra.mxu0 0.0
      %1121 = vmatprep.subr.mxu0 0.0
      %1122 = vmatpush1.msra.mxu0 0.0
      %1123 = vmatprep.subr.mxu0 0.0
      %1124 = vmatpush1.msra.mxu0 0.0
      %1125 = vmatprep.subr.mxu0 0.0
      %1126 = vmatpush1.msra.mxu0 0.0
      %1127 = vmatprep.subr.mxu0 0.0
      %1128 = vmatpush1.msra.mxu0 0.0
      %1129 = vmatprep.subr.mxu0 0.0
      %1130 = vmatpush1.msra.mxu0 0.0
      %1131 = vmatprep.subr.mxu0 0.0
      %1132 = vmatpush1.msra.mxu0 0.0
      %1133 = vmatprep.subr.mxu0 0.0
      %1134 = vmatpush1.msra.mxu0 0.0
      %1135 = vmatprep.subr.mxu0 0.0
      %1136 = vmatpush1.msra.mxu0 0.0
      %1137 = vmatprep.subr.mxu0 0.0
      %1138 = vmatpush1.msra.mxu0 0.0
      %1139 = vmatprep.subr.mxu0 0.0
      %1140 = vmatpush1.msra.mxu0 0.0
      %1141 = vmatprep.subr.mxu0 0.0
      %1142 = vmatpush1.msra.mxu0 0.0
      %1143 = vmatprep.subr.mxu0 0.0
      %1144 = vmatpush1.msra.mxu0 0.0
      %1145 = vmatprep.mubr.f32.mxu0 0.0
      %1146 = vmatmul.mubr.f32.gmra.mrb[0].mxu0 %v1079
      %v1147 = vpop.f32.mrb[0].mxu0
      %v1148 = vadd.f32 0.0, %v1147
      %v1149 = vpop.f32.mrb[0].mxu0
      %1150 = vdwg.mxu0
      %v1151 = vld [vmem:[%s373] sm:$0xff]
      %v1152 = vadd.f32 %v1151, %v1148
      %v1153 = vld [vmem:[%s5] sm:$0x1]
      %v1155 = vlaneseq
      %v1156 = vshrl.u32 %v1155, 7
      %v1157 = vsub.s32 0, %v1156
      %v1158 = vrot.slane %v1153, %v1157
      %v1160 = vadd.f32 %v1152, %v1158
      %1161 = vst.msk [vmem:[%s380] sm:$0xff] %vm1077, %v1160
      %p1162 = scmp.lt.s32.totalorder %s22, 1
      %s1163 = scalar_select %p1162, %s22, 1
      %p1164 = scmp.lt.s32.totalorder %s23, 0
      %s1165 = scalar_select %p1164, %s23, 0
      %s1166 = sadd.s32 %s1165, %s1163
      %s1167 = smul.addr %s1166, 8
      %s1168 = scalar_lea.vmem %s7, %s1167
      // Predicated region
      $region49: #{encoder_forward.8} parent=47 // pred_check
        %p1169 = pneg %p226
      $region50: #{encoder_forward.8} parent=47 // pred_check_branch
        %1171 = sbr.rel (%p1169) target = $region52
      $region51: #{encoder_forward.8} parent=47 // pred_region
        _
      $region52: #{encoder_forward.8} parent=47 // pred_fallthru
        _
    $region48: #{encoder_forward.8} parent=5 // pred_fallthru
      _
    %p1172 = scmp.le.s32.totalorder 2, %s13
    // Predicated region
    $region53: #{encoder_forward.8} parent=5 // pred_check
      %p1173 = pneg %p1172
    $region54: #{encoder_forward.8} parent=5 // pred_check_branch
      %1175 = sbr.rel (%p1173) target = $region56
    $region55: #{encoder_forward.8} parent=5 // pred_region
      %s1176 = ssub.s32 %s13, 2
      // Predicated region
      $region57: #{encoder_forward.8} parent=55 // pred_check
        %p1177 = pneg %p232
      $region58: #{encoder_forward.8} parent=55 // pred_check_branch
        %1179 = sbr.rel (%p1177) target = $region60
      $region59: #{encoder_forward.8} parent=55 // pred_region
        %p1180 = scmp.lt.s32.totalorder %s24, 1
        %s1181 = scalar_select %p1180, %s24, 1
        %p1182 = scmp.lt.s32.totalorder %s25, 0
        %s1183 = scalar_select %p1182, %s25, 0
        %s1184 = sadd.s32 %s1183, %s1181
        %s1185 = smul.addr %s1184, 8
        %s1186 = scalar_lea.vmem %s7, %s1185
      $region60: #{encoder_forward.8} parent=55 // pred_fallthru
        _
    $region56: #{encoder_forward.8} parent=5 // pred_fallthru
      _
  $region6: #{encoder_forward.8} parent=0 // loop_footer
    %s17 = sadd.s32 1, %s13
  $region7: #{encoder_forward.8} parent=0 // loop_footer_branch
    %12 = sbr.rel target = $region3
  $region8: #{encoder_forward.8} parent=0 // loop_exit
    _

// kernel: encoder_forward.13
$region0: #{encoder_forward.13}
  #allocation0 [shape = 'u32[]', space=smem, size = 0x4, offset = 0x4, fixed_abs, tag = 'smem constant byte address 0x4 - core index']
  #allocation1 [shape = 'u32[144,128]{1,0:T(1,128)}', space=vmem, size = 0x12000, scoped, tag = 'internal scratch']
  %s0 = inlined_call_operand.vmem [shape: f32[16,32], index: 0, kind: input, shape index: {}]
  %s1 = inlined_call_operand.vmem [shape: f32[1,32], index: 1, kind: input, shape index: {}]
  %s2 = inlined_call_operand.vmem [shape: f32[1,32], index: 2, kind: input, shape index: {}]
  %s3 = inlined_call_operand.hbm [shape: f32[16,32], index: 3, kind: output, shape index: {}]
  %s4 = sld [smem:[#allocation0]]
  $region45: #{encoder_forward.13} parent=0
    _
  %s6 = ssub.s32 1, %s4
  %s7 = scalar_select 0, %s6, %s4
  $region1: #{encoder_forward.13} parent=0
    #allocation2 [shape = 'u8[8192]{0}', space=vmem, size = 0x2000, scoped, tag = 'output window, operand 0']
    #allocation3 [shape = 's32[2]{0}', space=sflag, size = 0x8, scoped, tag = 'scoped memory for encoder_forward.13']
    %8 = vsyncpa [#allocation3], 0
    %s9 = scalar_lea.sflag [#allocation3], 1
    %10 = vsyncpa %s9, 0
    loop: start=0, step=1, limit=4
    $region2: #{encoder_forward.13} parent=1 // loop_pre_header
      _
    $region3: #{encoder_forward.13} parent=1 // loop_header
      %s12 = sphi 0, %s16
      %p13 = scmp.ge.s32.totalorder %s12, 4
      %s22 = sphi 0, %s24
      %s25 = sphi 0, %s22
      %s26 = sphi 0, %s25
      %s42 = sphi 0, %s26
      %s46 = sphi 0, %s46
      %s48 = sphi 0, %s46
      %s49 = sphi 0, %s48
      %s63 = sphi 0, %s49
      %s67 = sphi 0, %s67
      %s69 = sphi 0, %s67
      %s70 = sphi 0, %s69
      %s84 = sphi 0, %s70
      %s90 = sphi 0, %s92
      %s93 = sphi 0, %s90
      %s94 = sphi 0, %s93
      %s110 = sphi 0, %s94
    $region4: #{encoder_forward.13} parent=1 // loop_header_branch
      %15 = sbr.rel (%p13) target = $region8
    $region5: #{encoder_forward.13} parent=1 // loop_body
      %s17 = ssub.s32 %s12, 1
      %s18 = ssub.s32 %s12, 2
      %s19 = sadd.s32 %s12, 1
      %s20 = ssub.s32 %s12, %s19
      %p21 = scmp.eq.s32.totalorder %s20, 0
      %s23 = sadd.s32 %s22, 1
      %s24 = scalar_select %p21, %s22, %s23
      %p27 = pneg %p21
      %p28 = scmp.eq.s32.totalorder %s12, 1
      %p29 = por %p27, %p28
      %p30 = scmp.ne.s32.totalorder %s22, %s25
      %p31 = scmp.eq.s32.totalorder %s12, 0
      %p32 = por %p30, %p31
      %p33 = scmp.ne.s32.totalorder %s22, %s25
      %p34 = scmp.eq.s32.totalorder %s17, 1
      %p35 = por %p33, %p34
      %p36 = scmp.ne.s32.totalorder %s25, %s26
      %p37 = scmp.eq.s32.totalorder %s17, 0
      %p38 = por %p36, %p37
      %p39 = scmp.ne.s32.totalorder %s25, %s26
      %p40 = scmp.eq.s32.totalorder %s18, 1
      %p41 = por %p39, %p40
      %p43 = scmp.ne.s32.totalorder %s26, %s42
      %p44 = scmp.eq.s32.totalorder %s18, 0
      %p45 = por %p43, %p44
      %s47 = sadd.s32 %s46, 1
      %p50 = scmp.eq.s32.totalorder %s12, 1
      %p51 = scmp.ne.s32.totalorder %s46, %s48
      %p52 = scmp.eq.s32.totalorder %s12, 0
      %p53 = por %p51, %p52
      %p54 = scmp.ne.s32.totalorder %s46, %s48
      %p55 = scmp.eq.s32.totalorder %s17, 1
      %p56 = por %p54, %p55
      %p57 = scmp.ne.s32.totalorder %s48, %s49
      %p58 = scmp.eq.s32.totalorder %s17, 0
      %p59 = por %p57, %p58
      %p60 = scmp.ne.s32.totalorder %s48, %s49
      %p61 = scmp.eq.s32.totalorder %s18, 1
      %p62 = por %p60, %p61
      %p64 = scmp.ne.s32.totalorder %s49, %s63
      %p65 = scmp.eq.s32.totalorder %s18, 0
      %p66 = por %p64, %p65
      %s68 = sadd.s32 %s67, 1
      %p71 = scmp.eq.s32.totalorder %s12, 1
      %p72 = scmp.ne.s32.totalorder %s67, %s69
      %p73 = scmp.eq.s32.totalorder %s12, 0
      %p74 = por %p72, %p73
      %p75 = scmp.ne.s32.totalorder %s67, %s69
      %p76 = scmp.eq.s32.totalorder %s17, 1
      %p77 = por %p75, %p76
      %p78 = scmp.ne.s32.totalorder %s69, %s70
      %p79 = scmp.eq.s32.totalorder %s17, 0
      %p80 = por %p78, %p79
      %p81 = scmp.ne.s32.totalorder %s69, %s70
      %p82 = scmp.eq.s32.totalorder %s18, 1
      %p83 = por %p81, %p82
      %p85 = scmp.ne.s32.totalorder %s70, %s84
      %p86 = scmp.eq.s32.totalorder %s18, 0
      %p87 = por %p85, %p86
      %s88 = ssub.s32 %s12, %s19
      %p89 = scmp.eq.s32.totalorder %s88, 0
      %s91 = sadd.s32 %s90, 1
      %s92 = scalar_select %p89, %s90, %s91
      %p95 = pneg %p89
      %p96 = scmp.eq.s32.totalorder %s12, 1
      %p97 = por %p95, %p96
      %p98 = scmp.ne.s32.totalorder %s90, %s93
      %p99 = scmp.eq.s32.totalorder %s12, 0
      %p100 = por %p98, %p99
      %p101 = scmp.ne.s32.totalorder %s90, %s93
      %p102 = scmp.eq.s32.totalorder %s17, 1
      %p103 = por %p101, %p102
      %p104 = scmp.ne.s32.totalorder %s93, %s94
      %p105 = scmp.eq.s32.totalorder %s17, 0
      %p106 = por %p104, %p105
      %p107 = scmp.ne.s32.totalorder %s93, %s94
      %p108 = scmp.eq.s32.totalorder %s18, 1
      %p109 = por %p107, %p108
      %p111 = scmp.ne.s32.totalorder %s94, %s110
      %p112 = scmp.eq.s32.totalorder %s18, 0
      %p113 = por %p111, %p112
      %p114 = scmp.le.s32.totalorder 1, %s12
      %p115 = scmp.lt.s32.totalorder %s12, 3
      %p116 = pnand %p114, %p115
      %p117 = pneg %p116
      // Predicated region
      $region9: #{encoder_forward.13} parent=5 // pred_check
        _
      $region10: #{encoder_forward.13} parent=5 // pred_check_branch
        %119 = sbr.rel (%p116) target = $region12
      $region11: #{encoder_forward.13} parent=5 // pred_region
        %s120 = ssub.s32 %s12, 1
        // Predicated region
        $region13: #{encoder_forward.13} parent=11 // pred_check
          %p121 = pneg %p59
        $region14: #{encoder_forward.13} parent=11 // pred_check_branch
          %123 = sbr.rel (%p121) target = $region16
        $region15: #{encoder_forward.13} parent=11 // pred_region
          _
        $region16: #{encoder_forward.13} parent=11 // pred_fallthru
          _
        // Predicated region
        $region17: #{encoder_forward.13} parent=11 // pred_check
          %p124 = pneg %p80
        $region18: #{encoder_forward.13} parent=11 // pred_check_branch
          %126 = sbr.rel (%p124) target = $region20
        $region19: #{encoder_forward.13} parent=11 // pred_region
          _
        $region20: #{encoder_forward.13} parent=11 // pred_fallthru
          _
      $region12: #{encoder_forward.13} parent=5 // pred_fallthru
        _
      %p127 = scmp.lt.s32.totalorder %s12, 2
      // Predicated region
      $region21: #{encoder_forward.13} parent=5 // pred_check
        %p128 = pneg %p127
      $region22: #{encoder_forward.13} parent=5 // pred_check_branch
        %130 = sbr.rel (%p128) target = $region24
      $region23: #{encoder_forward.13} parent=5 // pred_region
        // Predicated region
        $region25: #{encoder_forward.13} parent=23 // pred_check
          %p131 = pneg %p32
        $region26: #{encoder_forward.13} parent=23 // pred_check_branch
          %133 = sbr.rel (%p131) target = $region28
        $region27: #{encoder_forward.13} parent=23 // pred_region
          %p134 = scmp.lt.s32.totalorder %s12, 1
          %s135 = scalar_select %p134, %s12, 1
          %s136 = smul.addr %s135, 8
          %s137 = scalar_lea.vmem %s0, %s136
        $region28: #{encoder_forward.13} parent=23 // pred_fallthru
          _
      $region24: #{encoder_forward.13} parent=5 // pred_fallthru
        _
      %p138 = scmp.le.s32.totalorder 1, %s12
      %p139 = scmp.lt.s32.totalorder %s12, 3
      %p140 = pnand %p138, %p139
      %p141 = pneg %p140
      // Predicated region
      $region29: #{encoder_forward.13} parent=5 // pred_check
        _
      $region30: #{encoder_forward.13} parent=5 // pred_check_branch
        %143 = sbr.rel (%p140) target = $region32
      $region31: #{encoder_forward.13} parent=5 // pred_region
        %s144 = ssub.s32 %s12, 1
        %p145 = scmp.lt.s32.totalorder %s17, 1
        %s146 = scalar_select %p145, %s17, 1
        %s147 = smul.addr %s146, 8
        %s148 = scalar_lea.vmem %s0, %s147
        %p149 = pneg %p38
        %p150 = pneg %p35
        %p151 = pneg %p59
        %p152 = pneg %p56
        %p153 = pneg %p80
        %p154 = pneg %p77
        %p155 = pneg %p106
        %p156 = pneg %p103
        %s157 = sand.u32 %s93, 1
        %s158 = scalar_lea.sflag [#allocation3], %s157
        %s159 = sand.u32 %s93, 1
        %s160 = smul.addr %s159, 8
        %s161 = scalar_lea.vmem [#allocation2], %s160
        %p162 = scmp.lt.s32.totalorder %s17, 1
        %s163 = scalar_select %p162, %s17, 1
        %s164 = smul.addr %s163, 8
        %s165 = scalar_lea.vmem %s0, %s164
        %v166 = vld [vmem:[%s165] sm:$0xff]
        %v167 = vld [vmem:[%s1] sm:$0x1]
        %v168 = vld [vmem:[%s2] sm:$0x1]
        %vm169 = vcmask 261120
        %v170 = vsel %vm169, %v166, 0.0
        %171 = vadd.xlane.f32.xlu0 %v170
        %v172 = vpop.xlane.xlu0 %171
        %v173 = vrcp.pop 32.0
        %v174 = vmul.f32 %v172, %v173
        %v175 = vsub.f32 %v166, %v174
        %v176 = vmul.f32 %v175, %v175
        %v177 = vsel %vm169, %v176, 0.0
        %178 = vadd.xlane.f32.xlu0 %v177
        %v179 = vpop.xlane.xlu0 %178
        %v180 = vmul.f32 %v179, 0.032258064
        %v181 = vrsqrt.pop %v180
        %v182 = vmul.f32 %v180, %v181
        %vm183 = vcmp.eq.f32.partialorder %v180, inf
        %v184 = vsel %vm183, %v180, %v182
        %vm185 = vcmp.eq.f32.partialorder %v180, 0.0
        %v186 = vand.u32 %v180, 2147483648
        %v187 = vsel %vm185, %v186, %v184
        %v188 = vadd.f32 %v187, 1e-06
        %v189 = vrcp.pop %v188
        %v190 = vmul.f32 %v175, %v189
        %v192 = vlaneseq
        %v193 = vshrl.u32 %v192, 7
        %v194 = vsub.s32 0, %v193
        %v195 = vrot.slane %v167, %v194
        %v197 = vmul.f32 %v195, %v190
        %v199 = vlaneseq
        %v200 = vshrl.u32 %v199, 7
        %v201 = vsub.s32 0, %v200
        %v202 = vrot.slane %v168, %v201
        %v204 = vadd.f32 %v197, %v202
        %205 = vst.msk [vmem:[%s161] sm:$0xff] %vm169, %v204
        %s206 = sand.u32 %s93, 1
        %s207 = scalar_lea.sflag [#allocation3], %s206
        %s208 = sand.u32 %s93, 1
        %s209 = smul.addr %s208, 8
        %s210 = scalar_lea.vmem [#allocation2], %s209
        // Predicated region
        $region33: #{encoder_forward.13} parent=31 // pred_check
          %p211 = pneg %p103
        $region34: #{encoder_forward.13} parent=31 // pred_check_branch
          %213 = sbr.rel (%p211) target = $region36
        $region35: #{encoder_forward.13} parent=31 // pred_region
          %s215 = ssub.s32 128, 128
          %216 = vsyncadd %s207, %s215
          %s217 = smul.addr %s17, 128
          %s218 = scalar_lea.hbm %s3, %s217
          %s220 = sshll.u32 %s210, 4
          %s221 = int_to_ptr.vmem [resolvable:$true] %s220
          %223 = dma.vmem_to_hbm [thread:$0]  %s221, 128, %s218, %s207
        $region36: #{encoder_forward.13} parent=31 // pred_fallthru
          _
      $region32: #{encoder_forward.13} parent=5 // pred_fallthru
        _
      %p224 = scmp.le.s32.totalorder 2, %s12
      // Predicated region
      $region37: #{encoder_forward.13} parent=5 // pred_check
        %p225 = pneg %p224
      $region38: #{encoder_forward.13} parent=5 // pred_check_branch
        %227 = sbr.rel (%p225) target = $region40
      $region39: #{encoder_forward.13} parent=5 // pred_region
        %s228 = ssub.s32 %s12, 2
        // Predicated region
        $region41: #{encoder_forward.13} parent=39 // pred_check
          %p229 = pneg %p109
        $region42: #{encoder_forward.13} parent=39 // pred_check_branch
          %231 = sbr.rel (%p229) target = $region44
        $region43: #{encoder_forward.13} parent=39 // pred_region
          %s232 = sand.u32 %s94, 1
          %s233 = scalar_lea.sflag [#allocation3], %s232
          %s234 = sand.u32 %s94, 1
          %s235 = smul.addr %s234, 8
          %s236 = scalar_lea.vmem [#allocation2], %s235
          %237 = dma.done %s233, 128
        $region44: #{encoder_forward.13} parent=39 // pred_fallthru
          _
      $region40: #{encoder_forward.13} parent=5 // pred_fallthru
        _
    $region6: #{encoder_forward.13} parent=1 // loop_footer
      %s16 = sadd.s32 1, %s12
    $region7: #{encoder_forward.13} parent=1 // loop_footer_branch
      %11 = sbr.rel target = $region3
    $region8: #{encoder_forward.13} parent=1 // loop_exit
      _
    %238 = vsyncpa [#allocation3], 1
    %s239 = scalar_lea.sflag [#allocation3], 1
    %240 = vsyncpa %s239, 1

// kernel: encoder_forward.9
$region0: #{encoder_forward.9}
  #allocation0 [shape = 'u32[]', space=smem, size = 0x4, offset = 0x4, fixed_abs, tag = 'smem constant byte address 0x4 - core index']
  #allocation1 [shape = 'u32[144,128]{1,0:T(1,128)}', space=vmem, size = 0x12000, scoped, tag = 'internal scratch']
  #allocation2 [shape = 'f32[8,32]{1,0:T(8,128)}', space=vmem, size = 0x1000, scoped, tag = 'scratch operand']
  #allocation3 [shape = 'f32[8,32]{1,0:T(8,128)}', space=vmem, size = 0x1000, scoped, tag = 'scratch operand']
  %s0 = inlined_call_operand.vmem [shape: f32[16,32], index: 0, kind: input, shape index: {}]
  %s1 = inlined_call_operand.vmem [shape: f32[1,32], index: 1, kind: input, shape index: {}]
  %s2 = inlined_call_operand.vmem [shape: f32[1,32], index: 2, kind: input, shape index: {}]
  %s3 = inlined_call_operand.vmem [shape: f32[32,64], index: 3, kind: input, shape index: {}]
  %s4 = inlined_call_operand.vmem [shape: f32[1,64], index: 4, kind: input, shape index: {}]
  %s5 = inlined_call_operand.vmem [shape: f32[64,32], index: 5, kind: input, shape index: {}]
  %s6 = inlined_call_operand.vmem [shape: f32[1,32], index: 6, kind: input, shape index: {}]
  %s7 = inlined_call_operand.vmem [shape: f32[16,32], index: 7, kind: output, shape index: {}]
  %s8 = sld [smem:[#allocation0]]
  $region69: #{encoder_forward.9} parent=0
    _
  %s10 = ssub.s32 1, %s8
  %s11 = scalar_select 0, %s10, %s8
  loop: start=0, step=1, limit=4
  $region2: #{encoder_forward.9} parent=0 // loop_pre_header
    _
  $region3: #{encoder_forward.9} parent=0 // loop_header
    %s13 = sphi 0, %s17
    %p14 = scmp.ge.s32.totalorder %s13, 4
    %s20 = sphi 0, %s32
    %s21 = sphi 0, %s28
    %s22 = sphi 0, %s20
    %s23 = sphi 0, %s21
    %s24 = sphi 0, %s22
    %s25 = sphi 0, %s23
    %s35 = sphi 0, %s37
    %s38 = sphi 0, %s35
    %s39 = sphi 0, %s38
    %s55 = sphi 0, %s39
    %s59 = sphi 0, %s59
    %s61 = sphi 0, %s59
    %s62 = sphi 0, %s61
    %s76 = sphi 0, %s62
    %s80 = sphi 0, %s80
    %s82 = sphi 0, %s80
    %s83 = sphi 0, %s82
    %s97 = sphi 0, %s83
    %s103 = sphi 0, %s105
    %s106 = sphi 0, %s103
    %s107 = sphi 0, %s106
    %s123 = sphi 0, %s107
    %s129 = sphi 0, %s131
    %s132 = sphi 0, %s129
    %s133 = sphi 0, %s132
    %s149 = sphi 0, %s133
    %s155 = sphi 0, %s157
    %s158 = sphi 0, %s155
    %s159 = sphi 0, %s158
    %s175 = sphi 0, %s159
    %s179 = sphi 0, %s179
    %s181 = sphi 0, %s179
    %s182 = sphi 0, %s181
    %s196 = sphi 0, %s182
    %s202 = sphi 0, %s204
    %s205 = sphi 0, %s202
    %s206 = sphi 0, %s205
    %s222 = sphi 0, %s206
  $region4: #{encoder_forward.9} parent=0 // loop_header_branch
    %16 = sbr.rel (%p14) target = $region8
  $region5: #{encoder_forward.9} parent=0 // loop_body
    %s18 = ssub.s32 %s13, 1
    %s19 = ssub.s32 %s13, 2
    %s26 = sadd.s32 1, %s21
    %p27 = scmp.ge.s32.totalorder %s26, 1
    %s28 = scalar_select %p27, 0, %s26
    %s29 = sadd.s32 1, %s20
    %s30 = scalar_select %p27, %s29, %s20
    %p31 = scmp.ge.s32.totalorder %s30, 2
    %s32 = scalar_select %p31, 0, %s30
    %s33 = ssub.s32 %s20, %s32
    %p34 = scmp.eq.s32.totalorder %s33, 0
    %s36 = sadd.s32 %s35, 1
    %s37 = scalar_select %p34, %s35, %s36
    %p40 = pneg %p34
    %p41 = scmp.eq.s32.totalorder %s13, 1
    %p42 = por %p40, %p41
    %p43 = scmp.ne.s32.totalorder %s35, %s38
    %p44 = scmp.eq.s32.totalorder %s13, 0
    %p45 = por %p43, %p44
    %p46 = scmp.ne.s32.totalorder %s35, %s38
    %p47 = scmp.eq.s32.totalorder %s18, 1
    %p48 = por %p46, %p47
    %p49 = scmp.ne.s32.totalorder %s38, %s39
    %p50 = scmp.eq.s32.totalorder %s18, 0
    %p51 = por %p49, %p50
    %p52 = scmp.ne.s32.totalorder %s38, %s39
    %p53 = scmp.eq.s32.totalorder %s19, 1
    %p54 = por %p52, %p53
    %p56 = scmp.ne.s32.totalorder %s39, %s55
    %p57 = scmp.eq.s32.totalorder %s19, 0
    %p58 = por %p56, %p57
    %s60 = sadd.s32 %s59, 1
    %p63 = scmp.eq.s32.totalorder %s13, 1
    %p64 = scmp.ne.s32.totalorder %s59, %s61
    %p65 = scmp.eq.s32.totalorder %s13, 0
    %p66 = por %p64, %p65
    %p67 = scmp.ne.s32.totalorder %s59, %s61
    %p68 = scmp.eq.s32.totalorder %s18, 1
    %p69 = por %p67, %p68
    %p70 = scmp.ne.s32.totalorder %s61, %s62
    %p71 = scmp.eq.s32.totalorder %s18, 0
    %p72 = por %p70, %p71
    %p73 = scmp.ne.s32.totalorder %s61, %s62
    %p74 = scmp.eq.s32.totalorder %s19, 1
    %p75 = por %p73, %p74
    %p77 = scmp.ne.s32.totalorder %s62, %s76
    %p78 = scmp.eq.s32.totalorder %s19, 0
    %p79 = por %p77, %p78
    %s81 = sadd.s32 %s80, 1
    %p84 = scmp.eq.s32.totalorder %s13, 1
    %p85 = scmp.ne.s32.totalorder %s80, %s82
    %p86 = scmp.eq.s32.totalorder %s13, 0
    %p87 = por %p85, %p86
    %p88 = scmp.ne.s32.totalorder %s80, %s82
    %p89 = scmp.eq.s32.totalorder %s18, 1
    %p90 = por %p88, %p89
    %p91 = scmp.ne.s32.totalorder %s82, %s83
    %p92 = scmp.eq.s32.totalorder %s18, 0
    %p93 = por %p91, %p92
    %p94 = scmp.ne.s32.totalorder %s82, %s83
    %p95 = scmp.eq.s32.totalorder %s19, 1
    %p96 = por %p94, %p95
    %p98 = scmp.ne.s32.totalorder %s83, %s97
    %p99 = scmp.eq.s32.totalorder %s19, 0
    %p100 = por %p98, %p99
    %s101 = ssub.s32 %s21, %s28
    %p102 = scmp.eq.s32.totalorder %s101, 0
    %s104 = sadd.s32 %s103, 1
    %s105 = scalar_select %p102, %s103, %s104
    %p108 = pneg %p102
    %p109 = scmp.eq.s32.totalorder %s13, 1
    %p110 = por %p108, %p109
    %p111 = scmp.ne.s32.totalorder %s103, %s106
    %p112 = scmp.eq.s32.totalorder %s13, 0
    %p113 = por %p111, %p112
    %p114 = scmp.ne.s32.totalorder %s103, %s106
    %p115 = scmp.eq.s32.totalorder %s18, 1
    %p116 = por %p114, %p115
    %p117 = scmp.ne.s32.totalorder %s106, %s107
    %p118 = scmp.eq.s32.totalorder %s18, 0
    %p119 = por %p117, %p118
    %p120 = scmp.ne.s32.totalorder %s106, %s107
    %p121 = scmp.eq.s32.totalorder %s19, 1
    %p122 = por %p120, %p121
    %p124 = scmp.ne.s32.totalorder %s107, %s123
    %p125 = scmp.eq.s32.totalorder %s19, 0
    %p126 = por %p124, %p125
    %s127 = ssub.s32 %s21, %s28
    %p128 = scmp.eq.s32.totalorder %s127, 0
    %s130 = sadd.s32 %s129, 1
    %s131 = scalar_select %p128, %s129, %s130
    %p134 = pneg %p128
    %p135 = scmp.eq.s32.totalorder %s13, 1
    %p136 = por %p134, %p135
    %p137 = scmp.ne.s32.totalorder %s129, %s132
    %p138 = scmp.eq.s32.totalorder %s13, 0
    %p139 = por %p137, %p138
    %p140 = scmp.ne.s32.totalorder %s129, %s132
    %p141 = scmp.eq.s32.totalorder %s18, 1
    %p142 = por %p140, %p141
    %p143 = scmp.ne.s32.totalorder %s132, %s133
    %p144 = scmp.eq.s32.totalorder %s18, 0
    %p145 = por %p143, %p144
    %p146 = scmp.ne.s32.totalorder %s132, %s133
    %p147 = scmp.eq.s32.totalorder %s19, 1
    %p148 = por %p146, %p147
    %p150 = scmp.ne.s32.totalorder %s133, %s149
    %p151 = scmp.eq.s32.totalorder %s19, 0
    %p152 = por %p150, %p151
    %s153 = ssub.s32 %s21, %s28
    %p154 = scmp.eq.s32.totalorder %s153, 0
    %s156 = sadd.s32 %s155, 1
    %s157 = scalar_select %p154, %s155, %s156
    %p160 = pneg %p154
    %p161 = scmp.eq.s32.totalorder %s13, 1
    %p162 = por %p160, %p161
    %p163 = scmp.ne.s32.totalorder %s155, %s158
    %p164 = scmp.eq.s32.totalorder %s13, 0
    %p165 = por %p163, %p164
    %p166 = scmp.ne.s32.totalorder %s155, %s158
    %p167 = scmp.eq.s32.totalorder %s18, 1
    %p168 = por %p166, %p167
    %p169 = scmp.ne.s32.totalorder %s158, %s159
    %p170 = scmp.eq.s32.totalorder %s18, 0
    %p171 = por %p169, %p170
    %p172 = scmp.ne.s32.totalorder %s158, %s159
    %p173 = scmp.eq.s32.totalorder %s19, 1
    %p174 = por %p172, %p173
    %p176 = scmp.ne.s32.totalorder %s159, %s175
    %p177 = scmp.eq.s32.totalorder %s19, 0
    %p178 = por %p176, %p177
    %s180 = sadd.s32 %s179, 1
    %p183 = scmp.eq.s32.totalorder %s13, 1
    %p184 = scmp.ne.s32.totalorder %s179, %s181
    %p185 = scmp.eq.s32.totalorder %s13, 0
    %p186 = por %p184, %p185
    %p187 = scmp.ne.s32.totalorder %s179, %s181
    %p188 = scmp.eq.s32.totalorder %s18, 1
    %p189 = por %p187, %p188
    %p190 = scmp.ne.s32.totalorder %s181, %s182
    %p191 = scmp.eq.s32.totalorder %s18, 0
    %p192 = por %p190, %p191
    %p193 = scmp.ne.s32.totalorder %s181, %s182
    %p194 = scmp.eq.s32.totalorder %s19, 1
    %p195 = por %p193, %p194
    %p197 = scmp.ne.s32.totalorder %s182, %s196
    %p198 = scmp.eq.s32.totalorder %s19, 0
    %p199 = por %p197, %p198
    %s200 = ssub.s32 %s20, %s32
    %p201 = scmp.eq.s32.totalorder %s200, 0
    %s203 = sadd.s32 %s202, 1
    %s204 = scalar_select %p201, %s202, %s203
    %p207 = pneg %p201
    %p208 = scmp.eq.s32.totalorder %s13, 1
    %p209 = por %p207, %p208
    %p210 = scmp.ne.s32.totalorder %s202, %s205
    %p211 = scmp.eq.s32.totalorder %s13, 0
    %p212 = por %p210, %p211
    %p213 = scmp.ne.s32.totalorder %s202, %s205
    %p214 = scmp.eq.s32.totalorder %s18, 1
    %p215 = por %p213, %p214
    %p216 = scmp.ne.s32.totalorder %s205, %s206
    %p217 = scmp.eq.s32.totalorder %s18, 0
    %p218 = por %p216, %p217
    %p219 = scmp.ne.s32.totalorder %s205, %s206
    %p220 = scmp.eq.s32.totalorder %s19, 1
    %p221 = por %p219, %p220
    %p223 = scmp.ne.s32.totalorder %s206, %s222
    %p224 = scmp.eq.s32.totalorder %s19, 0
    %p225 = por %p223, %p224
    %p226 = scmp.le.s32.totalorder 1, %s13
    %p227 = scmp.lt.s32.totalorder %s13, 3
    %p228 = pnand %p226, %p227
    %p229 = pneg %p228
    // Predicated region
    $region9: #{encoder_forward.9} parent=5 // pred_check
      _
    $region10: #{encoder_forward.9} parent=5 // pred_check_branch
      %231 = sbr.rel (%p228) target = $region12
    $region11: #{encoder_forward.9} parent=5 // pred_region
      %s232 = ssub.s32 %s13, 1
      // Predicated region
      $region13: #{encoder_forward.9} parent=11 // pred_check
        %p233 = pneg %p72
      $region14: #{encoder_forward.9} parent=11 // pred_check_branch
        %235 = sbr.rel (%p233) target = $region16
      $region15: #{encoder_forward.9} parent=11 // pred_region
        _
      $region16: #{encoder_forward.9} parent=11 // pred_fallthru
        _
      // Predicated region
      $region17: #{encoder_forward.9} parent=11 // pred_check
        %p236 = pneg %p93
      $region18: #{encoder_forward.9} parent=11 // pred_check_branch
        %238 = sbr.rel (%p236) target = $region20
      $region19: #{encoder_forward.9} parent=11 // pred_region
        _
      $region20: #{encoder_forward.9} parent=11 // pred_fallthru
        _
      // Predicated region
      $region21: #{encoder_forward.9} parent=11 // pred_check
        %p239 = pneg %p119
      $region22: #{encoder_forward.9} parent=11 // pred_check_branch
        %241 = sbr.rel (%p239) target = $region24
      $region23: #{encoder_forward.9} parent=11 // pred_region
        %p242 = scmp.lt.s32.totalorder %s23, 0
        %s243 = scalar_select %p242, %s23, 0
        %s244 = smul.addr %s243, 8
        %s245 = scalar_lea.vmem %s3, %s244
      $region24: #{encoder_forward.9} parent=11 // pred_fallthru
        _
      // Predicated region
      $region25: #{encoder_forward.9} parent=11 // pred_check
        %p246 = pneg %p145
      $region26: #{encoder_forward.9} parent=11 // pred_check_branch
        %248 = sbr.rel (%p246) target = $region28
      $region27: #{encoder_forward.9} parent=11 // pred_region
        %p249 = scmp.lt.s32.totalorder %s23, 0
        %s250 = scalar_select %p249, %s23, 0
        %s251 = scalar_lea.vmem %s4, %s250
      $region28: #{encoder_forward.9} parent=11 // pred_fallthru
        _
      // Predicated region
      $region29: #{encoder_forward.9} parent=11 // pred_check
        %p252 = pneg %p171
      $region30: #{encoder_forward.9} parent=11 // pred_check_branch
        %254 = sbr.rel (%p252) target = $region32
      $region31: #{encoder_forward.9} parent=11 // pred_region
        %s255 = smul.u32 8, %s23
        %p256 = scmp.lt.s32.totalorder %s255, 7
        %s257 = scalar_select %p256, %s255, 7
        %s258 = smul.addr %s257, 8
        %s259 = scalar_lea.vmem %s5, %s258
        %s260 = smul.u32 8, %s23
      $region32: #{encoder_forward.9} parent=11 // pred_fallthru
        _
      // Predicated region
      $region33: #{encoder_forward.9} parent=11 // pred_check
        %p261 = pneg %p192
      $region34: #{encoder_forward.9} parent=11 // pred_check_branch
        %263 = sbr.rel (%p261) target = $region36
      $region35: #{encoder_forward.9} parent=11 // pred_region
        _
      $region36: #{encoder_forward.9} parent=11 // pred_fallthru
        _
    $region12: #{encoder_forward.9} parent=5 // pred_fallthru
      _
    %p264 = scmp.lt.s32.totalorder %s13, 2
    // Predicated region
    $region37: #{encoder_forward.9} parent=5 // pred_check
      %p265 = pneg %p264
    $region38: #{encoder_forward.9} parent=5 // pred_check_branch
      %267 = sbr.rel (%p265) target = $region40
    $region39: #{encoder_forward.9} parent=5 // pred_region
      // Predicated region
      $region41: #{encoder_forward.9} parent=39 // pred_check
        %p268 = pneg %p45
      $region42: #{encoder_forward.9} parent=39 // pred_check_branch
        %270 = sbr.rel (%p268) target = $region44
      $region43: #{encoder_forward.9} parent=39 // pred_region
        %p271 = scmp.lt.s32.totalorder %s20, 1
        %s272 = scalar_select %p271, %s20, 1
        %s273 = smul.addr %s272, 8
        %s274 = scalar_lea.vmem %s0, %s273
      $region44: #{encoder_forward.9} parent=39 // pred_fallthru
        _
    $region40: #{encoder_forward.9} parent=5 // pred_fallthru
      _
    %p275 = scmp.le.s32.totalorder 1, %s13
    %p276 = scmp.lt.s32.totalorder %s13, 3
    %p277 = pnand %p275, %p276
    %p278 = pneg %p277
    // Predicated region
    $region45: #{encoder_forward.9} parent=5 // pred_check
      _
    $region46: #{encoder_forward.9} parent=5 // pred_check_branch
      %280 = sbr.rel (%p277) target = $region48
    $region47: #{encoder_forward.9} parent=5 // pred_region
      %s281 = ssub.s32 %s13, 1
      %p282 = scmp.lt.s32.totalorder %s22, 1
      %s283 = scalar_select %p282, %s22, 1
      %s284 = smul.addr %s283, 8
      %s285 = scalar_lea.vmem %s0, %s284
      %p286 = pneg %p51
      %p287 = pneg %p48
      %p288 = pneg %p72
      %p289 = pneg %p69
      %p290 = pneg %p93
      %p291 = pneg %p90
      %p292 = scmp.lt.s32.totalorder %s23, 0
      %s293 = scalar_select %p292, %s23, 0
      %s294 = smul.addr %s293, 8
      %s295 = scalar_lea.vmem %s3, %s294
      %p296 = pneg %p119
      %p297 = pneg %p116
      %p298 = scmp.lt.s32.totalorder %s23, 0
      %s299 = scalar_select %p298, %s23, 0
      %s300 = scalar_lea.vmem %s4, %s299
      %p301 = pneg %p145
      %p302 = pneg %p142
      %s303 = smul.u32 8, %s23
      %p304 = scmp.lt.s32.totalorder %s303, 7
      %s305 = scalar_select %p304, %s303, 7
      %s306 = smul.addr %s305, 8
      %s307 = scalar_lea.vmem %s5, %s306
      %p308 = pneg %p171
      %p309 = pneg %p168
      %p310 = pneg %p192
      %p311 = pneg %p189
      %p312 = pneg %p218
      %p313 = pneg %p215
      %p314 = scmp.lt.s32.totalorder %s22, 1
      %s315 = scalar_select %p314, %s22, 1
      %s316 = smul.addr %s315, 8
      %s317 = scalar_lea.vmem %s7, %s316
      %p318 = scmp.lt.s32.totalorder %s22, 1
      %s319 = scalar_select %p318, %s22, 1
      %s320 = smul.addr %s319, 8
      %s321 = scalar_lea.vmem %s0, %s320
      %p322 = scmp.lt.s32.totalorder %s23, 0
      %s323 = scalar_select %p322, %s23, 0
      %s324 = smul.addr %s323, 8
      %s325 = scalar_lea.vmem %s3, %s324
      %p326 = scmp.lt.s32.totalorder %s23, 0
      %s327 = scalar_select %p326, %s23, 0
      %s328 = scalar_lea.vmem %s4, %s327
      %s329 = smul.u32 8, %s23
      %p330 = scmp.lt.s32.totalorder %s329, 7
      %s331 = scalar_select %p330, %s329, 7
      %s332 = smul.addr %s331, 8
      %s333 = scalar_lea.vmem %s5, %s332
      %s334 = smul.u32 8, %s23
      %p335 = scmp.lt.s32.totalorder %s22, 1
      %s336 = scalar_select %p335, %s22, 1
      %s337 = smul.addr %s336, 8
      %s338 = scalar_lea.vmem %s7, %s337
      %p339 = scmp.eq.s32.totalorder %s23, 0
      // Predicated region
      $region49: #{encoder_forward.9} parent=47 // pred_check
        %p340 = pneg %p339
      $region50: #{encoder_forward.9} parent=47 // pred_check_branch
        %342 = sbr.rel (%p340) target = $region52
      $region51: #{encoder_forward.9} parent=47 // pred_region
        %v343 = vld [vmem:[%s321] sm:$0xff]
        %v344 = vld [vmem:[%s1] sm:$0x1]
        %v345 = vld [vmem:[%s2] sm:$0x1]
        %vm346 = vcmask 261120
        %v347 = vsel %vm346, %v343, 0.0
        %348 = vadd.xlane.f32.xlu0 %v347
        %v349 = vpop.xlane.xlu0 %348
        %v350 = vrcp.pop 32.0
        %v351 = vmul.f32 %v349, %v350
        %v352 = vsub.f32 %v343, %v351
        %v353 = vmul.f32 %v352, %v352
        %v354 = vsel %vm346, %v353, 0.0
        %355 = vadd.xlane.f32.xlu0 %v354
        %v356 = vpop.xlane.xlu0 %355
        %v357 = vmul.f32 %v356, 0.032258064
        %v358 = vrsqrt.pop %v357
        %v359 = vmul.f32 %v357, %v358
        %vm360 = vcmp.eq.f32.partialorder %v357, inf
        %v361 = vsel %vm360, %v357, %v359
        %vm362 = vcmp.eq.f32.partialorder %v357, 0.0
        %v363 = vand.u32 %v357, 2147483648
        %v364 = vsel %vm362, %v363, %v361
        %v365 = vadd.f32 %v364, 1e-06
        %v366 = vrcp.pop %v365
        %v367 = vmul.f32 %v352, %v366
        %v369 = vlaneseq
        %v370 = vshrl.u32 %v369, 7
        %v371 = vsub.s32 0, %v370
        %v372 = vrot.slane %v344, %v371
        %v374 = vmul.f32 %v372, %v367
        %v376 = vlaneseq
        %v377 = vshrl.u32 %v376, 7
        %v378 = vsub.s32 0, %v377
        %v379 = vrot.slane %v345, %v378
        %v381 = vadd.f32 %v374, %v379
        %382 = vst.msk [vmem:[#allocation3] sm:$0xff] %vm346, %v381
        %v383 = vld [vmem:[%s321] sm:$0xff]
        %v384 = vld [vmem:[%s6] sm:$0x1]
        %v386 = vlaneseq
        %v387 = vshrl.u32 %v386, 7
        %v388 = vsub.s32 0, %v387
        %v389 = vrot.slane %v384, %v388
        %v391 = vadd.f32 %v383, %v389
        %392 = vst.msk [vmem:[#allocation2] sm:$0xff] %vm346, %v391
      $region52: #{encoder_forward.9} parent=47 // pred_fallthru
        _
      %v393 = vld [vmem:[#allocation3] sm:$0xff]
      %v394 = vld [vmem:[%s325] sm:$0xff]
      %v395 = vld [vmem:[%s325 + $0x8] sm:$0xff]
      %v396 = vld [vmem:[%s325 + $0x10] sm:$0xff]
      %v397 = vld [vmem:[%s325 + $0x18] sm:$0xff]
      %v398 = vld [vmem:[%s328] sm:$0x1]
      %v400 = vlaneseq
      %v401 = vshrl.u32 %v400, 7
      %v402 = vsub.s32 0, %v401
      %v403 = vrot.slane %v398, %v402
      %vm405 = vcmask 261120
      %v407 = vsel %vm405, %v393, 0
      %409 = vmatprep.subr.mxu0 0.0
      %410 = vmatpush1.msra.mxu0 %v394
      %411 = vmatprep.subr.mxu0 0.0
      %412 = vmatpush1.msra.mxu0 %v395
      %413 = vmatprep.subr.mxu0 0.0
      %414 = vmatpush1.msra.mxu0 %v396
      %415 = vmatprep.subr.mxu0 0.0
      %416 = vmatpush1.msra.mxu0 %v397
      %417 = vmatprep.subr.mxu0 0.0
      %418 = vmatpush1.msra.mxu0 0.0
      %419 = vmatprep.subr.mxu0 0.0
      %420 = vmatpush1.msra.mxu0 0.0
      %421 = vmatprep.subr.mxu0 0.0
      %422 = vmatpush1.msra.mxu0 0.0
      %423 = vmatprep.subr.mxu0 0.0
      %424 = vmatpush1.msra.mxu0 0.0
      %425 = vmatprep.subr.mxu0 0.0
      %426 = vmatpush1.msra.mxu0 0.0
      %427 = vmatprep.subr.mxu0 0.0
      %428 = vmatpush1.msra.mxu0 0.0
      %429 = vmatprep.subr.mxu0 0.0
      %430 = vmatpush1.msra.mxu0 0.0
      %431 = vmatprep.subr.mxu0 0.0
      %432 = vmatpush1.msra.mxu0 0.0
      %433 = vmatprep.subr.mxu0 0.0
      %434 = vmatpush1.msra.mxu0 0.0
      %435 = vmatprep.subr.mxu0 0.0
      %436 = vmatpush1.msra.mxu0 0.0
      %437 = vmatprep.subr.mxu0 0.0
      %438 = vmatpush1.msra.mxu0 0.0
      %439 = vmatprep.subr.mxu0 0.0
      %440 = vmatpush1.msra.mxu0 0.0
      %441 = vmatprep.subr.mxu0 0.0
      %442 = vmatpush1.msra.mxu0 0.0
      %443 = vmatprep.subr.mxu0 0.0
      %444 = vmatpush1.msra.mxu0 0.0
      %445 = vmatprep.subr.mxu0 0.0
      %446 = vmatpush1.msra.mxu0 0.0
      %447 = vmatprep.subr.mxu0 0.0
      %448 = vmatpush1.msra.mxu0 0.0
      %449 = vmatprep.subr.mxu0 0.0
      %450 = vmatpush1.msra.mxu0 0.0
      %451 = vmatprep.subr.mxu0 0.0
      %452 = vmatpush1.msra.mxu0 0.0
      %453 = vmatprep.subr.mxu0 0.0
      %454 = vmatpush1.msra.mxu0 0.0
      %455 = vmatprep.subr.mxu0 0.0
      %456 = vmatpush1.msra.mxu0 0.0
      %457 = vmatprep.subr.mxu0 0.0
      %458 = vmatpush1.msra.mxu0 0.0
      %459 = vmatprep.subr.mxu0 0.0
      %460 = vmatpush1.msra.mxu0 0.0
      %461 = vmatprep.subr.mxu0 0.0
      %462 = vmatpush1.msra.mxu0 0.0
      %463 = vmatprep.subr.mxu0 0.0
      %464 = vmatpush1.msra.mxu0 0.0
      %465 = vmatprep.subr.mxu0 0.0
      %466 = vmatpush1.msra.mxu0 0.0
      %467 = vmatprep.subr.mxu0 0.0
      %468 = vmatpush1.msra.mxu0 0.0
      %469 = vmatprep.subr.mxu0 0.0
      %470 = vmatpush1.msra.mxu0 0.0
      %471 = vmatprep.subr.mxu0 0.0
      %472 = vmatpush1.msra.mxu0 0.0
      %473 = vmatprep.mubr.f32.mxu0 0.0
      %474 = vmatmul.mubr.f32.gmra.mrb[0].mxu0 %v407
      %v475 = vpop.f32.mrb[0].mxu0
      %v476 = vadd.f32 %v403, %v475
      %v477 = vpop.f32.mrb[0].mxu0
      %478 = vdwg.mxu0
      %v479 = vmax.f32 %v476, 0.0
      %v480 = vld [vmem:[#allocation2] sm:$0xff]
      %v481 = vld [vmem:[%s333] sm:$0xff]
      %v482 = vld [vmem:[%s333 + $0x8] sm:$0xff]
      %v483 = vld [vmem:[%s333 + $0x10] sm:$0xff]
      %v484 = vld [vmem:[%s333 + $0x18] sm:$0xff]
      %v485 = vld [vmem:[%s333 + $0x20] sm:$0xff]
      %v486 = vld [vmem:[%s333 + $0x28] sm:$0xff]
      %v487 = vld [vmem:[%s333 + $0x30] sm:$0xff]
      %v488 = vld [vmem:[%s333 + $0x38] sm:$0xff]
      %vm489 = vcmask 523264
      %v491 = vsel %vm489, %v479, 0
      %493 = vmatprep.subr.mxu0 0.0
      %494 = vmatpush1.msra.mxu0 %v481
      %495 = vmatprep.subr.mxu0 0.0
      %496 = vmatpush1.msra.mxu0 %v482
      %497 = vmatprep.subr.mxu0 0.0
      %498 = vmatpush1.msra.mxu0 %v483
      %499 = vmatprep.subr.mxu0 0.0
      %500 = vmatpush1.msra.mxu0 %v484
      %501 = vmatprep.subr.mxu0 0.0
      %502 = vmatpush1.msra.mxu0 %v485
      %503 = vmatprep.subr.mxu0 0.0
      %504 = vmatpush1.msra.mxu0 %v486
      %505 = vmatprep.subr.mxu0 0.0
      %506 = vmatpush1.msra.mxu0 %v487
      %507 = vmatprep.subr.mxu0 0.0
      %508 = vmatpush1.msra.mxu0 %v488
      %509 = vmatprep.subr.mxu0 0.0
      %510 = vmatpush1.msra.mxu0 0.0
      %511 = vmatprep.subr.mxu0 0.0
      %512 = vmatpush1.msra.mxu0 0.0
      %513 = vmatprep.subr.mxu0 0.0
      %514 = vmatpush1.msra.mxu0 0.0
      %515 = vmatprep.subr.mxu0 0.0
      %516 = vmatpush1.msra.mxu0 0.0
      %517 = vmatprep.subr.mxu0 0.0
      %518 = vmatpush1.msra.mxu0 0.0
      %519 = vmatprep.subr.mxu0 0.0
      %520 = vmatpush1.msra.mxu0 0.0
      %521 = vmatprep.subr.mxu0 0.0
      %522 = vmatpush1.msra.mxu0 0.0
      %523 = vmatprep.subr.mxu0 0.0
      %524 = vmatpush1.msra.mxu0 0.0
      %525 = vmatprep.subr.mxu0 0.0
      %526 = vmatpush1.msra.mxu0 0.0
      %527 = vmatprep.subr.mxu0 0.0
      %528 = vmatpush1.msra.mxu0 0.0
      %529 = vmatprep.subr.mxu0 0.0
      %530 = vmatpush1.msra.mxu0 0.0
      %531 = vmatprep.subr.mxu0 0.0
      %532 = vmatpush1.msra.mxu0 0.0
      %533 = vmatprep.subr.mxu0 0.0
      %534 = vmatpush1.msra.mxu0 0.0
      %535 = vmatprep.subr.mxu0 0.0
      %536 = vmatpush1.msra.mxu0 0.0
      %537 = vmatprep.subr.mxu0 0.0
      %538 = vmatpush1.msra.mxu0 0.0
      %539 = vmatprep.subr.mxu0 0.0
      %540 = vmatpush1.msra.mxu0 0.0
      %541 = vmatprep.subr.mxu0 0.0
      %542 = vmatpush1.msra.mxu0 0.0
      %543 = vmatprep.subr.mxu0 0.0
      %544 = vmatpush1.msra.mxu0 0.0
      %545 = vmatprep.subr.mxu0 0.0
      %546 = vmatpush1.msra.mxu0 0.0
      %547 = vmatprep.subr.mxu0 0.0
      %548 = vmatpush1.msra.mxu0 0.0
      %549 = vmatprep.subr.mxu0 0.0
      %550 = vmatpush1.msra.mxu0 0.0
      %551 = vmatprep.subr.mxu0 0.0
      %552 = vmatpush1.msra.mxu0 0.0
      %553 = vmatprep.subr.mxu0 0.0
      %554 = vmatpush1.msra.mxu0 0.0
      %555 = vmatprep.subr.mxu0 0.0
      %556 = vmatpush1.msra.mxu0 0.0
      %557 = vmatprep.mubr.f32.mxu0 0.0
      %558 = vmatmul.mubr.f32.gmra.mrb[0].mxu0 %v491
      %v559 = vpop.f32.mrb[0].mxu0
      %v560 = vadd.f32 0.0, %v559
      %v561 = vpop.f32.mrb[0].mxu0
      %562 = vdwg.mxu0
      %v563 = vadd.f32 %v480, %v560
      %564 = vst.msk [vmem:[#allocation2] sm:$0xff] %vm405, %v563
      // Predicated region
      $region53: #{encoder_forward.9} parent=47 // pred_check
        %p565 = pneg %p339
      $region54: #{encoder_forward.9} parent=47 // pred_check_branch
        %567 = sbr.rel (%p565) target = $region56
      $region55: #{encoder_forward.9} parent=47 // pred_region
        %v568 = vld [vmem:[#allocation2] sm:$0xff]
        %569 = vst.msk [vmem:[%s338] sm:$0xff] %vm405, %v568
      $region56: #{encoder_forward.9} parent=47 // pred_fallthru
        _
      %p570 = scmp.lt.s32.totalorder %s22, 1
      %s571 = scalar_select %p570, %s22, 1
      %s572 = smul.addr %s571, 8
      %s573 = scalar_lea.vmem %s7, %s572
      // Predicated region
      $region57: #{encoder_forward.9} parent=47 // pred_check
        %p574 = pneg %p215
      $region58: #{encoder_forward.9} parent=47 // pred_check_branch
        %576 = sbr.rel (%p574) target = $region60
      $region59: #{encoder_forward.9} parent=47 // pred_region
        _
      $region60: #{encoder_forward.9} parent=47 // pred_fallthru
        _
    $region48: #{encoder_forward.9} parent=5 // pred_fallthru
      _
    %p577 = scmp.le.s32.totalorder 2, %s13
    // Predicated region
    $region61: #{encoder_forward.9} parent=5 // pred_check
      %p578 = pneg %p577
    $region62: #{encoder_forward.9} parent=5 // pred_check_branch
      %580 = sbr.rel (%p578) target = $region64
    $region63: #{encoder_forward.9} parent=5 // pred_region
      %s581 = ssub.s32 %s13, 2
      // Predicated region
      $region65: #{encoder_forward.9} parent=63 // pred_check
        %p582 = pneg %p221
      $region66: #{encoder_forward.9} parent=63 // pred_check_branch
        %584 = sbr.rel (%p582) target = $region68
      $region67: #{encoder_forward.9} parent=63 // pred_region
        %p585 = scmp.lt.s32.totalorder %s24, 1
        %s586 = scalar_select %p585, %s24, 1
        %s587 = smul.addr %s586, 8
        %s588 = scalar_lea.vmem %s7, %s587
      $region68: #{encoder_forward.9} parent=63 // pred_fallthru
        _
    $region64: #{encoder_forward.9} parent=5 // pred_fallthru
      _
  $region6: #{encoder_forward.9} parent=0 // loop_footer
    %s17 = sadd.s32 1, %s13
  $region7: #{encoder_forward.9} parent=0 // loop_footer_branch
    %12 = sbr.rel target = $region3
  $region8: #{encoder_forward.9} parent=0 // loop_exit
    _

</llo_original>
